<compile_context>
chip_gen: v6e
topology: v6e:2x2x1
jax: 0.10.0
libtpu: 0.0.40
codegen_flags: <defaults>
</compile_context>

<pallas_src>
import jax
import jax.numpy as jnp
from jax.experimental import pallas as pl
from jax.experimental.pallas import tpu as pltpu

LN_EPS = 1e-5  # PyTorch nn.LayerNorm default
_HI = jax.lax.Precision.HIGHEST


def _layernorm(x, gamma, beta):
    mean = jnp.mean(x, axis=-1, keepdims=True)
    var = jnp.mean((x - mean) ** 2, axis=-1, keepdims=True)
    return (x - mean) * jax.lax.rsqrt(var + LN_EPS) * gamma + beta


def _encoder_kernel(v_ref, selW_ref, selb_ref, ln1_ref, fgW_ref, fgb_ref,
                    ln2_ref, o_ref):
    # v_ref block: (1, L, D); q == v in the Encoder forward pass.
    x = v_ref[0]                                   # (L, D), f32
    L = x.shape[0]
    n_layer = fgW_ref.shape[0]
    n_head = fgW_ref.shape[1]
    hd = ln2_ref.shape[-1]

    for l in range(n_layer):                       # static loop — fully fused layers
        # SelectiveAttention selection for all heads at once:
        #   attn_all = q @ concat_h(selW_h) + concat_h(selb_h)   -> (L, n_head*L)
        attn_all = (jnp.dot(x, selW_ref[l], preferred_element_type=jnp.float32)
                    + selb_ref[l])

        # Per-layer parameter slabs (single small VMEM loads).
        ln1_l = ln1_ref[l]                         # (n_head, 2, D)
        fgW_l = fgW_ref[l]                         # (n_head, D, 2*hd)
        fgb_l = fgb_ref[l]                         # (n_head, 1, 2*hd)
        ln2_l = ln2_ref[l]                         # (n_head, 2, hd)

        heads = []
        for h in range(n_head):                    # static loop over heads
            attn = attn_all[:, h * L:(h + 1) * L]  # (L, L)
            # q = bmm(attn, v); q = ln(q)
            y = jnp.dot(attn, x, preferred_element_type=jnp.float32)   # (L, D)
            y = _layernorm(y, ln1_l[h, 0:1, :], ln1_l[h, 1:2, :])
            # FilteredLinear: relu(y@Wf+bf) * relu(y@Wg+bg), then LN.
            # Wf and Wg are fused as one (D, 2*hd) matmul.
            fg = (jnp.dot(y, fgW_l[h], preferred_element_type=jnp.float32)
                  + fgb_l[h])
            fg = jnp.maximum(fg, 0.0)
            z = fg[:, :hd] * fg[:, hd:]
            z = _layernorm(z, ln2_l[h, 0:1, :], ln2_l[h, 1:2, :])
            heads.append(z)

        # concat(heads, dim=-1): (L, n_head*hd) == (L, D) — next layer's input.
        x = jnp.concatenate(heads, axis=-1)

    o_ref[0] = x.astype(o_ref.dtype)


def encoder_forward(v, params):
    """v: (B, L, D) with L == lv. Returns (B, L, D)."""
    B, L, D = v.shape
    selW, selb = params["selW"], params["selb"]
    ln1, fgW, fgb, ln2 = params["ln1"], params["fgW"], params["fgb"], params["ln2"]
    n_head = fgW.shape[1]
    hd = ln2.shape[-1]
    assert n_head * hd == D

    grid_spec = pltpu.PrefetchScalarGridSpec(
        num_scalar_prefetch=0,
        grid=(B,),
        in_specs=[
            pl.BlockSpec((1, L, D), lambda b: (b, 0, 0)),        # v (per batch)
            pl.BlockSpec(selW.shape, lambda b: (0, 0, 0)),       # select W (all layers/heads)
            pl.BlockSpec(selb.shape, lambda b: (0, 0, 0)),       # select b
            pl.BlockSpec(ln1.shape, lambda b: (0, 0, 0, 0)),     # ln1 gamma/beta
            pl.BlockSpec(fgW.shape, lambda b: (0, 0, 0, 0)),     # fused filter/forward W
            pl.BlockSpec(fgb.shape, lambda b: (0, 0, 0, 0)),     # fused filter/forward b
            pl.BlockSpec(ln2.shape, lambda b: (0, 0, 0, 0)),     # ln2 gamma/beta
        ],
        out_specs=pl.BlockSpec((1, L, D), lambda b: (b, 0, 0)),  # lane-dense (L, D) output
    )

    return pl.pallas_call(
        _encoder_kernel,
        out_shape=jax.ShapeDtypeStruct((B, L, D), jnp.float32),
        grid_spec=grid_spec,
        compiler_params=pltpu.CompilerParams(
            dimension_semantics=("parallel",)),
    )(v, selW, selb, ln1, fgW, fgb, ln2)


# ---------------- pure-JAX reference (for correctness check) ----------------
def _ref_encoder(v, params):
    selW, selb = params["selW"], params["selb"]
    ln1, fgW, fgb, ln2 = params["ln1"], params["fgW"], params["fgb"], params["ln2"]
    n_layer, n_head = fgW.shape[0], fgW.shape[1]
    hd = ln2.shape[-1]
    B, L, D = v.shape

    x = v
    for l in range(n_layer):
        attn = jnp.einsum("bld,dk->blk", x, selW[l], precision=_HI) + selb[l]
        heads = []
        for h in range(n_head):
            a = attn[:, :, h * L:(h + 1) * L]                       # (B, L, L)
            y = jnp.einsum("blk,bkd->bld", a, x, precision=_HI)     # (B, L, D)
            y = _layernorm(y, ln1[l, h, 0], ln1[l, h, 1])
            fg = jnp.einsum("bld,de->ble", y, fgW[l, h], precision=_HI) + fgb[l, h, 0]
            fg = jnp.maximum(fg, 0.0)
            z = fg[..., :hd] * fg[..., hd:]
            z = _layernorm(z, ln2[l, h, 0], ln2[l, h, 1])
            heads.append(z)
        x = jnp.concatenate(heads, axis=-1)
    return x


# ---------------- deterministic parameter construction ----------------
def make_params(key, n_layer, n_head, d, lv):
    hd = d // n_head
    ks = jax.random.split(key, 8)

    def nrm(k, shape, scale):
        return jax.random.normal(k, shape, jnp.float32) * scale

    return dict(
        # select_linear, all heads stacked along the output dim (math layout)
        selW=nrm(ks[0], (n_layer, d, n_head * lv), 1.0 / (d ** 0.5)),
        selb=nrm(ks[1], (n_layer, 1, n_head * lv), 0.02),
        # LayerNorm(d): [gamma, beta] stacked on axis 2
        ln1=jnp.stack([1.0 + nrm(ks[2], (n_layer, n_head, d), 0.1),
                       nrm(ks[3], (n_layer, n_head, d), 0.02)], axis=2),
        # fused filter/forward linear: W = concat(Wf, Wg, axis=-1)
        fgW=nrm(ks[4], (n_layer, n_head, d, 2 * hd), 1.0 / (d ** 0.5)),
        fgb=nrm(ks[5], (n_layer, n_head, 1, 2 * hd), 0.02),
        # LayerNorm(head_dim): [gamma, beta] stacked on axis 2
        ln2=jnp.stack([1.0 + nrm(ks[6], (n_layer, n_head, hd), 0.1),
                       nrm(ks[7], (n_layer, n_head, hd), 0.02)], axis=2),
    )


if __name__ == "__main__":
    # Encoder(n_head=4, n_layer=2, d=32, lv=8); v: (B, lv, d)
    B, n_head, n_layer, d, lv = 2, 4, 2, 32, 8

    key = jax.random.PRNGKey(0)
    vkey, pkey = jax.random.split(key)
    v = jax.random.normal(vkey, (B, lv, d), jnp.float32)
    params = make_params(pkey, n_layer, n_head, d, lv)

    out = jax.block_until_ready(jax.jit(encoder_forward)(v, params))
    ref = _ref_encoder(v, params)

    assert out.shape == (B, lv, d)
    max_diff = float(jnp.max(jnp.abs(out - ref)))
    assert jnp.allclose(out, ref, rtol=1e-2, atol=1e-2), (
        f"mismatch vs JAX reference (max abs diff {max_diff})")

    print("KERNEL_OK")
</pallas_src>

<mosaic_0001>
module attributes {stable_mosaic.version = 11 : i64} {
  func.func @_encoder_kernel(%arg0: i32, %arg1: memref<1x8x32xf32, #tpu.memory_space<vmem>>, %arg2: memref<2x32x32xf32, #tpu.memory_space<vmem>>, %arg3: memref<2x1x32xf32, #tpu.memory_space<vmem>>, %arg4: memref<2x4x2x32xf32, #tpu.memory_space<vmem>>, %arg5: memref<2x4x32x16xf32, #tpu.memory_space<vmem>>, %arg6: memref<2x4x1x16xf32, #tpu.memory_space<vmem>>, %arg7: memref<2x4x2x8xf32, #tpu.memory_space<vmem>>, %arg8: memref<1x8x32xf32, #tpu.memory_space<vmem>>) attributes {dimension_semantics = [#tpu.dimension_semantics<parallel>], iteration_bounds = array<i64: 2>, scalar_prefetch = 0 : i64, scratch_operands = 0 : i64, tpu.core_type = #tpu.core_type<tc>, window_params = [{transform_indices = @transform_0, window_bounds = array<i64: 1, 8, 32>}, {pipeline_mode = #tpu.pipeline_mode<synchronous>, transform_indices = @transform_1, window_bounds = array<i64: 2, 32, 32>}, {pipeline_mode = #tpu.pipeline_mode<synchronous>, transform_indices = @transform_2, window_bounds = array<i64: 2, 1, 32>}, {pipeline_mode = #tpu.pipeline_mode<synchronous>, transform_indices = @transform_3, window_bounds = array<i64: 2, 4, 2, 32>}, {pipeline_mode = #tpu.pipeline_mode<synchronous>, transform_indices = @transform_4, window_bounds = array<i64: 2, 4, 32, 16>}, {pipeline_mode = #tpu.pipeline_mode<synchronous>, transform_indices = @transform_5, window_bounds = array<i64: 2, 4, 1, 16>}, {pipeline_mode = #tpu.pipeline_mode<synchronous>, transform_indices = @transform_6, window_bounds = array<i64: 2, 4, 2, 8>}, {transform_indices = @transform_7, window_bounds = array<i64: 1, 8, 32>}]} {
    %c0 = arith.constant 0 : index
    %c0_0 = arith.constant 0 : index
    %c0_1 = arith.constant 0 : index
    %0 = vector.load %arg1[%c0, %c0_0, %c0_1] : memref<1x8x32xf32, #tpu.memory_space<vmem>>, vector<1x8x32xf32>
    %1 = vector.shape_cast %0 : vector<1x8x32xf32> to vector<8x32xf32>
    %c0_2 = arith.constant 0 : index
    %c0_3 = arith.constant 0 : index
    %c0_4 = arith.constant 0 : index
    %2 = vector.load %arg2[%c0_2, %c0_3, %c0_4] : memref<2x32x32xf32, #tpu.memory_space<vmem>>, vector<1x32x32xf32>
    %3 = vector.shape_cast %2 : vector<1x32x32xf32> to vector<32x32xf32>
    %cst = arith.constant dense<0.000000e+00> : vector<8x32xf32>
    %4 = tpu.matmul %1, %3, %cst {dimension_numbers = #tpu.dot_dimension_numbers<[1], [0], [0], [1], [0, 0, 1, 1], [], []>} : vector<8x32xf32>, vector<32x32xf32>, vector<8x32xf32> -> vector<8x32xf32>
    %c0_5 = arith.constant 0 : index
    %c0_6 = arith.constant 0 : index
    %c0_7 = arith.constant 0 : index
    %5 = vector.load %arg3[%c0_5, %c0_6, %c0_7] : memref<2x1x32xf32, #tpu.memory_space<vmem>>, vector<1x1x32xf32>
    %6 = vector.shape_cast %5 : vector<1x1x32xf32> to vector<1x32xf32>
    %7 = vector.broadcast %6 : vector<1x32xf32> to vector<8x32xf32>
    %8 = arith.addf %4, %7 : vector<8x32xf32>
    %c0_8 = arith.constant 0 : index
    %c0_9 = arith.constant 0 : index
    %c0_10 = arith.constant 0 : index
    %c0_11 = arith.constant 0 : index
    %9 = vector.load %arg4[%c0_8, %c0_9, %c0_10, %c0_11] : memref<2x4x2x32xf32, #tpu.memory_space<vmem>>, vector<1x4x2x32xf32>
    %10 = vector.shape_cast %9 : vector<1x4x2x32xf32> to vector<4x2x32xf32>
    %c0_12 = arith.constant 0 : index
    %c0_13 = arith.constant 0 : index
    %c0_14 = arith.constant 0 : index
    %c0_15 = arith.constant 0 : index
    %11 = vector.load %arg5[%c0_12, %c0_13, %c0_14, %c0_15] : memref<2x4x32x16xf32, #tpu.memory_space<vmem>>, vector<1x4x32x16xf32>
    %12 = vector.shape_cast %11 : vector<1x4x32x16xf32> to vector<4x32x16xf32>
    %c0_16 = arith.constant 0 : index
    %c0_17 = arith.constant 0 : index
    %c0_18 = arith.constant 0 : index
    %c0_19 = arith.constant 0 : index
    %13 = vector.load %arg6[%c0_16, %c0_17, %c0_18, %c0_19] : memref<2x4x1x16xf32, #tpu.memory_space<vmem>>, vector<1x4x1x16xf32>
    %14 = vector.shape_cast %13 : vector<1x4x1x16xf32> to vector<4x1x16xf32>
    %c0_20 = arith.constant 0 : index
    %c0_21 = arith.constant 0 : index
    %c0_22 = arith.constant 0 : index
    %c0_23 = arith.constant 0 : index
    %15 = vector.load %arg7[%c0_20, %c0_21, %c0_22, %c0_23] : memref<2x4x2x8xf32, #tpu.memory_space<vmem>>, vector<1x4x2x8xf32>
    %16 = vector.shape_cast %15 : vector<1x4x2x8xf32> to vector<4x2x8xf32>
    %17 = vector.extract_strided_slice %8 {offsets = [0, 0], sizes = [8, 8], strides = [1, 1]} : vector<8x32xf32> to vector<8x8xf32>
    %cst_24 = arith.constant dense<0.000000e+00> : vector<8x32xf32>
    %18 = tpu.matmul %17, %1, %cst_24 {dimension_numbers = #tpu.dot_dimension_numbers<[1], [0], [0], [1], [0, 0, 1, 1], [], []>} : vector<8x8xf32>, vector<8x32xf32>, vector<8x32xf32> -> vector<8x32xf32>
    %19 = vector.extract_strided_slice %10 {offsets = [0, 0, 0], sizes = [1, 1, 32], strides = [1, 1, 1]} : vector<4x2x32xf32> to vector<1x1x32xf32>
    %20 = vector.shape_cast %19 : vector<1x1x32xf32> to vector<1x32xf32>
    %21 = vector.extract_strided_slice %10 {offsets = [0, 1, 0], sizes = [1, 1, 32], strides = [1, 1, 1]} : vector<4x2x32xf32> to vector<1x1x32xf32>
    %22 = vector.shape_cast %21 : vector<1x1x32xf32> to vector<1x32xf32>
    %cst_25 = arith.constant dense<0.000000e+00> : vector<8xf32>
    %23 = vector.multi_reduction <add>, %18, %cst_25 [1] : vector<8x32xf32> to vector<8xf32>
    %24 = vector.shape_cast %23 : vector<8xf32> to vector<8x1xf32>
    %cst_26 = arith.constant 3.200000e+01 : f32
    %25 = vector.broadcast %cst_26 : f32 to vector<8x1xf32>
    %26 = arith.divf %24, %25 : vector<8x1xf32>
    %27 = vector.broadcast %26 : vector<8x1xf32> to vector<8x32xf32>
    %28 = arith.subf %18, %27 : vector<8x32xf32>
    %29 = arith.mulf %28, %28 : vector<8x32xf32>
    %cst_27 = arith.constant dense<0.000000e+00> : vector<8xf32>
    %30 = vector.multi_reduction <add>, %29, %cst_27 [1] : vector<8x32xf32> to vector<8xf32>
    %31 = vector.shape_cast %30 : vector<8xf32> to vector<8x1xf32>
    %cst_28 = arith.constant 3.200000e+01 : f32
    %32 = vector.broadcast %cst_28 : f32 to vector<8x1xf32>
    %33 = arith.divf %31, %32 : vector<8x1xf32>
    %34 = vector.broadcast %26 : vector<8x1xf32> to vector<8x32xf32>
    %35 = arith.subf %18, %34 : vector<8x32xf32>
    %cst_29 = arith.constant 9.99999974E-6 : f32
    %36 = vector.broadcast %cst_29 : f32 to vector<8x1xf32>
    %37 = arith.addf %33, %36 : vector<8x1xf32>
    %38 = math.rsqrt %37 : vector<8x1xf32>
    %39 = vector.broadcast %38 : vector<8x1xf32> to vector<8x32xf32>
    %40 = arith.mulf %35, %39 : vector<8x32xf32>
    %41 = vector.broadcast %20 : vector<1x32xf32> to vector<8x32xf32>
    %42 = arith.mulf %40, %41 : vector<8x32xf32>
    %43 = vector.broadcast %22 : vector<1x32xf32> to vector<8x32xf32>
    %44 = arith.addf %42, %43 : vector<8x32xf32>
    %45 = vector.extract_strided_slice %12 {offsets = [0, 0, 0], sizes = [1, 32, 16], strides = [1, 1, 1]} : vector<4x32x16xf32> to vector<1x32x16xf32>
    %46 = vector.shape_cast %45 : vector<1x32x16xf32> to vector<32x16xf32>
    %cst_30 = arith.constant dense<0.000000e+00> : vector<8x16xf32>
    %47 = tpu.matmul %44, %46, %cst_30 {dimension_numbers = #tpu.dot_dimension_numbers<[1], [0], [0], [1], [0, 0, 1, 1], [], []>} : vector<8x32xf32>, vector<32x16xf32>, vector<8x16xf32> -> vector<8x16xf32>
    %48 = vector.extract_strided_slice %14 {offsets = [0, 0, 0], sizes = [1, 1, 16], strides = [1, 1, 1]} : vector<4x1x16xf32> to vector<1x1x16xf32>
    %49 = vector.shape_cast %48 : vector<1x1x16xf32> to vector<1x16xf32>
    %50 = vector.broadcast %49 : vector<1x16xf32> to vector<8x16xf32>
    %51 = arith.addf %47, %50 : vector<8x16xf32>
    %cst_31 = arith.constant 0.000000e+00 : f32
    %52 = vector.broadcast %cst_31 : f32 to vector<8x16xf32>
    %53 = arith.maximumf %51, %52 : vector<8x16xf32>
    %54 = vector.extract_strided_slice %53 {offsets = [0, 0], sizes = [8, 8], strides = [1, 1]} : vector<8x16xf32> to vector<8x8xf32>
    %55 = vector.extract_strided_slice %53 {offsets = [0, 8], sizes = [8, 8], strides = [1, 1]} : vector<8x16xf32> to vector<8x8xf32>
    %56 = arith.mulf %54, %55 : vector<8x8xf32>
    %57 = vector.extract_strided_slice %16 {offsets = [0, 0, 0], sizes = [1, 1, 8], strides = [1, 1, 1]} : vector<4x2x8xf32> to vector<1x1x8xf32>
    %58 = vector.shape_cast %57 : vector<1x1x8xf32> to vector<1x8xf32>
    %59 = vector.extract_strided_slice %16 {offsets = [0, 1, 0], sizes = [1, 1, 8], strides = [1, 1, 1]} : vector<4x2x8xf32> to vector<1x1x8xf32>
    %60 = vector.shape_cast %59 : vector<1x1x8xf32> to vector<1x8xf32>
    %cst_32 = arith.constant dense<0.000000e+00> : vector<8xf32>
    %61 = vector.multi_reduction <add>, %56, %cst_32 [1] : vector<8x8xf32> to vector<8xf32>
    %62 = vector.shape_cast %61 : vector<8xf32> to vector<8x1xf32>
    %cst_33 = arith.constant 8.000000e+00 : f32
    %63 = vector.broadcast %cst_33 : f32 to vector<8x1xf32>
    %64 = arith.divf %62, %63 : vector<8x1xf32>
    %65 = vector.broadcast %64 : vector<8x1xf32> to vector<8x8xf32>
    %66 = arith.subf %56, %65 : vector<8x8xf32>
    %67 = arith.mulf %66, %66 : vector<8x8xf32>
    %cst_34 = arith.constant dense<0.000000e+00> : vector<8xf32>
    %68 = vector.multi_reduction <add>, %67, %cst_34 [1] : vector<8x8xf32> to vector<8xf32>
    %69 = vector.shape_cast %68 : vector<8xf32> to vector<8x1xf32>
    %cst_35 = arith.constant 8.000000e+00 : f32
    %70 = vector.broadcast %cst_35 : f32 to vector<8x1xf32>
    %71 = arith.divf %69, %70 : vector<8x1xf32>
    %72 = vector.broadcast %64 : vector<8x1xf32> to vector<8x8xf32>
    %73 = arith.subf %56, %72 : vector<8x8xf32>
    %cst_36 = arith.constant 9.99999974E-6 : f32
    %74 = vector.broadcast %cst_36 : f32 to vector<8x1xf32>
    %75 = arith.addf %71, %74 : vector<8x1xf32>
    %76 = math.rsqrt %75 : vector<8x1xf32>
    %77 = vector.broadcast %76 : vector<8x1xf32> to vector<8x8xf32>
    %78 = arith.mulf %73, %77 : vector<8x8xf32>
    %79 = vector.broadcast %58 : vector<1x8xf32> to vector<8x8xf32>
    %80 = arith.mulf %78, %79 : vector<8x8xf32>
    %81 = vector.broadcast %60 : vector<1x8xf32> to vector<8x8xf32>
    %82 = arith.addf %80, %81 : vector<8x8xf32>
    %83 = vector.extract_strided_slice %8 {offsets = [0, 8], sizes = [8, 8], strides = [1, 1]} : vector<8x32xf32> to vector<8x8xf32>
    %cst_37 = arith.constant dense<0.000000e+00> : vector<8x32xf32>
    %84 = tpu.matmul %83, %1, %cst_37 {dimension_numbers = #tpu.dot_dimension_numbers<[1], [0], [0], [1], [0, 0, 1, 1], [], []>} : vector<8x8xf32>, vector<8x32xf32>, vector<8x32xf32> -> vector<8x32xf32>
    %85 = vector.extract_strided_slice %10 {offsets = [1, 0, 0], sizes = [1, 1, 32], strides = [1, 1, 1]} : vector<4x2x32xf32> to vector<1x1x32xf32>
    %86 = vector.shape_cast %85 : vector<1x1x32xf32> to vector<1x32xf32>
    %87 = vector.extract_strided_slice %10 {offsets = [1, 1, 0], sizes = [1, 1, 32], strides = [1, 1, 1]} : vector<4x2x32xf32> to vector<1x1x32xf32>
    %88 = vector.shape_cast %87 : vector<1x1x32xf32> to vector<1x32xf32>
    %cst_38 = arith.constant dense<0.000000e+00> : vector<8xf32>
    %89 = vector.multi_reduction <add>, %84, %cst_38 [1] : vector<8x32xf32> to vector<8xf32>
    %90 = vector.shape_cast %89 : vector<8xf32> to vector<8x1xf32>
    %cst_39 = arith.constant 3.200000e+01 : f32
    %91 = vector.broadcast %cst_39 : f32 to vector<8x1xf32>
    %92 = arith.divf %90, %91 : vector<8x1xf32>
    %93 = vector.broadcast %92 : vector<8x1xf32> to vector<8x32xf32>
    %94 = arith.subf %84, %93 : vector<8x32xf32>
    %95 = arith.mulf %94, %94 : vector<8x32xf32>
    %cst_40 = arith.constant dense<0.000000e+00> : vector<8xf32>
    %96 = vector.multi_reduction <add>, %95, %cst_40 [1] : vector<8x32xf32> to vector<8xf32>
    %97 = vector.shape_cast %96 : vector<8xf32> to vector<8x1xf32>
    %cst_41 = arith.constant 3.200000e+01 : f32
    %98 = vector.broadcast %cst_41 : f32 to vector<8x1xf32>
    %99 = arith.divf %97, %98 : vector<8x1xf32>
    %100 = vector.broadcast %92 : vector<8x1xf32> to vector<8x32xf32>
    %101 = arith.subf %84, %100 : vector<8x32xf32>
    %cst_42 = arith.constant 9.99999974E-6 : f32
    %102 = vector.broadcast %cst_42 : f32 to vector<8x1xf32>
    %103 = arith.addf %99, %102 : vector<8x1xf32>
    %104 = math.rsqrt %103 : vector<8x1xf32>
    %105 = vector.broadcast %104 : vector<8x1xf32> to vector<8x32xf32>
    %106 = arith.mulf %101, %105 : vector<8x32xf32>
    %107 = vector.broadcast %86 : vector<1x32xf32> to vector<8x32xf32>
    %108 = arith.mulf %106, %107 : vector<8x32xf32>
    %109 = vector.broadcast %88 : vector<1x32xf32> to vector<8x32xf32>
    %110 = arith.addf %108, %109 : vector<8x32xf32>
    %111 = vector.extract_strided_slice %12 {offsets = [1, 0, 0], sizes = [1, 32, 16], strides = [1, 1, 1]} : vector<4x32x16xf32> to vector<1x32x16xf32>
    %112 = vector.shape_cast %111 : vector<1x32x16xf32> to vector<32x16xf32>
    %cst_43 = arith.constant dense<0.000000e+00> : vector<8x16xf32>
    %113 = tpu.matmul %110, %112, %cst_43 {dimension_numbers = #tpu.dot_dimension_numbers<[1], [0], [0], [1], [0, 0, 1, 1], [], []>} : vector<8x32xf32>, vector<32x16xf32>, vector<8x16xf32> -> vector<8x16xf32>
    %114 = vector.extract_strided_slice %14 {offsets = [1, 0, 0], sizes = [1, 1, 16], strides = [1, 1, 1]} : vector<4x1x16xf32> to vector<1x1x16xf32>
    %115 = vector.shape_cast %114 : vector<1x1x16xf32> to vector<1x16xf32>
    %116 = vector.broadcast %115 : vector<1x16xf32> to vector<8x16xf32>
    %117 = arith.addf %113, %116 : vector<8x16xf32>
    %cst_44 = arith.constant 0.000000e+00 : f32
    %118 = vector.broadcast %cst_44 : f32 to vector<8x16xf32>
    %119 = arith.maximumf %117, %118 : vector<8x16xf32>
    %120 = vector.extract_strided_slice %119 {offsets = [0, 0], sizes = [8, 8], strides = [1, 1]} : vector<8x16xf32> to vector<8x8xf32>
    %121 = vector.extract_strided_slice %119 {offsets = [0, 8], sizes = [8, 8], strides = [1, 1]} : vector<8x16xf32> to vector<8x8xf32>
    %122 = arith.mulf %120, %121 : vector<8x8xf32>
    %123 = vector.extract_strided_slice %16 {offsets = [1, 0, 0], sizes = [1, 1, 8], strides = [1, 1, 1]} : vector<4x2x8xf32> to vector<1x1x8xf32>
    %124 = vector.shape_cast %123 : vector<1x1x8xf32> to vector<1x8xf32>
    %125 = vector.extract_strided_slice %16 {offsets = [1, 1, 0], sizes = [1, 1, 8], strides = [1, 1, 1]} : vector<4x2x8xf32> to vector<1x1x8xf32>
    %126 = vector.shape_cast %125 : vector<1x1x8xf32> to vector<1x8xf32>
    %cst_45 = arith.constant dense<0.000000e+00> : vector<8xf32>
    %127 = vector.multi_reduction <add>, %122, %cst_45 [1] : vector<8x8xf32> to vector<8xf32>
    %128 = vector.shape_cast %127 : vector<8xf32> to vector<8x1xf32>
    %cst_46 = arith.constant 8.000000e+00 : f32
    %129 = vector.broadcast %cst_46 : f32 to vector<8x1xf32>
    %130 = arith.divf %128, %129 : vector<8x1xf32>
    %131 = vector.broadcast %130 : vector<8x1xf32> to vector<8x8xf32>
    %132 = arith.subf %122, %131 : vector<8x8xf32>
    %133 = arith.mulf %132, %132 : vector<8x8xf32>
    %cst_47 = arith.constant dense<0.000000e+00> : vector<8xf32>
    %134 = vector.multi_reduction <add>, %133, %cst_47 [1] : vector<8x8xf32> to vector<8xf32>
    %135 = vector.shape_cast %134 : vector<8xf32> to vector<8x1xf32>
    %cst_48 = arith.constant 8.000000e+00 : f32
    %136 = vector.broadcast %cst_48 : f32 to vector<8x1xf32>
    %137 = arith.divf %135, %136 : vector<8x1xf32>
    %138 = vector.broadcast %130 : vector<8x1xf32> to vector<8x8xf32>
    %139 = arith.subf %122, %138 : vector<8x8xf32>
    %cst_49 = arith.constant 9.99999974E-6 : f32
    %140 = vector.broadcast %cst_49 : f32 to vector<8x1xf32>
    %141 = arith.addf %137, %140 : vector<8x1xf32>
    %142 = math.rsqrt %141 : vector<8x1xf32>
    %143 = vector.broadcast %142 : vector<8x1xf32> to vector<8x8xf32>
    %144 = arith.mulf %139, %143 : vector<8x8xf32>
    %145 = vector.broadcast %124 : vector<1x8xf32> to vector<8x8xf32>
    %146 = arith.mulf %144, %145 : vector<8x8xf32>
    %147 = vector.broadcast %126 : vector<1x8xf32> to vector<8x8xf32>
    %148 = arith.addf %146, %147 : vector<8x8xf32>
    %149 = vector.extract_strided_slice %8 {offsets = [0, 16], sizes = [8, 8], strides = [1, 1]} : vector<8x32xf32> to vector<8x8xf32>
    %cst_50 = arith.constant dense<0.000000e+00> : vector<8x32xf32>
    %150 = tpu.matmul %149, %1, %cst_50 {dimension_numbers = #tpu.dot_dimension_numbers<[1], [0], [0], [1], [0, 0, 1, 1], [], []>} : vector<8x8xf32>, vector<8x32xf32>, vector<8x32xf32> -> vector<8x32xf32>
    %151 = vector.extract_strided_slice %10 {offsets = [2, 0, 0], sizes = [1, 1, 32], strides = [1, 1, 1]} : vector<4x2x32xf32> to vector<1x1x32xf32>
    %152 = vector.shape_cast %151 : vector<1x1x32xf32> to vector<1x32xf32>
    %153 = vector.extract_strided_slice %10 {offsets = [2, 1, 0], sizes = [1, 1, 32], strides = [1, 1, 1]} : vector<4x2x32xf32> to vector<1x1x32xf32>
    %154 = vector.shape_cast %153 : vector<1x1x32xf32> to vector<1x32xf32>
    %cst_51 = arith.constant dense<0.000000e+00> : vector<8xf32>
    %155 = vector.multi_reduction <add>, %150, %cst_51 [1] : vector<8x32xf32> to vector<8xf32>
    %156 = vector.shape_cast %155 : vector<8xf32> to vector<8x1xf32>
    %cst_52 = arith.constant 3.200000e+01 : f32
    %157 = vector.broadcast %cst_52 : f32 to vector<8x1xf32>
    %158 = arith.divf %156, %157 : vector<8x1xf32>
    %159 = vector.broadcast %158 : vector<8x1xf32> to vector<8x32xf32>
    %160 = arith.subf %150, %159 : vector<8x32xf32>
    %161 = arith.mulf %160, %160 : vector<8x32xf32>
    %cst_53 = arith.constant dense<0.000000e+00> : vector<8xf32>
    %162 = vector.multi_reduction <add>, %161, %cst_53 [1] : vector<8x32xf32> to vector<8xf32>
    %163 = vector.shape_cast %162 : vector<8xf32> to vector<8x1xf32>
    %cst_54 = arith.constant 3.200000e+01 : f32
    %164 = vector.broadcast %cst_54 : f32 to vector<8x1xf32>
    %165 = arith.divf %163, %164 : vector<8x1xf32>
    %166 = vector.broadcast %158 : vector<8x1xf32> to vector<8x32xf32>
    %167 = arith.subf %150, %166 : vector<8x32xf32>
    %cst_55 = arith.constant 9.99999974E-6 : f32
    %168 = vector.broadcast %cst_55 : f32 to vector<8x1xf32>
    %169 = arith.addf %165, %168 : vector<8x1xf32>
    %170 = math.rsqrt %169 : vector<8x1xf32>
    %171 = vector.broadcast %170 : vector<8x1xf32> to vector<8x32xf32>
    %172 = arith.mulf %167, %171 : vector<8x32xf32>
    %173 = vector.broadcast %152 : vector<1x32xf32> to vector<8x32xf32>
    %174 = arith.mulf %172, %173 : vector<8x32xf32>
    %175 = vector.broadcast %154 : vector<1x32xf32> to vector<8x32xf32>
    %176 = arith.addf %174, %175 : vector<8x32xf32>
    %177 = vector.extract_strided_slice %12 {offsets = [2, 0, 0], sizes = [1, 32, 16], strides = [1, 1, 1]} : vector<4x32x16xf32> to vector<1x32x16xf32>
    %178 = vector.shape_cast %177 : vector<1x32x16xf32> to vector<32x16xf32>
    %cst_56 = arith.constant dense<0.000000e+00> : vector<8x16xf32>
    %179 = tpu.matmul %176, %178, %cst_56 {dimension_numbers = #tpu.dot_dimension_numbers<[1], [0], [0], [1], [0, 0, 1, 1], [], []>} : vector<8x32xf32>, vector<32x16xf32>, vector<8x16xf32> -> vector<8x16xf32>
    %180 = vector.extract_strided_slice %14 {offsets = [2, 0, 0], sizes = [1, 1, 16], strides = [1, 1, 1]} : vector<4x1x16xf32> to vector<1x1x16xf32>
    %181 = vector.shape_cast %180 : vector<1x1x16xf32> to vector<1x16xf32>
    %182 = vector.broadcast %181 : vector<1x16xf32> to vector<8x16xf32>
    %183 = arith.addf %179, %182 : vector<8x16xf32>
    %cst_57 = arith.constant 0.000000e+00 : f32
    %184 = vector.broadcast %cst_57 : f32 to vector<8x16xf32>
    %185 = arith.maximumf %183, %184 : vector<8x16xf32>
    %186 = vector.extract_strided_slice %185 {offsets = [0, 0], sizes = [8, 8], strides = [1, 1]} : vector<8x16xf32> to vector<8x8xf32>
    %187 = vector.extract_strided_slice %185 {offsets = [0, 8], sizes = [8, 8], strides = [1, 1]} : vector<8x16xf32> to vector<8x8xf32>
    %188 = arith.mulf %186, %187 : vector<8x8xf32>
    %189 = vector.extract_strided_slice %16 {offsets = [2, 0, 0], sizes = [1, 1, 8], strides = [1, 1, 1]} : vector<4x2x8xf32> to vector<1x1x8xf32>
    %190 = vector.shape_cast %189 : vector<1x1x8xf32> to vector<1x8xf32>
    %191 = vector.extract_strided_slice %16 {offsets = [2, 1, 0], sizes = [1, 1, 8], strides = [1, 1, 1]} : vector<4x2x8xf32> to vector<1x1x8xf32>
    %192 = vector.shape_cast %191 : vector<1x1x8xf32> to vector<1x8xf32>
    %cst_58 = arith.constant dense<0.000000e+00> : vector<8xf32>
    %193 = vector.multi_reduction <add>, %188, %cst_58 [1] : vector<8x8xf32> to vector<8xf32>
    %194 = vector.shape_cast %193 : vector<8xf32> to vector<8x1xf32>
    %cst_59 = arith.constant 8.000000e+00 : f32
    %195 = vector.broadcast %cst_59 : f32 to vector<8x1xf32>
    %196 = arith.divf %194, %195 : vector<8x1xf32>
    %197 = vector.broadcast %196 : vector<8x1xf32> to vector<8x8xf32>
    %198 = arith.subf %188, %197 : vector<8x8xf32>
    %199 = arith.mulf %198, %198 : vector<8x8xf32>
    %cst_60 = arith.constant dense<0.000000e+00> : vector<8xf32>
    %200 = vector.multi_reduction <add>, %199, %cst_60 [1] : vector<8x8xf32> to vector<8xf32>
    %201 = vector.shape_cast %200 : vector<8xf32> to vector<8x1xf32>
    %cst_61 = arith.constant 8.000000e+00 : f32
    %202 = vector.broadcast %cst_61 : f32 to vector<8x1xf32>
    %203 = arith.divf %201, %202 : vector<8x1xf32>
    %204 = vector.broadcast %196 : vector<8x1xf32> to vector<8x8xf32>
    %205 = arith.subf %188, %204 : vector<8x8xf32>
    %cst_62 = arith.constant 9.99999974E-6 : f32
    %206 = vector.broadcast %cst_62 : f32 to vector<8x1xf32>
    %207 = arith.addf %203, %206 : vector<8x1xf32>
    %208 = math.rsqrt %207 : vector<8x1xf32>
    %209 = vector.broadcast %208 : vector<8x1xf32> to vector<8x8xf32>
    %210 = arith.mulf %205, %209 : vector<8x8xf32>
    %211 = vector.broadcast %190 : vector<1x8xf32> to vector<8x8xf32>
    %212 = arith.mulf %210, %211 : vector<8x8xf32>
    %213 = vector.broadcast %192 : vector<1x8xf32> to vector<8x8xf32>
    %214 = arith.addf %212, %213 : vector<8x8xf32>
    %215 = vector.extract_strided_slice %8 {offsets = [0, 24], sizes = [8, 8], strides = [1, 1]} : vector<8x32xf32> to vector<8x8xf32>
    %cst_63 = arith.constant dense<0.000000e+00> : vector<8x32xf32>
    %216 = tpu.matmul %215, %1, %cst_63 {dimension_numbers = #tpu.dot_dimension_numbers<[1], [0], [0], [1], [0, 0, 1, 1], [], []>} : vector<8x8xf32>, vector<8x32xf32>, vector<8x32xf32> -> vector<8x32xf32>
    %217 = vector.extract_strided_slice %10 {offsets = [3, 0, 0], sizes = [1, 1, 32], strides = [1, 1, 1]} : vector<4x2x32xf32> to vector<1x1x32xf32>
    %218 = vector.shape_cast %217 : vector<1x1x32xf32> to vector<1x32xf32>
    %219 = vector.extract_strided_slice %10 {offsets = [3, 1, 0], sizes = [1, 1, 32], strides = [1, 1, 1]} : vector<4x2x32xf32> to vector<1x1x32xf32>
    %220 = vector.shape_cast %219 : vector<1x1x32xf32> to vector<1x32xf32>
    %cst_64 = arith.constant dense<0.000000e+00> : vector<8xf32>
    %221 = vector.multi_reduction <add>, %216, %cst_64 [1] : vector<8x32xf32> to vector<8xf32>
    %222 = vector.shape_cast %221 : vector<8xf32> to vector<8x1xf32>
    %cst_65 = arith.constant 3.200000e+01 : f32
    %223 = vector.broadcast %cst_65 : f32 to vector<8x1xf32>
    %224 = arith.divf %222, %223 : vector<8x1xf32>
    %225 = vector.broadcast %224 : vector<8x1xf32> to vector<8x32xf32>
    %226 = arith.subf %216, %225 : vector<8x32xf32>
    %227 = arith.mulf %226, %226 : vector<8x32xf32>
    %cst_66 = arith.constant dense<0.000000e+00> : vector<8xf32>
    %228 = vector.multi_reduction <add>, %227, %cst_66 [1] : vector<8x32xf32> to vector<8xf32>
    %229 = vector.shape_cast %228 : vector<8xf32> to vector<8x1xf32>
    %cst_67 = arith.constant 3.200000e+01 : f32
    %230 = vector.broadcast %cst_67 : f32 to vector<8x1xf32>
    %231 = arith.divf %229, %230 : vector<8x1xf32>
    %232 = vector.broadcast %224 : vector<8x1xf32> to vector<8x32xf32>
    %233 = arith.subf %216, %232 : vector<8x32xf32>
    %cst_68 = arith.constant 9.99999974E-6 : f32
    %234 = vector.broadcast %cst_68 : f32 to vector<8x1xf32>
    %235 = arith.addf %231, %234 : vector<8x1xf32>
    %236 = math.rsqrt %235 : vector<8x1xf32>
    %237 = vector.broadcast %236 : vector<8x1xf32> to vector<8x32xf32>
    %238 = arith.mulf %233, %237 : vector<8x32xf32>
    %239 = vector.broadcast %218 : vector<1x32xf32> to vector<8x32xf32>
    %240 = arith.mulf %238, %239 : vector<8x32xf32>
    %241 = vector.broadcast %220 : vector<1x32xf32> to vector<8x32xf32>
    %242 = arith.addf %240, %241 : vector<8x32xf32>
    %243 = vector.extract_strided_slice %12 {offsets = [3, 0, 0], sizes = [1, 32, 16], strides = [1, 1, 1]} : vector<4x32x16xf32> to vector<1x32x16xf32>
    %244 = vector.shape_cast %243 : vector<1x32x16xf32> to vector<32x16xf32>
    %cst_69 = arith.constant dense<0.000000e+00> : vector<8x16xf32>
    %245 = tpu.matmul %242, %244, %cst_69 {dimension_numbers = #tpu.dot_dimension_numbers<[1], [0], [0], [1], [0, 0, 1, 1], [], []>} : vector<8x32xf32>, vector<32x16xf32>, vector<8x16xf32> -> vector<8x16xf32>
    %246 = vector.extract_strided_slice %14 {offsets = [3, 0, 0], sizes = [1, 1, 16], strides = [1, 1, 1]} : vector<4x1x16xf32> to vector<1x1x16xf32>
    %247 = vector.shape_cast %246 : vector<1x1x16xf32> to vector<1x16xf32>
    %248 = vector.broadcast %247 : vector<1x16xf32> to vector<8x16xf32>
    %249 = arith.addf %245, %248 : vector<8x16xf32>
    %cst_70 = arith.constant 0.000000e+00 : f32
    %250 = vector.broadcast %cst_70 : f32 to vector<8x16xf32>
    %251 = arith.maximumf %249, %250 : vector<8x16xf32>
    %252 = vector.extract_strided_slice %251 {offsets = [0, 0], sizes = [8, 8], strides = [1, 1]} : vector<8x16xf32> to vector<8x8xf32>
    %253 = vector.extract_strided_slice %251 {offsets = [0, 8], sizes = [8, 8], strides = [1, 1]} : vector<8x16xf32> to vector<8x8xf32>
    %254 = arith.mulf %252, %253 : vector<8x8xf32>
    %255 = vector.extract_strided_slice %16 {offsets = [3, 0, 0], sizes = [1, 1, 8], strides = [1, 1, 1]} : vector<4x2x8xf32> to vector<1x1x8xf32>
    %256 = vector.shape_cast %255 : vector<1x1x8xf32> to vector<1x8xf32>
    %257 = vector.extract_strided_slice %16 {offsets = [3, 1, 0], sizes = [1, 1, 8], strides = [1, 1, 1]} : vector<4x2x8xf32> to vector<1x1x8xf32>
    %258 = vector.shape_cast %257 : vector<1x1x8xf32> to vector<1x8xf32>
    %cst_71 = arith.constant dense<0.000000e+00> : vector<8xf32>
    %259 = vector.multi_reduction <add>, %254, %cst_71 [1] : vector<8x8xf32> to vector<8xf32>
    %260 = vector.shape_cast %259 : vector<8xf32> to vector<8x1xf32>
    %cst_72 = arith.constant 8.000000e+00 : f32
    %261 = vector.broadcast %cst_72 : f32 to vector<8x1xf32>
    %262 = arith.divf %260, %261 : vector<8x1xf32>
    %263 = vector.broadcast %262 : vector<8x1xf32> to vector<8x8xf32>
    %264 = arith.subf %254, %263 : vector<8x8xf32>
    %265 = arith.mulf %264, %264 : vector<8x8xf32>
    %cst_73 = arith.constant dense<0.000000e+00> : vector<8xf32>
    %266 = vector.multi_reduction <add>, %265, %cst_73 [1] : vector<8x8xf32> to vector<8xf32>
    %267 = vector.shape_cast %266 : vector<8xf32> to vector<8x1xf32>
    %cst_74 = arith.constant 8.000000e+00 : f32
    %268 = vector.broadcast %cst_74 : f32 to vector<8x1xf32>
    %269 = arith.divf %267, %268 : vector<8x1xf32>
    %270 = vector.broadcast %262 : vector<8x1xf32> to vector<8x8xf32>
    %271 = arith.subf %254, %270 : vector<8x8xf32>
    %cst_75 = arith.constant 9.99999974E-6 : f32
    %272 = vector.broadcast %cst_75 : f32 to vector<8x1xf32>
    %273 = arith.addf %269, %272 : vector<8x1xf32>
    %274 = math.rsqrt %273 : vector<8x1xf32>
    %275 = vector.broadcast %274 : vector<8x1xf32> to vector<8x8xf32>
    %276 = arith.mulf %271, %275 : vector<8x8xf32>
    %277 = vector.broadcast %256 : vector<1x8xf32> to vector<8x8xf32>
    %278 = arith.mulf %276, %277 : vector<8x8xf32>
    %279 = vector.broadcast %258 : vector<1x8xf32> to vector<8x8xf32>
    %280 = arith.addf %278, %279 : vector<8x8xf32>
    %281 = tpu.concatenate %82, %148, %214, %280 in 1 : vector<8x8xf32>, vector<8x8xf32>, vector<8x8xf32>, vector<8x8xf32> -> vector<8x32xf32>
    %c1 = arith.constant 1 : index
    %c0_76 = arith.constant 0 : index
    %c0_77 = arith.constant 0 : index
    %282 = vector.load %arg2[%c1, %c0_76, %c0_77] : memref<2x32x32xf32, #tpu.memory_space<vmem>>, vector<1x32x32xf32>
    %283 = vector.shape_cast %282 : vector<1x32x32xf32> to vector<32x32xf32>
    %cst_78 = arith.constant dense<0.000000e+00> : vector<8x32xf32>
    %284 = tpu.matmul %281, %283, %cst_78 {dimension_numbers = #tpu.dot_dimension_numbers<[1], [0], [0], [1], [0, 0, 1, 1], [], []>} : vector<8x32xf32>, vector<32x32xf32>, vector<8x32xf32> -> vector<8x32xf32>
    %c1_79 = arith.constant 1 : index
    %c0_80 = arith.constant 0 : index
    %c0_81 = arith.constant 0 : index
    %285 = vector.load %arg3[%c1_79, %c0_80, %c0_81] : memref<2x1x32xf32, #tpu.memory_space<vmem>>, vector<1x1x32xf32>
    %286 = vector.shape_cast %285 : vector<1x1x32xf32> to vector<1x32xf32>
    %287 = vector.broadcast %286 : vector<1x32xf32> to vector<8x32xf32>
    %288 = arith.addf %284, %287 : vector<8x32xf32>
    %c1_82 = arith.constant 1 : index
    %c0_83 = arith.constant 0 : index
    %c0_84 = arith.constant 0 : index
    %c0_85 = arith.constant 0 : index
    %289 = vector.load %arg4[%c1_82, %c0_83, %c0_84, %c0_85] : memref<2x4x2x32xf32, #tpu.memory_space<vmem>>, vector<1x4x2x32xf32>
    %290 = vector.shape_cast %289 : vector<1x4x2x32xf32> to vector<4x2x32xf32>
    %c1_86 = arith.constant 1 : index
    %c0_87 = arith.constant 0 : index
    %c0_88 = arith.constant 0 : index
    %c0_89 = arith.constant 0 : index
    %291 = vector.load %arg5[%c1_86, %c0_87, %c0_88, %c0_89] : memref<2x4x32x16xf32, #tpu.memory_space<vmem>>, vector<1x4x32x16xf32>
    %292 = vector.shape_cast %291 : vector<1x4x32x16xf32> to vector<4x32x16xf32>
    %c1_90 = arith.constant 1 : index
    %c0_91 = arith.constant 0 : index
    %c0_92 = arith.constant 0 : index
    %c0_93 = arith.constant 0 : index
    %293 = vector.load %arg6[%c1_90, %c0_91, %c0_92, %c0_93] : memref<2x4x1x16xf32, #tpu.memory_space<vmem>>, vector<1x4x1x16xf32>
    %294 = vector.shape_cast %293 : vector<1x4x1x16xf32> to vector<4x1x16xf32>
    %c1_94 = arith.constant 1 : index
    %c0_95 = arith.constant 0 : index
    %c0_96 = arith.constant 0 : index
    %c0_97 = arith.constant 0 : index
    %295 = vector.load %arg7[%c1_94, %c0_95, %c0_96, %c0_97] : memref<2x4x2x8xf32, #tpu.memory_space<vmem>>, vector<1x4x2x8xf32>
    %296 = vector.shape_cast %295 : vector<1x4x2x8xf32> to vector<4x2x8xf32>
    %297 = vector.extract_strided_slice %288 {offsets = [0, 0], sizes = [8, 8], strides = [1, 1]} : vector<8x32xf32> to vector<8x8xf32>
    %cst_98 = arith.constant dense<0.000000e+00> : vector<8x32xf32>
    %298 = tpu.matmul %297, %281, %cst_98 {dimension_numbers = #tpu.dot_dimension_numbers<[1], [0], [0], [1], [0, 0, 1, 1], [], []>} : vector<8x8xf32>, vector<8x32xf32>, vector<8x32xf32> -> vector<8x32xf32>
    %299 = vector.extract_strided_slice %290 {offsets = [0, 0, 0], sizes = [1, 1, 32], strides = [1, 1, 1]} : vector<4x2x32xf32> to vector<1x1x32xf32>
    %300 = vector.shape_cast %299 : vector<1x1x32xf32> to vector<1x32xf32>
    %301 = vector.extract_strided_slice %290 {offsets = [0, 1, 0], sizes = [1, 1, 32], strides = [1, 1, 1]} : vector<4x2x32xf32> to vector<1x1x32xf32>
    %302 = vector.shape_cast %301 : vector<1x1x32xf32> to vector<1x32xf32>
    %cst_99 = arith.constant dense<0.000000e+00> : vector<8xf32>
    %303 = vector.multi_reduction <add>, %298, %cst_99 [1] : vector<8x32xf32> to vector<8xf32>
    %304 = vector.shape_cast %303 : vector<8xf32> to vector<8x1xf32>
    %cst_100 = arith.constant 3.200000e+01 : f32
    %305 = vector.broadcast %cst_100 : f32 to vector<8x1xf32>
    %306 = arith.divf %304, %305 : vector<8x1xf32>
    %307 = vector.broadcast %306 : vector<8x1xf32> to vector<8x32xf32>
    %308 = arith.subf %298, %307 : vector<8x32xf32>
    %309 = arith.mulf %308, %308 : vector<8x32xf32>
    %cst_101 = arith.constant dense<0.000000e+00> : vector<8xf32>
    %310 = vector.multi_reduction <add>, %309, %cst_101 [1] : vector<8x32xf32> to vector<8xf32>
    %311 = vector.shape_cast %310 : vector<8xf32> to vector<8x1xf32>
    %cst_102 = arith.constant 3.200000e+01 : f32
    %312 = vector.broadcast %cst_102 : f32 to vector<8x1xf32>
    %313 = arith.divf %311, %312 : vector<8x1xf32>
    %314 = vector.broadcast %306 : vector<8x1xf32> to vector<8x32xf32>
    %315 = arith.subf %298, %314 : vector<8x32xf32>
    %cst_103 = arith.constant 9.99999974E-6 : f32
    %316 = vector.broadcast %cst_103 : f32 to vector<8x1xf32>
    %317 = arith.addf %313, %316 : vector<8x1xf32>
    %318 = math.rsqrt %317 : vector<8x1xf32>
    %319 = vector.broadcast %318 : vector<8x1xf32> to vector<8x32xf32>
    %320 = arith.mulf %315, %319 : vector<8x32xf32>
    %321 = vector.broadcast %300 : vector<1x32xf32> to vector<8x32xf32>
    %322 = arith.mulf %320, %321 : vector<8x32xf32>
    %323 = vector.broadcast %302 : vector<1x32xf32> to vector<8x32xf32>
    %324 = arith.addf %322, %323 : vector<8x32xf32>
    %325 = vector.extract_strided_slice %292 {offsets = [0, 0, 0], sizes = [1, 32, 16], strides = [1, 1, 1]} : vector<4x32x16xf32> to vector<1x32x16xf32>
    %326 = vector.shape_cast %325 : vector<1x32x16xf32> to vector<32x16xf32>
    %cst_104 = arith.constant dense<0.000000e+00> : vector<8x16xf32>
    %327 = tpu.matmul %324, %326, %cst_104 {dimension_numbers = #tpu.dot_dimension_numbers<[1], [0], [0], [1], [0, 0, 1, 1], [], []>} : vector<8x32xf32>, vector<32x16xf32>, vector<8x16xf32> -> vector<8x16xf32>
    %328 = vector.extract_strided_slice %294 {offsets = [0, 0, 0], sizes = [1, 1, 16], strides = [1, 1, 1]} : vector<4x1x16xf32> to vector<1x1x16xf32>
    %329 = vector.shape_cast %328 : vector<1x1x16xf32> to vector<1x16xf32>
    %330 = vector.broadcast %329 : vector<1x16xf32> to vector<8x16xf32>
    %331 = arith.addf %327, %330 : vector<8x16xf32>
    %cst_105 = arith.constant 0.000000e+00 : f32
    %332 = vector.broadcast %cst_105 : f32 to vector<8x16xf32>
    %333 = arith.maximumf %331, %332 : vector<8x16xf32>
    %334 = vector.extract_strided_slice %333 {offsets = [0, 0], sizes = [8, 8], strides = [1, 1]} : vector<8x16xf32> to vector<8x8xf32>
    %335 = vector.extract_strided_slice %333 {offsets = [0, 8], sizes = [8, 8], strides = [1, 1]} : vector<8x16xf32> to vector<8x8xf32>
    %336 = arith.mulf %334, %335 : vector<8x8xf32>
    %337 = vector.extract_strided_slice %296 {offsets = [0, 0, 0], sizes = [1, 1, 8], strides = [1, 1, 1]} : vector<4x2x8xf32> to vector<1x1x8xf32>
    %338 = vector.shape_cast %337 : vector<1x1x8xf32> to vector<1x8xf32>
    %339 = vector.extract_strided_slice %296 {offsets = [0, 1, 0], sizes = [1, 1, 8], strides = [1, 1, 1]} : vector<4x2x8xf32> to vector<1x1x8xf32>
    %340 = vector.shape_cast %339 : vector<1x1x8xf32> to vector<1x8xf32>
    %cst_106 = arith.constant dense<0.000000e+00> : vector<8xf32>
    %341 = vector.multi_reduction <add>, %336, %cst_106 [1] : vector<8x8xf32> to vector<8xf32>
    %342 = vector.shape_cast %341 : vector<8xf32> to vector<8x1xf32>
    %cst_107 = arith.constant 8.000000e+00 : f32
    %343 = vector.broadcast %cst_107 : f32 to vector<8x1xf32>
    %344 = arith.divf %342, %343 : vector<8x1xf32>
    %345 = vector.broadcast %344 : vector<8x1xf32> to vector<8x8xf32>
    %346 = arith.subf %336, %345 : vector<8x8xf32>
    %347 = arith.mulf %346, %346 : vector<8x8xf32>
    %cst_108 = arith.constant dense<0.000000e+00> : vector<8xf32>
    %348 = vector.multi_reduction <add>, %347, %cst_108 [1] : vector<8x8xf32> to vector<8xf32>
    %349 = vector.shape_cast %348 : vector<8xf32> to vector<8x1xf32>
    %cst_109 = arith.constant 8.000000e+00 : f32
    %350 = vector.broadcast %cst_109 : f32 to vector<8x1xf32>
    %351 = arith.divf %349, %350 : vector<8x1xf32>
    %352 = vector.broadcast %344 : vector<8x1xf32> to vector<8x8xf32>
    %353 = arith.subf %336, %352 : vector<8x8xf32>
    %cst_110 = arith.constant 9.99999974E-6 : f32
    %354 = vector.broadcast %cst_110 : f32 to vector<8x1xf32>
    %355 = arith.addf %351, %354 : vector<8x1xf32>
    %356 = math.rsqrt %355 : vector<8x1xf32>
    %357 = vector.broadcast %356 : vector<8x1xf32> to vector<8x8xf32>
    %358 = arith.mulf %353, %357 : vector<8x8xf32>
    %359 = vector.broadcast %338 : vector<1x8xf32> to vector<8x8xf32>
    %360 = arith.mulf %358, %359 : vector<8x8xf32>
    %361 = vector.broadcast %340 : vector<1x8xf32> to vector<8x8xf32>
    %362 = arith.addf %360, %361 : vector<8x8xf32>
    %363 = vector.extract_strided_slice %288 {offsets = [0, 8], sizes = [8, 8], strides = [1, 1]} : vector<8x32xf32> to vector<8x8xf32>
    %cst_111 = arith.constant dense<0.000000e+00> : vector<8x32xf32>
    %364 = tpu.matmul %363, %281, %cst_111 {dimension_numbers = #tpu.dot_dimension_numbers<[1], [0], [0], [1], [0, 0, 1, 1], [], []>} : vector<8x8xf32>, vector<8x32xf32>, vector<8x32xf32> -> vector<8x32xf32>
    %365 = vector.extract_strided_slice %290 {offsets = [1, 0, 0], sizes = [1, 1, 32], strides = [1, 1, 1]} : vector<4x2x32xf32> to vector<1x1x32xf32>
    %366 = vector.shape_cast %365 : vector<1x1x32xf32> to vector<1x32xf32>
    %367 = vector.extract_strided_slice %290 {offsets = [1, 1, 0], sizes = [1, 1, 32], strides = [1, 1, 1]} : vector<4x2x32xf32> to vector<1x1x32xf32>
    %368 = vector.shape_cast %367 : vector<1x1x32xf32> to vector<1x32xf32>
    %cst_112 = arith.constant dense<0.000000e+00> : vector<8xf32>
    %369 = vector.multi_reduction <add>, %364, %cst_112 [1] : vector<8x32xf32> to vector<8xf32>
    %370 = vector.shape_cast %369 : vector<8xf32> to vector<8x1xf32>
    %cst_113 = arith.constant 3.200000e+01 : f32
    %371 = vector.broadcast %cst_113 : f32 to vector<8x1xf32>
    %372 = arith.divf %370, %371 : vector<8x1xf32>
    %373 = vector.broadcast %372 : vector<8x1xf32> to vector<8x32xf32>
    %374 = arith.subf %364, %373 : vector<8x32xf32>
    %375 = arith.mulf %374, %374 : vector<8x32xf32>
    %cst_114 = arith.constant dense<0.000000e+00> : vector<8xf32>
    %376 = vector.multi_reduction <add>, %375, %cst_114 [1] : vector<8x32xf32> to vector<8xf32>
    %377 = vector.shape_cast %376 : vector<8xf32> to vector<8x1xf32>
    %cst_115 = arith.constant 3.200000e+01 : f32
    %378 = vector.broadcast %cst_115 : f32 to vector<8x1xf32>
    %379 = arith.divf %377, %378 : vector<8x1xf32>
    %380 = vector.broadcast %372 : vector<8x1xf32> to vector<8x32xf32>
    %381 = arith.subf %364, %380 : vector<8x32xf32>
    %cst_116 = arith.constant 9.99999974E-6 : f32
    %382 = vector.broadcast %cst_116 : f32 to vector<8x1xf32>
    %383 = arith.addf %379, %382 : vector<8x1xf32>
    %384 = math.rsqrt %383 : vector<8x1xf32>
    %385 = vector.broadcast %384 : vector<8x1xf32> to vector<8x32xf32>
    %386 = arith.mulf %381, %385 : vector<8x32xf32>
    %387 = vector.broadcast %366 : vector<1x32xf32> to vector<8x32xf32>
    %388 = arith.mulf %386, %387 : vector<8x32xf32>
    %389 = vector.broadcast %368 : vector<1x32xf32> to vector<8x32xf32>
    %390 = arith.addf %388, %389 : vector<8x32xf32>
    %391 = vector.extract_strided_slice %292 {offsets = [1, 0, 0], sizes = [1, 32, 16], strides = [1, 1, 1]} : vector<4x32x16xf32> to vector<1x32x16xf32>
    %392 = vector.shape_cast %391 : vector<1x32x16xf32> to vector<32x16xf32>
    %cst_117 = arith.constant dense<0.000000e+00> : vector<8x16xf32>
    %393 = tpu.matmul %390, %392, %cst_117 {dimension_numbers = #tpu.dot_dimension_numbers<[1], [0], [0], [1], [0, 0, 1, 1], [], []>} : vector<8x32xf32>, vector<32x16xf32>, vector<8x16xf32> -> vector<8x16xf32>
    %394 = vector.extract_strided_slice %294 {offsets = [1, 0, 0], sizes = [1, 1, 16], strides = [1, 1, 1]} : vector<4x1x16xf32> to vector<1x1x16xf32>
    %395 = vector.shape_cast %394 : vector<1x1x16xf32> to vector<1x16xf32>
    %396 = vector.broadcast %395 : vector<1x16xf32> to vector<8x16xf32>
    %397 = arith.addf %393, %396 : vector<8x16xf32>
    %cst_118 = arith.constant 0.000000e+00 : f32
    %398 = vector.broadcast %cst_118 : f32 to vector<8x16xf32>
    %399 = arith.maximumf %397, %398 : vector<8x16xf32>
    %400 = vector.extract_strided_slice %399 {offsets = [0, 0], sizes = [8, 8], strides = [1, 1]} : vector<8x16xf32> to vector<8x8xf32>
    %401 = vector.extract_strided_slice %399 {offsets = [0, 8], sizes = [8, 8], strides = [1, 1]} : vector<8x16xf32> to vector<8x8xf32>
    %402 = arith.mulf %400, %401 : vector<8x8xf32>
    %403 = vector.extract_strided_slice %296 {offsets = [1, 0, 0], sizes = [1, 1, 8], strides = [1, 1, 1]} : vector<4x2x8xf32> to vector<1x1x8xf32>
    %404 = vector.shape_cast %403 : vector<1x1x8xf32> to vector<1x8xf32>
    %405 = vector.extract_strided_slice %296 {offsets = [1, 1, 0], sizes = [1, 1, 8], strides = [1, 1, 1]} : vector<4x2x8xf32> to vector<1x1x8xf32>
    %406 = vector.shape_cast %405 : vector<1x1x8xf32> to vector<1x8xf32>
    %cst_119 = arith.constant dense<0.000000e+00> : vector<8xf32>
    %407 = vector.multi_reduction <add>, %402, %cst_119 [1] : vector<8x8xf32> to vector<8xf32>
    %408 = vector.shape_cast %407 : vector<8xf32> to vector<8x1xf32>
    %cst_120 = arith.constant 8.000000e+00 : f32
    %409 = vector.broadcast %cst_120 : f32 to vector<8x1xf32>
    %410 = arith.divf %408, %409 : vector<8x1xf32>
    %411 = vector.broadcast %410 : vector<8x1xf32> to vector<8x8xf32>
    %412 = arith.subf %402, %411 : vector<8x8xf32>
    %413 = arith.mulf %412, %412 : vector<8x8xf32>
    %cst_121 = arith.constant dense<0.000000e+00> : vector<8xf32>
    %414 = vector.multi_reduction <add>, %413, %cst_121 [1] : vector<8x8xf32> to vector<8xf32>
    %415 = vector.shape_cast %414 : vector<8xf32> to vector<8x1xf32>
    %cst_122 = arith.constant 8.000000e+00 : f32
    %416 = vector.broadcast %cst_122 : f32 to vector<8x1xf32>
    %417 = arith.divf %415, %416 : vector<8x1xf32>
    %418 = vector.broadcast %410 : vector<8x1xf32> to vector<8x8xf32>
    %419 = arith.subf %402, %418 : vector<8x8xf32>
    %cst_123 = arith.constant 9.99999974E-6 : f32
    %420 = vector.broadcast %cst_123 : f32 to vector<8x1xf32>
    %421 = arith.addf %417, %420 : vector<8x1xf32>
    %422 = math.rsqrt %421 : vector<8x1xf32>
    %423 = vector.broadcast %422 : vector<8x1xf32> to vector<8x8xf32>
    %424 = arith.mulf %419, %423 : vector<8x8xf32>
    %425 = vector.broadcast %404 : vector<1x8xf32> to vector<8x8xf32>
    %426 = arith.mulf %424, %425 : vector<8x8xf32>
    %427 = vector.broadcast %406 : vector<1x8xf32> to vector<8x8xf32>
    %428 = arith.addf %426, %427 : vector<8x8xf32>
    %429 = vector.extract_strided_slice %288 {offsets = [0, 16], sizes = [8, 8], strides = [1, 1]} : vector<8x32xf32> to vector<8x8xf32>
    %cst_124 = arith.constant dense<0.000000e+00> : vector<8x32xf32>
    %430 = tpu.matmul %429, %281, %cst_124 {dimension_numbers = #tpu.dot_dimension_numbers<[1], [0], [0], [1], [0, 0, 1, 1], [], []>} : vector<8x8xf32>, vector<8x32xf32>, vector<8x32xf32> -> vector<8x32xf32>
    %431 = vector.extract_strided_slice %290 {offsets = [2, 0, 0], sizes = [1, 1, 32], strides = [1, 1, 1]} : vector<4x2x32xf32> to vector<1x1x32xf32>
    %432 = vector.shape_cast %431 : vector<1x1x32xf32> to vector<1x32xf32>
    %433 = vector.extract_strided_slice %290 {offsets = [2, 1, 0], sizes = [1, 1, 32], strides = [1, 1, 1]} : vector<4x2x32xf32> to vector<1x1x32xf32>
    %434 = vector.shape_cast %433 : vector<1x1x32xf32> to vector<1x32xf32>
    %cst_125 = arith.constant dense<0.000000e+00> : vector<8xf32>
    %435 = vector.multi_reduction <add>, %430, %cst_125 [1] : vector<8x32xf32> to vector<8xf32>
    %436 = vector.shape_cast %435 : vector<8xf32> to vector<8x1xf32>
    %cst_126 = arith.constant 3.200000e+01 : f32
    %437 = vector.broadcast %cst_126 : f32 to vector<8x1xf32>
    %438 = arith.divf %436, %437 : vector<8x1xf32>
    %439 = vector.broadcast %438 : vector<8x1xf32> to vector<8x32xf32>
    %440 = arith.subf %430, %439 : vector<8x32xf32>
    %441 = arith.mulf %440, %440 : vector<8x32xf32>
    %cst_127 = arith.constant dense<0.000000e+00> : vector<8xf32>
    %442 = vector.multi_reduction <add>, %441, %cst_127 [1] : vector<8x32xf32> to vector<8xf32>
    %443 = vector.shape_cast %442 : vector<8xf32> to vector<8x1xf32>
    %cst_128 = arith.constant 3.200000e+01 : f32
    %444 = vector.broadcast %cst_128 : f32 to vector<8x1xf32>
    %445 = arith.divf %443, %444 : vector<8x1xf32>
    %446 = vector.broadcast %438 : vector<8x1xf32> to vector<8x32xf32>
    %447 = arith.subf %430, %446 : vector<8x32xf32>
    %cst_129 = arith.constant 9.99999974E-6 : f32
    %448 = vector.broadcast %cst_129 : f32 to vector<8x1xf32>
    %449 = arith.addf %445, %448 : vector<8x1xf32>
    %450 = math.rsqrt %449 : vector<8x1xf32>
    %451 = vector.broadcast %450 : vector<8x1xf32> to vector<8x32xf32>
    %452 = arith.mulf %447, %451 : vector<8x32xf32>
    %453 = vector.broadcast %432 : vector<1x32xf32> to vector<8x32xf32>
    %454 = arith.mulf %452, %453 : vector<8x32xf32>
    %455 = vector.broadcast %434 : vector<1x32xf32> to vector<8x32xf32>
    %456 = arith.addf %454, %455 : vector<8x32xf32>
    %457 = vector.extract_strided_slice %292 {offsets = [2, 0, 0], sizes = [1, 32, 16], strides = [1, 1, 1]} : vector<4x32x16xf32> to vector<1x32x16xf32>
    %458 = vector.shape_cast %457 : vector<1x32x16xf32> to vector<32x16xf32>
    %cst_130 = arith.constant dense<0.000000e+00> : vector<8x16xf32>
    %459 = tpu.matmul %456, %458, %cst_130 {dimension_numbers = #tpu.dot_dimension_numbers<[1], [0], [0], [1], [0, 0, 1, 1], [], []>} : vector<8x32xf32>, vector<32x16xf32>, vector<8x16xf32> -> vector<8x16xf32>
    %460 = vector.extract_strided_slice %294 {offsets = [2, 0, 0], sizes = [1, 1, 16], strides = [1, 1, 1]} : vector<4x1x16xf32> to vector<1x1x16xf32>
    %461 = vector.shape_cast %460 : vector<1x1x16xf32> to vector<1x16xf32>
    %462 = vector.broadcast %461 : vector<1x16xf32> to vector<8x16xf32>
    %463 = arith.addf %459, %462 : vector<8x16xf32>
    %cst_131 = arith.constant 0.000000e+00 : f32
    %464 = vector.broadcast %cst_131 : f32 to vector<8x16xf32>
    %465 = arith.maximumf %463, %464 : vector<8x16xf32>
    %466 = vector.extract_strided_slice %465 {offsets = [0, 0], sizes = [8, 8], strides = [1, 1]} : vector<8x16xf32> to vector<8x8xf32>
    %467 = vector.extract_strided_slice %465 {offsets = [0, 8], sizes = [8, 8], strides = [1, 1]} : vector<8x16xf32> to vector<8x8xf32>
    %468 = arith.mulf %466, %467 : vector<8x8xf32>
    %469 = vector.extract_strided_slice %296 {offsets = [2, 0, 0], sizes = [1, 1, 8], strides = [1, 1, 1]} : vector<4x2x8xf32> to vector<1x1x8xf32>
    %470 = vector.shape_cast %469 : vector<1x1x8xf32> to vector<1x8xf32>
    %471 = vector.extract_strided_slice %296 {offsets = [2, 1, 0], sizes = [1, 1, 8], strides = [1, 1, 1]} : vector<4x2x8xf32> to vector<1x1x8xf32>
    %472 = vector.shape_cast %471 : vector<1x1x8xf32> to vector<1x8xf32>
    %cst_132 = arith.constant dense<0.000000e+00> : vector<8xf32>
    %473 = vector.multi_reduction <add>, %468, %cst_132 [1] : vector<8x8xf32> to vector<8xf32>
    %474 = vector.shape_cast %473 : vector<8xf32> to vector<8x1xf32>
    %cst_133 = arith.constant 8.000000e+00 : f32
    %475 = vector.broadcast %cst_133 : f32 to vector<8x1xf32>
    %476 = arith.divf %474, %475 : vector<8x1xf32>
    %477 = vector.broadcast %476 : vector<8x1xf32> to vector<8x8xf32>
    %478 = arith.subf %468, %477 : vector<8x8xf32>
    %479 = arith.mulf %478, %478 : vector<8x8xf32>
    %cst_134 = arith.constant dense<0.000000e+00> : vector<8xf32>
    %480 = vector.multi_reduction <add>, %479, %cst_134 [1] : vector<8x8xf32> to vector<8xf32>
    %481 = vector.shape_cast %480 : vector<8xf32> to vector<8x1xf32>
    %cst_135 = arith.constant 8.000000e+00 : f32
    %482 = vector.broadcast %cst_135 : f32 to vector<8x1xf32>
    %483 = arith.divf %481, %482 : vector<8x1xf32>
    %484 = vector.broadcast %476 : vector<8x1xf32> to vector<8x8xf32>
    %485 = arith.subf %468, %484 : vector<8x8xf32>
    %cst_136 = arith.constant 9.99999974E-6 : f32
    %486 = vector.broadcast %cst_136 : f32 to vector<8x1xf32>
    %487 = arith.addf %483, %486 : vector<8x1xf32>
    %488 = math.rsqrt %487 : vector<8x1xf32>
    %489 = vector.broadcast %488 : vector<8x1xf32> to vector<8x8xf32>
    %490 = arith.mulf %485, %489 : vector<8x8xf32>
    %491 = vector.broadcast %470 : vector<1x8xf32> to vector<8x8xf32>
    %492 = arith.mulf %490, %491 : vector<8x8xf32>
    %493 = vector.broadcast %472 : vector<1x8xf32> to vector<8x8xf32>
    %494 = arith.addf %492, %493 : vector<8x8xf32>
    %495 = vector.extract_strided_slice %288 {offsets = [0, 24], sizes = [8, 8], strides = [1, 1]} : vector<8x32xf32> to vector<8x8xf32>
    %cst_137 = arith.constant dense<0.000000e+00> : vector<8x32xf32>
    %496 = tpu.matmul %495, %281, %cst_137 {dimension_numbers = #tpu.dot_dimension_numbers<[1], [0], [0], [1], [0, 0, 1, 1], [], []>} : vector<8x8xf32>, vector<8x32xf32>, vector<8x32xf32> -> vector<8x32xf32>
    %497 = vector.extract_strided_slice %290 {offsets = [3, 0, 0], sizes = [1, 1, 32], strides = [1, 1, 1]} : vector<4x2x32xf32> to vector<1x1x32xf32>
    %498 = vector.shape_cast %497 : vector<1x1x32xf32> to vector<1x32xf32>
    %499 = vector.extract_strided_slice %290 {offsets = [3, 1, 0], sizes = [1, 1, 32], strides = [1, 1, 1]} : vector<4x2x32xf32> to vector<1x1x32xf32>
    %500 = vector.shape_cast %499 : vector<1x1x32xf32> to vector<1x32xf32>
    %cst_138 = arith.constant dense<0.000000e+00> : vector<8xf32>
    %501 = vector.multi_reduction <add>, %496, %cst_138 [1] : vector<8x32xf32> to vector<8xf32>
    %502 = vector.shape_cast %501 : vector<8xf32> to vector<8x1xf32>
    %cst_139 = arith.constant 3.200000e+01 : f32
    %503 = vector.broadcast %cst_139 : f32 to vector<8x1xf32>
    %504 = arith.divf %502, %503 : vector<8x1xf32>
    %505 = vector.broadcast %504 : vector<8x1xf32> to vector<8x32xf32>
    %506 = arith.subf %496, %505 : vector<8x32xf32>
    %507 = arith.mulf %506, %506 : vector<8x32xf32>
    %cst_140 = arith.constant dense<0.000000e+00> : vector<8xf32>
    %508 = vector.multi_reduction <add>, %507, %cst_140 [1] : vector<8x32xf32> to vector<8xf32>
    %509 = vector.shape_cast %508 : vector<8xf32> to vector<8x1xf32>
    %cst_141 = arith.constant 3.200000e+01 : f32
    %510 = vector.broadcast %cst_141 : f32 to vector<8x1xf32>
    %511 = arith.divf %509, %510 : vector<8x1xf32>
    %512 = vector.broadcast %504 : vector<8x1xf32> to vector<8x32xf32>
    %513 = arith.subf %496, %512 : vector<8x32xf32>
    %cst_142 = arith.constant 9.99999974E-6 : f32
    %514 = vector.broadcast %cst_142 : f32 to vector<8x1xf32>
    %515 = arith.addf %511, %514 : vector<8x1xf32>
    %516 = math.rsqrt %515 : vector<8x1xf32>
    %517 = vector.broadcast %516 : vector<8x1xf32> to vector<8x32xf32>
    %518 = arith.mulf %513, %517 : vector<8x32xf32>
    %519 = vector.broadcast %498 : vector<1x32xf32> to vector<8x32xf32>
    %520 = arith.mulf %518, %519 : vector<8x32xf32>
    %521 = vector.broadcast %500 : vector<1x32xf32> to vector<8x32xf32>
    %522 = arith.addf %520, %521 : vector<8x32xf32>
    %523 = vector.extract_strided_slice %292 {offsets = [3, 0, 0], sizes = [1, 32, 16], strides = [1, 1, 1]} : vector<4x32x16xf32> to vector<1x32x16xf32>
    %524 = vector.shape_cast %523 : vector<1x32x16xf32> to vector<32x16xf32>
    %cst_143 = arith.constant dense<0.000000e+00> : vector<8x16xf32>
    %525 = tpu.matmul %522, %524, %cst_143 {dimension_numbers = #tpu.dot_dimension_numbers<[1], [0], [0], [1], [0, 0, 1, 1], [], []>} : vector<8x32xf32>, vector<32x16xf32>, vector<8x16xf32> -> vector<8x16xf32>
    %526 = vector.extract_strided_slice %294 {offsets = [3, 0, 0], sizes = [1, 1, 16], strides = [1, 1, 1]} : vector<4x1x16xf32> to vector<1x1x16xf32>
    %527 = vector.shape_cast %526 : vector<1x1x16xf32> to vector<1x16xf32>
    %528 = vector.broadcast %527 : vector<1x16xf32> to vector<8x16xf32>
    %529 = arith.addf %525, %528 : vector<8x16xf32>
    %cst_144 = arith.constant 0.000000e+00 : f32
    %530 = vector.broadcast %cst_144 : f32 to vector<8x16xf32>
    %531 = arith.maximumf %529, %530 : vector<8x16xf32>
    %532 = vector.extract_strided_slice %531 {offsets = [0, 0], sizes = [8, 8], strides = [1, 1]} : vector<8x16xf32> to vector<8x8xf32>
    %533 = vector.extract_strided_slice %531 {offsets = [0, 8], sizes = [8, 8], strides = [1, 1]} : vector<8x16xf32> to vector<8x8xf32>
    %534 = arith.mulf %532, %533 : vector<8x8xf32>
    %535 = vector.extract_strided_slice %296 {offsets = [3, 0, 0], sizes = [1, 1, 8], strides = [1, 1, 1]} : vector<4x2x8xf32> to vector<1x1x8xf32>
    %536 = vector.shape_cast %535 : vector<1x1x8xf32> to vector<1x8xf32>
    %537 = vector.extract_strided_slice %296 {offsets = [3, 1, 0], sizes = [1, 1, 8], strides = [1, 1, 1]} : vector<4x2x8xf32> to vector<1x1x8xf32>
    %538 = vector.shape_cast %537 : vector<1x1x8xf32> to vector<1x8xf32>
    %cst_145 = arith.constant dense<0.000000e+00> : vector<8xf32>
    %539 = vector.multi_reduction <add>, %534, %cst_145 [1] : vector<8x8xf32> to vector<8xf32>
    %540 = vector.shape_cast %539 : vector<8xf32> to vector<8x1xf32>
    %cst_146 = arith.constant 8.000000e+00 : f32
    %541 = vector.broadcast %cst_146 : f32 to vector<8x1xf32>
    %542 = arith.divf %540, %541 : vector<8x1xf32>
    %543 = vector.broadcast %542 : vector<8x1xf32> to vector<8x8xf32>
    %544 = arith.subf %534, %543 : vector<8x8xf32>
    %545 = arith.mulf %544, %544 : vector<8x8xf32>
    %cst_147 = arith.constant dense<0.000000e+00> : vector<8xf32>
    %546 = vector.multi_reduction <add>, %545, %cst_147 [1] : vector<8x8xf32> to vector<8xf32>
    %547 = vector.shape_cast %546 : vector<8xf32> to vector<8x1xf32>
    %cst_148 = arith.constant 8.000000e+00 : f32
    %548 = vector.broadcast %cst_148 : f32 to vector<8x1xf32>
    %549 = arith.divf %547, %548 : vector<8x1xf32>
    %550 = vector.broadcast %542 : vector<8x1xf32> to vector<8x8xf32>
    %551 = arith.subf %534, %550 : vector<8x8xf32>
    %cst_149 = arith.constant 9.99999974E-6 : f32
    %552 = vector.broadcast %cst_149 : f32 to vector<8x1xf32>
    %553 = arith.addf %549, %552 : vector<8x1xf32>
    %554 = math.rsqrt %553 : vector<8x1xf32>
    %555 = vector.broadcast %554 : vector<8x1xf32> to vector<8x8xf32>
    %556 = arith.mulf %551, %555 : vector<8x8xf32>
    %557 = vector.broadcast %536 : vector<1x8xf32> to vector<8x8xf32>
    %558 = arith.mulf %556, %557 : vector<8x8xf32>
    %559 = vector.broadcast %538 : vector<1x8xf32> to vector<8x8xf32>
    %560 = arith.addf %558, %559 : vector<8x8xf32>
    %561 = tpu.concatenate %362, %428, %494, %560 in 1 : vector<8x8xf32>, vector<8x8xf32>, vector<8x8xf32>, vector<8x8xf32> -> vector<8x32xf32>
    %c0_150 = arith.constant 0 : index
    %c0_151 = arith.constant 0 : index
    %c0_152 = arith.constant 0 : index
    %562 = vector.load %arg8[%c0_150, %c0_151, %c0_152] : memref<1x8x32xf32, #tpu.memory_space<vmem>>, vector<1x8x32xf32>
    %563 = vector.shape_cast %562 : vector<1x8x32xf32> to vector<8x32xf32>
    %564 = vector.shape_cast %561 : vector<8x32xf32> to vector<1x8x32xf32>
    tpu.vector_store %arg8[%c0_150, %c0_151, %c0_152], %564 {strides = array<i32>} : memref<1x8x32xf32, #tpu.memory_space<vmem>>, vector<1x8x32xf32>,
    return
  }
  func.func @transform_0(%arg0: i32) -> (i32, i32, i32) {
    %c0_i32 = arith.constant 0 : i32
    %c0_i32_0 = arith.constant 0 : i32
    %c0_i32_1 = arith.constant 0 : i32
    return %arg0, %c0_i32, %c0_i32_0 : i32, i32, i32
  }
  func.func @transform_1(%arg0: i32) -> (i32, i32, i32) {
    %c0_i32 = arith.constant 0 : i32
    %c0_i32_0 = arith.constant 0 : i32
    %c0_i32_1 = arith.constant 0 : i32
    %c0_i32_2 = arith.constant 0 : i32
    return %c0_i32, %c0_i32_0, %c0_i32_1 : i32, i32, i32
  }
  func.func @transform_2(%arg0: i32) -> (i32, i32, i32) {
    %c0_i32 = arith.constant 0 : i32
    %c0_i32_0 = arith.constant 0 : i32
    %c0_i32_1 = arith.constant 0 : i32
    %c0_i32_2 = arith.constant 0 : i32
    return %c0_i32, %c0_i32_0, %c0_i32_1 : i32, i32, i32
  }
  func.func @transform_3(%arg0: i32) -> (i32, i32, i32, i32) {
    %c0_i32 = arith.constant 0 : i32
    %c0_i32_0 = arith.constant 0 : i32
    %c0_i32_1 = arith.constant 0 : i32
    %c0_i32_2 = arith.constant 0 : i32
    %c0_i32_3 = arith.constant 0 : i32
    return %c0_i32, %c0_i32_0, %c0_i32_1, %c0_i32_2 : i32, i32, i32, i32
  }
  func.func @transform_4(%arg0: i32) -> (i32, i32, i32, i32) {
    %c0_i32 = arith.constant 0 : i32
    %c0_i32_0 = arith.constant 0 : i32
    %c0_i32_1 = arith.constant 0 : i32
    %c0_i32_2 = arith.constant 0 : i32
    %c0_i32_3 = arith.constant 0 : i32
    return %c0_i32, %c0_i32_0, %c0_i32_1, %c0_i32_2 : i32, i32, i32, i32
  }
  func.func @transform_5(%arg0: i32) -> (i32, i32, i32, i32) {
    %c0_i32 = arith.constant 0 : i32
    %c0_i32_0 = arith.constant 0 : i32
    %c0_i32_1 = arith.constant 0 : i32
    %c0_i32_2 = arith.constant 0 : i32
    %c0_i32_3 = arith.constant 0 : i32
    return %c0_i32, %c0_i32_0, %c0_i32_1, %c0_i32_2 : i32, i32, i32, i32
  }
  func.func @transform_6(%arg0: i32) -> (i32, i32, i32, i32) {
    %c0_i32 = arith.constant 0 : i32
    %c0_i32_0 = arith.constant 0 : i32
    %c0_i32_1 = arith.constant 0 : i32
    %c0_i32_2 = arith.constant 0 : i32
    %c0_i32_3 = arith.constant 0 : i32
    return %c0_i32, %c0_i32_0, %c0_i32_1, %c0_i32_2 : i32, i32, i32, i32
  }
  func.func @transform_7(%arg0: i32) -> (i32, i32, i32) {
    %c0_i32 = arith.constant 0 : i32
    %c0_i32_0 = arith.constant 0 : i32
    %c0_i32_1 = arith.constant 0 : i32
    return %arg0, %c0_i32, %c0_i32_0 : i32, i32, i32
  }
}

</mosaic_0001>

<llo_original>
// kernel: encoder_forward.1
$region0: #{encoder_forward.1}
  #allocation0 [shape = 'u32[]', space=smem, size = 0x4, offset = 0x4, fixed_abs, tag = 'smem constant byte address 0x4 - core index']
  #allocation1 [shape = 'u32[144,128]{1,0:T(1,128)}', space=vmem, size = 0x12000, scoped, tag = 'internal scratch']
  %s0 = inlined_call_operand.vmem [shape: f32[2,8,32], index: 0, kind: input, shape index: {}]
  %s1 = inlined_call_operand.vmem [shape: f32[2,32,32], index: 1, kind: input, shape index: {}]
  %s2 = inlined_call_operand.vmem [shape: f32[2,1,32], index: 2, kind: input, shape index: {}]
  %s3 = inlined_call_operand.vmem [shape: f32[2,4,2,32], index: 3, kind: input, shape index: {}]
  %s4 = inlined_call_operand.vmem [shape: f32[2,4,32,16], index: 4, kind: input, shape index: {}]
  %s5 = inlined_call_operand.vmem [shape: f32[2,4,1,16], index: 5, kind: input, shape index: {}]
  %s6 = inlined_call_operand.vmem [shape: f32[2,4,2,8], index: 6, kind: input, shape index: {}]
  %s7 = inlined_call_operand.hbm [shape: f32[2,8,32], index: 7, kind: output, shape index: {}]
  %s8 = sld [smem:[#allocation0]]
  $region61: #{encoder_forward.1} parent=0
    _
  %s10 = ssub.s32 1, %s8
  %s11 = scalar_select 0, %s10, %s8
  $region1: #{encoder_forward.1} parent=0
    #allocation2 [shape = 'u8[8192]{0}', space=vmem, size = 0x2000, scoped, tag = 'output window, operand 0']
    #allocation3 [shape = 's32[2]{0}', space=sflag, size = 0x8, scoped, tag = 'scoped memory for encoder_forward.1']
    %12 = vsyncpa [#allocation3], 0
    %s13 = scalar_lea.sflag [#allocation3], 1
    %14 = vsyncpa %s13, 0
    loop: start=0, step=1, limit=4
    $region2: #{encoder_forward.1} parent=1 // loop_pre_header
      _
    $region3: #{encoder_forward.1} parent=1 // loop_header
      %s16 = sphi 0, %s20
      %p17 = scmp.ge.s32.totalorder %s16, 4
      %s26 = sphi 0, %s28
      %s29 = sphi 0, %s26
      %s30 = sphi 0, %s29
      %s46 = sphi 0, %s30
      %s50 = sphi 0, %s50
      %s52 = sphi 0, %s50
      %s53 = sphi 0, %s52
      %s67 = sphi 0, %s53
      %s71 = sphi 0, %s71
      %s73 = sphi 0, %s71
      %s74 = sphi 0, %s73
      %s88 = sphi 0, %s74
      %s92 = sphi 0, %s92
      %s94 = sphi 0, %s92
      %s95 = sphi 0, %s94
      %s109 = sphi 0, %s95
      %s113 = sphi 0, %s113
      %s115 = sphi 0, %s113
      %s116 = sphi 0, %s115
      %s130 = sphi 0, %s116
      %s134 = sphi 0, %s134
      %s136 = sphi 0, %s134
      %s137 = sphi 0, %s136
      %s151 = sphi 0, %s137
      %s155 = sphi 0, %s155
      %s157 = sphi 0, %s155
      %s158 = sphi 0, %s157
      %s172 = sphi 0, %s158
      %s178 = sphi 0, %s180
      %s181 = sphi 0, %s178
      %s182 = sphi 0, %s181
      %s198 = sphi 0, %s182
    $region4: #{encoder_forward.1} parent=1 // loop_header_branch
      %19 = sbr.rel (%p17) target = $region8
    $region5: #{encoder_forward.1} parent=1 // loop_body
      %s21 = ssub.s32 %s16, 1
      %s22 = ssub.s32 %s16, 2
      %s23 = sadd.s32 %s16, 1
      %s24 = ssub.s32 %s16, %s23
      %p25 = scmp.eq.s32.totalorder %s24, 0
      %s27 = sadd.s32 %s26, 1
      %s28 = scalar_select %p25, %s26, %s27
      %p31 = pneg %p25
      %p32 = scmp.eq.s32.totalorder %s16, 1
      %p33 = por %p31, %p32
      %p34 = scmp.ne.s32.totalorder %s26, %s29
      %p35 = scmp.eq.s32.totalorder %s16, 0
      %p36 = por %p34, %p35
      %p37 = scmp.ne.s32.totalorder %s26, %s29
      %p38 = scmp.eq.s32.totalorder %s21, 1
      %p39 = por %p37, %p38
      %p40 = scmp.ne.s32.totalorder %s29, %s30
      %p41 = scmp.eq.s32.totalorder %s21, 0
      %p42 = por %p40, %p41
      %p43 = scmp.ne.s32.totalorder %s29, %s30
      %p44 = scmp.eq.s32.totalorder %s22, 1
      %p45 = por %p43, %p44
      %p47 = scmp.ne.s32.totalorder %s30, %s46
      %p48 = scmp.eq.s32.totalorder %s22, 0
      %p49 = por %p47, %p48
      %s51 = sadd.s32 %s50, 1
      %p54 = scmp.eq.s32.totalorder %s16, 1
      %p55 = scmp.ne.s32.totalorder %s50, %s52
      %p56 = scmp.eq.s32.totalorder %s16, 0
      %p57 = por %p55, %p56
      %p58 = scmp.ne.s32.totalorder %s50, %s52
      %p59 = scmp.eq.s32.totalorder %s21, 1
      %p60 = por %p58, %p59
      %p61 = scmp.ne.s32.totalorder %s52, %s53
      %p62 = scmp.eq.s32.totalorder %s21, 0
      %p63 = por %p61, %p62
      %p64 = scmp.ne.s32.totalorder %s52, %s53
      %p65 = scmp.eq.s32.totalorder %s22, 1
      %p66 = por %p64, %p65
      %p68 = scmp.ne.s32.totalorder %s53, %s67
      %p69 = scmp.eq.s32.totalorder %s22, 0
      %p70 = por %p68, %p69
      %s72 = sadd.s32 %s71, 1
      %p75 = scmp.eq.s32.totalorder %s16, 1
      %p76 = scmp.ne.s32.totalorder %s71, %s73
      %p77 = scmp.eq.s32.totalorder %s16, 0
      %p78 = por %p76, %p77
      %p79 = scmp.ne.s32.totalorder %s71, %s73
      %p80 = scmp.eq.s32.totalorder %s21, 1
      %p81 = por %p79, %p80
      %p82 = scmp.ne.s32.totalorder %s73, %s74
      %p83 = scmp.eq.s32.totalorder %s21, 0
      %p84 = por %p82, %p83
      %p85 = scmp.ne.s32.totalorder %s73, %s74
      %p86 = scmp.eq.s32.totalorder %s22, 1
      %p87 = por %p85, %p86
      %p89 = scmp.ne.s32.totalorder %s74, %s88
      %p90 = scmp.eq.s32.totalorder %s22, 0
      %p91 = por %p89, %p90
      %s93 = sadd.s32 %s92, 1
      %p96 = scmp.eq.s32.totalorder %s16, 1
      %p97 = scmp.ne.s32.totalorder %s92, %s94
      %p98 = scmp.eq.s32.totalorder %s16, 0
      %p99 = por %p97, %p98
      %p100 = scmp.ne.s32.totalorder %s92, %s94
      %p101 = scmp.eq.s32.totalorder %s21, 1
      %p102 = por %p100, %p101
      %p103 = scmp.ne.s32.totalorder %s94, %s95
      %p104 = scmp.eq.s32.totalorder %s21, 0
      %p105 = por %p103, %p104
      %p106 = scmp.ne.s32.totalorder %s94, %s95
      %p107 = scmp.eq.s32.totalorder %s22, 1
      %p108 = por %p106, %p107
      %p110 = scmp.ne.s32.totalorder %s95, %s109
      %p111 = scmp.eq.s32.totalorder %s22, 0
      %p112 = por %p110, %p111
      %s114 = sadd.s32 %s113, 1
      %p117 = scmp.eq.s32.totalorder %s16, 1
      %p118 = scmp.ne.s32.totalorder %s113, %s115
      %p119 = scmp.eq.s32.totalorder %s16, 0
      %p120 = por %p118, %p119
      %p121 = scmp.ne.s32.totalorder %s113, %s115
      %p122 = scmp.eq.s32.totalorder %s21, 1
      %p123 = por %p121, %p122
      %p124 = scmp.ne.s32.totalorder %s115, %s116
      %p125 = scmp.eq.s32.totalorder %s21, 0
      %p126 = por %p124, %p125
      %p127 = scmp.ne.s32.totalorder %s115, %s116
      %p128 = scmp.eq.s32.totalorder %s22, 1
      %p129 = por %p127, %p128
      %p131 = scmp.ne.s32.totalorder %s116, %s130
      %p132 = scmp.eq.s32.totalorder %s22, 0
      %p133 = por %p131, %p132
      %s135 = sadd.s32 %s134, 1
      %p138 = scmp.eq.s32.totalorder %s16, 1
      %p139 = scmp.ne.s32.totalorder %s134, %s136
      %p140 = scmp.eq.s32.totalorder %s16, 0
      %p141 = por %p139, %p140
      %p142 = scmp.ne.s32.totalorder %s134, %s136
      %p143 = scmp.eq.s32.totalorder %s21, 1
      %p144 = por %p142, %p143
      %p145 = scmp.ne.s32.totalorder %s136, %s137
      %p146 = scmp.eq.s32.totalorder %s21, 0
      %p147 = por %p145, %p146
      %p148 = scmp.ne.s32.totalorder %s136, %s137
      %p149 = scmp.eq.s32.totalorder %s22, 1
      %p150 = por %p148, %p149
      %p152 = scmp.ne.s32.totalorder %s137, %s151
      %p153 = scmp.eq.s32.totalorder %s22, 0
      %p154 = por %p152, %p153
      %s156 = sadd.s32 %s155, 1
      %p159 = scmp.eq.s32.totalorder %s16, 1
      %p160 = scmp.ne.s32.totalorder %s155, %s157
      %p161 = scmp.eq.s32.totalorder %s16, 0
      %p162 = por %p160, %p161
      %p163 = scmp.ne.s32.totalorder %s155, %s157
      %p164 = scmp.eq.s32.totalorder %s21, 1
      %p165 = por %p163, %p164
      %p166 = scmp.ne.s32.totalorder %s157, %s158
      %p167 = scmp.eq.s32.totalorder %s21, 0
      %p168 = por %p166, %p167
      %p169 = scmp.ne.s32.totalorder %s157, %s158
      %p170 = scmp.eq.s32.totalorder %s22, 1
      %p171 = por %p169, %p170
      %p173 = scmp.ne.s32.totalorder %s158, %s172
      %p174 = scmp.eq.s32.totalorder %s22, 0
      %p175 = por %p173, %p174
      %s176 = ssub.s32 %s16, %s23
      %p177 = scmp.eq.s32.totalorder %s176, 0
      %s179 = sadd.s32 %s178, 1
      %s180 = scalar_select %p177, %s178, %s179
      %p183 = pneg %p177
      %p184 = scmp.eq.s32.totalorder %s16, 1
      %p185 = por %p183, %p184
      %p186 = scmp.ne.s32.totalorder %s178, %s181
      %p187 = scmp.eq.s32.totalorder %s16, 0
      %p188 = por %p186, %p187
      %p189 = scmp.ne.s32.totalorder %s178, %s181
      %p190 = scmp.eq.s32.totalorder %s21, 1
      %p191 = por %p189, %p190
      %p192 = scmp.ne.s32.totalorder %s181, %s182
      %p193 = scmp.eq.s32.totalorder %s21, 0
      %p194 = por %p192, %p193
      %p195 = scmp.ne.s32.totalorder %s181, %s182
      %p196 = scmp.eq.s32.totalorder %s22, 1
      %p197 = por %p195, %p196
      %p199 = scmp.ne.s32.totalorder %s182, %s198
      %p200 = scmp.eq.s32.totalorder %s22, 0
      %p201 = por %p199, %p200
      %p202 = scmp.le.s32.totalorder 1, %s16
      %p203 = scmp.lt.s32.totalorder %s16, 3
      %p204 = pnand %p202, %p203
      %p205 = pneg %p204
      // Predicated region
      $region9: #{encoder_forward.1} parent=5 // pred_check
        _
      $region10: #{encoder_forward.1} parent=5 // pred_check_branch
        %207 = sbr.rel (%p204) target = $region12
      $region11: #{encoder_forward.1} parent=5 // pred_region
        %s208 = ssub.s32 %s16, 1
        // Predicated region
        $region13: #{encoder_forward.1} parent=11 // pred_check
          %p209 = pneg %p63
        $region14: #{encoder_forward.1} parent=11 // pred_check_branch
          %211 = sbr.rel (%p209) target = $region16
        $region15: #{encoder_forward.1} parent=11 // pred_region
          _
        $region16: #{encoder_forward.1} parent=11 // pred_fallthru
          _
        // Predicated region
        $region17: #{encoder_forward.1} parent=11 // pred_check
          %p212 = pneg %p84
        $region18: #{encoder_forward.1} parent=11 // pred_check_branch
          %214 = sbr.rel (%p212) target = $region20
        $region19: #{encoder_forward.1} parent=11 // pred_region
          _
        $region20: #{encoder_forward.1} parent=11 // pred_fallthru
          _
        // Predicated region
        $region21: #{encoder_forward.1} parent=11 // pred_check
          %p215 = pneg %p105
        $region22: #{encoder_forward.1} parent=11 // pred_check_branch
          %217 = sbr.rel (%p215) target = $region24
        $region23: #{encoder_forward.1} parent=11 // pred_region
          _
        $region24: #{encoder_forward.1} parent=11 // pred_fallthru
          _
        // Predicated region
        $region25: #{encoder_forward.1} parent=11 // pred_check
          %p218 = pneg %p126
        $region26: #{encoder_forward.1} parent=11 // pred_check_branch
          %220 = sbr.rel (%p218) target = $region28
        $region27: #{encoder_forward.1} parent=11 // pred_region
          _
        $region28: #{encoder_forward.1} parent=11 // pred_fallthru
          _
        // Predicated region
        $region29: #{encoder_forward.1} parent=11 // pred_check
          %p221 = pneg %p147
        $region30: #{encoder_forward.1} parent=11 // pred_check_branch
          %223 = sbr.rel (%p221) target = $region32
        $region31: #{encoder_forward.1} parent=11 // pred_region
          _
        $region32: #{encoder_forward.1} parent=11 // pred_fallthru
          _
        // Predicated region
        $region33: #{encoder_forward.1} parent=11 // pred_check
          %p224 = pneg %p168
        $region34: #{encoder_forward.1} parent=11 // pred_check_branch
          %226 = sbr.rel (%p224) target = $region36
        $region35: #{encoder_forward.1} parent=11 // pred_region
          _
        $region36: #{encoder_forward.1} parent=11 // pred_fallthru
          _
      $region12: #{encoder_forward.1} parent=5 // pred_fallthru
        _
      %p227 = scmp.lt.s32.totalorder %s16, 2
      // Predicated region
      $region37: #{encoder_forward.1} parent=5 // pred_check
        %p228 = pneg %p227
      $region38: #{encoder_forward.1} parent=5 // pred_check_branch
        %230 = sbr.rel (%p228) target = $region40
      $region39: #{encoder_forward.1} parent=5 // pred_region
        // Predicated region
        $region41: #{encoder_forward.1} parent=39 // pred_check
          %p231 = pneg %p36
        $region42: #{encoder_forward.1} parent=39 // pred_check_branch
          %233 = sbr.rel (%p231) target = $region44
        $region43: #{encoder_forward.1} parent=39 // pred_region
          %p234 = scmp.lt.s32.totalorder %s16, 1
          %s235 = scalar_select %p234, %s16, 1
          %s236 = smul.addr %s235, 8
          %s237 = scalar_lea.vmem %s0, %s236
        $region44: #{encoder_forward.1} parent=39 // pred_fallthru
          _
      $region40: #{encoder_forward.1} parent=5 // pred_fallthru
        _
      %p238 = scmp.le.s32.totalorder 1, %s16
      %p239 = scmp.lt.s32.totalorder %s16, 3
      %p240 = pnand %p238, %p239
      %p241 = pneg %p240
      // Predicated region
      $region45: #{encoder_forward.1} parent=5 // pred_check
        _
      $region46: #{encoder_forward.1} parent=5 // pred_check_branch
        %243 = sbr.rel (%p240) target = $region48
      $region47: #{encoder_forward.1} parent=5 // pred_region
        %s244 = ssub.s32 %s16, 1
        %p245 = scmp.lt.s32.totalorder %s21, 1
        %s246 = scalar_select %p245, %s21, 1
        %s247 = smul.addr %s246, 8
        %s248 = scalar_lea.vmem %s0, %s247
        %p249 = pneg %p42
        %p250 = pneg %p39
        %p251 = pneg %p63
        %p252 = pneg %p60
        %p253 = pneg %p84
        %p254 = pneg %p81
        %p255 = pneg %p105
        %p256 = pneg %p102
        %p257 = pneg %p126
        %p258 = pneg %p123
        %p259 = pneg %p147
        %p260 = pneg %p144
        %p261 = pneg %p168
        %p262 = pneg %p165
        %p263 = pneg %p194
        %p264 = pneg %p191
        %s265 = sand.u32 %s181, 1
        %s266 = scalar_lea.sflag [#allocation3], %s265
        %s267 = sand.u32 %s181, 1
        %s268 = smul.addr %s267, 8
        %s269 = scalar_lea.vmem [#allocation2], %s268
        %p270 = scmp.lt.s32.totalorder %s21, 1
        %s271 = scalar_select %p270, %s21, 1
        %s272 = smul.addr %s271, 8
        %s273 = scalar_lea.vmem %s0, %s272
        %v274 = vld [vmem:[%s273] sm:$0xff]
        %v275 = vld [vmem:[%s1] sm:$0xff]
        %v276 = vld [vmem:[%s1 + $0x8] sm:$0xff]
        %v277 = vld [vmem:[%s1 + $0x10] sm:$0xff]
        %v278 = vld [vmem:[%s1 + $0x18] sm:$0xff]
        %v279 = vld [vmem:[%s2] sm:$0x1]
        %v281 = vlaneseq
        %v282 = vshrl.u32 %v281, 7
        %v283 = vsub.s32 0, %v282
        %v284 = vrot.slane %v279, %v283
        %vm286 = vcmask 261120
        %v288 = vsel %vm286, %v274, 0
        %290 = vmatprep.subr.mxu0 0.0
        %291 = vmatpush1.msra.mxu0 0.0
        %292 = vmatprep.subr.mxu0 0.0
        %293 = vmatpush1.msra.mxu0 0.0
        %294 = vmatprep.subr.mxu0 0.0
        %295 = vmatpush1.msra.mxu0 0.0
        %296 = vmatprep.subr.mxu0 0.0
        %297 = vmatpush1.msra.mxu0 0.0
        %298 = vmatprep.subr.mxu0 0.0
        %299 = vmatpush1.msra.mxu0 0.0
        %300 = vmatprep.subr.mxu0 0.0
        %301 = vmatpush1.msra.mxu0 0.0
        %302 = vmatprep.subr.mxu0 0.0
        %303 = vmatpush1.msra.mxu0 0.0
        %304 = vmatprep.subr.mxu0 0.0
        %305 = vmatpush1.msra.mxu0 0.0
        %306 = vmatprep.subr.mxu0 0.0
        %307 = vmatpush1.msra.mxu0 0.0
        %308 = vmatprep.subr.mxu0 0.0
        %309 = vmatpush1.msra.mxu0 0.0
        %310 = vmatprep.subr.mxu0 0.0
        %311 = vmatpush1.msra.mxu0 0.0
        %312 = vmatprep.subr.mxu0 0.0
        %313 = vmatpush1.msra.mxu0 0.0
        %314 = vmatprep.subr.mxu0 0.0
        %315 = vmatpush1.msra.mxu0 %v278
        %316 = vmatprep.subr.mxu0 0.0
        %317 = vmatpush1.msra.mxu0 %v277
        %318 = vmatprep.subr.mxu0 0.0
        %319 = vmatpush1.msra.mxu0 %v276
        %320 = vmatprep.subr.mxu0 0.0
        %321 = vmatpush1.msra.mxu0 %v275
        %322 = vmatprep.subr.mxu0 0.0
        %323 = vmatpush2.msra.mxu0 0.0
        %324 = vmatprep.subr.mxu0 0.0
        %325 = vmatpush2.msra.mxu0 0.0
        %326 = vmatprep.subr.mxu0 0.0
        %327 = vmatpush2.msra.mxu0 0.0
        %328 = vmatprep.subr.mxu0 0.0
        %329 = vmatpush2.msra.mxu0 0.0
        %330 = vmatprep.subr.mxu0 0.0
        %331 = vmatpush2.msra.mxu0 0.0
        %332 = vmatprep.subr.mxu0 0.0
        %333 = vmatpush2.msra.mxu0 0.0
        %334 = vmatprep.subr.mxu0 0.0
        %335 = vmatpush2.msra.mxu0 0.0
        %336 = vmatprep.subr.mxu0 0.0
        %337 = vmatpush2.msra.mxu0 0.0
        %338 = vmatprep.subr.mxu0 0.0
        %339 = vmatpush2.msra.mxu0 0.0
        %340 = vmatprep.subr.mxu0 0.0
        %341 = vmatpush2.msra.mxu0 0.0
        %342 = vmatprep.subr.mxu0 0.0
        %343 = vmatpush2.msra.mxu0 0.0
        %344 = vmatprep.subr.mxu0 0.0
        %345 = vmatpush2.msra.mxu0 0.0
        %346 = vmatprep.subr.mxu0 0.0
        %347 = vmatpush2.msra.mxu0 0.0
        %348 = vmatprep.subr.mxu0 0.0
        %349 = vmatpush2.msra.mxu0 0.0
        %350 = vmatprep.subr.mxu0 0.0
        %351 = vmatpush2.msra.mxu0 0.0
        %352 = vmatprep.subr.mxu0 0.0
        %353 = vmatpush2.msra.mxu0 0.0
        %354 = vmatprep.mubr.f32.mxu0 0.0
        %355 = vmatmul.mubr.f32.gmra.mxu0 %v288
        %v356 = vpop.f32.mrf.mxu0
        %v357 = vadd.f32 %v284, %v356
        %v358 = vpop.f32.mrf.mxu0
        %359 = vdwg.mxu0
        %v360 = vld [vmem:[%s3] sm:$0x3]
        %v361 = vld [vmem:[%s3 + $0x2] sm:$0x3]
        %v362 = vld [vmem:[%s3 + $0x4] sm:$0x3]
        %v363 = vld [vmem:[%s3 + $0x6] sm:$0x3]
        %v364 = vld [vmem:[%s4] sm:$0xff]
        %v365 = vld [vmem:[%s4 + $0x8] sm:$0xff]
        %v366 = vld [vmem:[%s4 + $0x10] sm:$0xff]
        %v367 = vld [vmem:[%s4 + $0x18] sm:$0xff]
        %v368 = vld [vmem:[%s4 + $0x20] sm:$0xff]
        %v369 = vld [vmem:[%s4 + $0x28] sm:$0xff]
        %v370 = vld [vmem:[%s4 + $0x30] sm:$0xff]
        %v371 = vld [vmem:[%s4 + $0x38] sm:$0xff]
        %v372 = vld [vmem:[%s4 + $0x40] sm:$0xff]
        %v373 = vld [vmem:[%s4 + $0x48] sm:$0xff]
        %v374 = vld [vmem:[%s4 + $0x50] sm:$0xff]
        %v375 = vld [vmem:[%s4 + $0x58] sm:$0xff]
        %v376 = vld [vmem:[%s4 + $0x60] sm:$0xff]
        %v377 = vld [vmem:[%s4 + $0x68] sm:$0xff]
        %v378 = vld [vmem:[%s4 + $0x70] sm:$0xff]
        %v379 = vld [vmem:[%s4 + $0x78] sm:$0xff]
        %v380 = vld [vmem:[%s5] sm:$0x1]
        %v381 = vld [vmem:[%s5 + $0x1] sm:$0x1]
        %v382 = vld [vmem:[%s5 + $0x2] sm:$0x1]
        %v383 = vld [vmem:[%s5 + $0x3] sm:$0x1]
        %v384 = vld [vmem:[%s6] sm:$0x3]
        %v385 = vld [vmem:[%s6 + $0x2] sm:$0x3]
        %v386 = vld [vmem:[%s6 + $0x4] sm:$0x3]
        %v387 = vld [vmem:[%s6 + $0x6] sm:$0x3]
        %vm388 = vcmask 64512
        %v390 = vsel %vm388, %v357, 0
        %392 = vmatprep.subr.mxu0 0.0
        %393 = vmatpush1.msra.mxu0 0.0
        %394 = vmatprep.subr.mxu0 0.0
        %395 = vmatpush1.msra.mxu0 0.0
        %396 = vmatprep.subr.mxu0 0.0
        %397 = vmatpush1.msra.mxu0 0.0
        %398 = vmatprep.subr.mxu0 0.0
        %399 = vmatpush1.msra.mxu0 0.0
        %400 = vmatprep.subr.mxu0 0.0
        %401 = vmatpush1.msra.mxu0 0.0
        %402 = vmatprep.subr.mxu0 0.0
        %403 = vmatpush1.msra.mxu0 0.0
        %404 = vmatprep.subr.mxu0 0.0
        %405 = vmatpush1.msra.mxu0 0.0
        %406 = vmatprep.subr.mxu0 0.0
        %407 = vmatpush1.msra.mxu0 0.0
        %408 = vmatprep.subr.mxu0 0.0
        %409 = vmatpush1.msra.mxu0 0.0
        %410 = vmatprep.subr.mxu0 0.0
        %411 = vmatpush1.msra.mxu0 0.0
        %412 = vmatprep.subr.mxu0 0.0
        %413 = vmatpush1.msra.mxu0 0.0
        %414 = vmatprep.subr.mxu0 0.0
        %415 = vmatpush1.msra.mxu0 0.0
        %416 = vmatprep.subr.mxu0 0.0
        %417 = vmatpush1.msra.mxu0 0.0
        %418 = vmatprep.subr.mxu0 0.0
        %419 = vmatpush1.msra.mxu0 0.0
        %420 = vmatprep.subr.mxu0 0.0
        %421 = vmatpush1.msra.mxu0 0.0
        %422 = vmatprep.subr.mxu0 0.0
        %423 = vmatpush1.msra.mxu0 %v274
        %424 = vmatprep.subr.mxu0 0.0
        %425 = vmatpush2.msra.mxu0 0.0
        %426 = vmatprep.subr.mxu0 0.0
        %427 = vmatpush2.msra.mxu0 0.0
        %428 = vmatprep.subr.mxu0 0.0
        %429 = vmatpush2.msra.mxu0 0.0
        %430 = vmatprep.subr.mxu0 0.0
        %431 = vmatpush2.msra.mxu0 0.0
        %432 = vmatprep.subr.mxu0 0.0
        %433 = vmatpush2.msra.mxu0 0.0
        %434 = vmatprep.subr.mxu0 0.0
        %435 = vmatpush2.msra.mxu0 0.0
        %436 = vmatprep.subr.mxu0 0.0
        %437 = vmatpush2.msra.mxu0 0.0
        %438 = vmatprep.subr.mxu0 0.0
        %439 = vmatpush2.msra.mxu0 0.0
        %440 = vmatprep.subr.mxu0 0.0
        %441 = vmatpush2.msra.mxu0 0.0
        %442 = vmatprep.subr.mxu0 0.0
        %443 = vmatpush2.msra.mxu0 0.0
        %444 = vmatprep.subr.mxu0 0.0
        %445 = vmatpush2.msra.mxu0 0.0
        %446 = vmatprep.subr.mxu0 0.0
        %447 = vmatpush2.msra.mxu0 0.0
        %448 = vmatprep.subr.mxu0 0.0
        %449 = vmatpush2.msra.mxu0 0.0
        %450 = vmatprep.subr.mxu0 0.0
        %451 = vmatpush2.msra.mxu0 0.0
        %452 = vmatprep.subr.mxu0 0.0
        %453 = vmatpush2.msra.mxu0 0.0
        %454 = vmatprep.subr.mxu0 0.0
        %455 = vmatpush2.msra.mxu0 0.0
        %456 = vmatprep.mubr.f32.mxu0 0.0
        %457 = vmatmul.mubr.f32.gmra.mxu0 %v390
        %v458 = vpop.f32.mrf.mxu0
        %v459 = vadd.f32 0.0, %v458
        %v460 = vpop.f32.mrf.mxu0
        %461 = vdwg.mxu0
        %v462 = vsel %vm286, %v459, 0.0
        %463 = vadd.xlane.f32.xlu0 %v462
        %v464 = vpop.xlane.xlu0 %463
        %v465 = vrcp.pop 32.0
        %v466 = vmul.f32 %v464, %v465
        %v467 = vsub.f32 %v459, %v466
        %v468 = vmul.f32 %v467, %v467
        %v469 = vsel %vm286, %v468, 0.0
        %470 = vadd.xlane.f32.xlu0 %v469
        %v471 = vpop.xlane.xlu0 %470
        %v472 = vmul.f32 %v471, %v465
        %v473 = vadd.f32 %v472, 1e-05
        %v474 = vrsqrt.pop %v473
        %v475 = vmul.f32 %v467, %v474
        %v476 = vlaneseq
        %v477 = vshrl.u32 %v476, 7
        %v478 = vsub.s32 0, %v477
        %v479 = vrot.slane %v360, %v478
        %v480 = vmul.f32 %v475, %v479
        %v481 = vlaneseq
        %v482 = vshrl.u32 %v481, 7
        %v483 = vsub.s32 1, %v482
        %v484 = vrot.slane %v360, %v483
        %v485 = vadd.f32 %v480, %v484
        %v487 = vlaneseq
        %v488 = vshrl.u32 %v487, 7
        %v489 = vsub.s32 0, %v488
        %v490 = vrot.slane %v380, %v489
        %v493 = vsel %vm286, %v485, 0
        %495 = vmatprep.subr.mxu0 0.0
        %496 = vmatpush1.msra.mxu0 0.0
        %497 = vmatprep.subr.mxu0 0.0
        %498 = vmatpush1.msra.mxu0 0.0
        %499 = vmatprep.subr.mxu0 0.0
        %500 = vmatpush1.msra.mxu0 0.0
        %501 = vmatprep.subr.mxu0 0.0
        %502 = vmatpush1.msra.mxu0 0.0
        %503 = vmatprep.subr.mxu0 0.0
        %504 = vmatpush1.msra.mxu0 0.0
        %505 = vmatprep.subr.mxu0 0.0
        %506 = vmatpush1.msra.mxu0 0.0
        %507 = vmatprep.subr.mxu0 0.0
        %508 = vmatpush1.msra.mxu0 0.0
        %509 = vmatprep.subr.mxu0 0.0
        %510 = vmatpush1.msra.mxu0 0.0
        %511 = vmatprep.subr.mxu0 0.0
        %512 = vmatpush1.msra.mxu0 0.0
        %513 = vmatprep.subr.mxu0 0.0
        %514 = vmatpush1.msra.mxu0 0.0
        %515 = vmatprep.subr.mxu0 0.0
        %516 = vmatpush1.msra.mxu0 0.0
        %517 = vmatprep.subr.mxu0 0.0
        %518 = vmatpush1.msra.mxu0 0.0
        %519 = vmatprep.subr.mxu0 0.0
        %520 = vmatpush1.msra.mxu0 %v367
        %521 = vmatprep.subr.mxu0 0.0
        %522 = vmatpush1.msra.mxu0 %v366
        %523 = vmatprep.subr.mxu0 0.0
        %524 = vmatpush1.msra.mxu0 %v365
        %525 = vmatprep.subr.mxu0 0.0
        %526 = vmatpush1.msra.mxu0 %v364
        %527 = vmatprep.subr.mxu0 0.0
        %528 = vmatpush2.msra.mxu0 0.0
        %529 = vmatprep.subr.mxu0 0.0
        %530 = vmatpush2.msra.mxu0 0.0
        %531 = vmatprep.subr.mxu0 0.0
        %532 = vmatpush2.msra.mxu0 0.0
        %533 = vmatprep.subr.mxu0 0.0
        %534 = vmatpush2.msra.mxu0 0.0
        %535 = vmatprep.subr.mxu0 0.0
        %536 = vmatpush2.msra.mxu0 0.0
        %537 = vmatprep.subr.mxu0 0.0
        %538 = vmatpush2.msra.mxu0 0.0
        %539 = vmatprep.subr.mxu0 0.0
        %540 = vmatpush2.msra.mxu0 0.0
        %541 = vmatprep.subr.mxu0 0.0
        %542 = vmatpush2.msra.mxu0 0.0
        %543 = vmatprep.subr.mxu0 0.0
        %544 = vmatpush2.msra.mxu0 0.0
        %545 = vmatprep.subr.mxu0 0.0
        %546 = vmatpush2.msra.mxu0 0.0
        %547 = vmatprep.subr.mxu0 0.0
        %548 = vmatpush2.msra.mxu0 0.0
        %549 = vmatprep.subr.mxu0 0.0
        %550 = vmatpush2.msra.mxu0 0.0
        %551 = vmatprep.subr.mxu0 0.0
        %552 = vmatpush2.msra.mxu0 0.0
        %553 = vmatprep.subr.mxu0 0.0
        %554 = vmatpush2.msra.mxu0 0.0
        %555 = vmatprep.subr.mxu0 0.0
        %556 = vmatpush2.msra.mxu0 0.0
        %557 = vmatprep.subr.mxu0 0.0
        %558 = vmatpush2.msra.mxu0 0.0
        %559 = vmatprep.mubr.f32.mxu0 0.0
        %560 = vmatmul.mubr.f32.gmra.mxu0 %v493
        %v561 = vpop.f32.mrf.mxu0
        %v562 = vadd.f32 %v490, %v561
        %v563 = vpop.f32.mrf.mxu0
        %564 = vdwg.mxu0
        %v565 = vmax.f32 %v562, 0.0
        %567 = vrot.lane.b32.xlu0 %v565, 120
        %v568 = vpop.permute.xlu0 %567
        %v570 = vmul.f32 %v565, %v568
        %v571 = vsel %vm388, %v570, 0.0
        %572 = vadd.xlane.f32.xlu0 %v571
        %v573 = vpop.xlane.xlu0 %572
        %v574 = vrcp.pop 8.0
        %v575 = vmul.f32 %v573, %v574
        %v576 = vsub.f32 %v570, %v575
        %v577 = vmul.f32 %v576, %v576
        %v578 = vsel %vm388, %v577, 0.0
        %579 = vadd.xlane.f32.xlu0 %v578
        %v580 = vpop.xlane.xlu0 %579
        %v581 = vmul.f32 %v580, %v574
        %v582 = vadd.f32 %v581, 1e-05
        %v583 = vrsqrt.pop %v582
        %v584 = vmul.f32 %v576, %v583
        %v585 = vlaneseq
        %v586 = vshrl.u32 %v585, 7
        %v587 = vsub.s32 0, %v586
        %v588 = vrot.slane %v384, %v587
        %v589 = vmul.f32 %v584, %v588
        %v590 = vlaneseq
        %v591 = vshrl.u32 %v590, 7
        %v592 = vsub.s32 1, %v591
        %v593 = vrot.slane %v384, %v592
        %v594 = vadd.f32 %v589, %v593
        %595 = vrot.lane.b32.xlu0 %v357, 120
        %v596 = vpop.permute.xlu0 %595
        %v597 = vsel %vm388, %v596, 0
        %599 = vmatprep.subr.mxu0 0.0
        %600 = vmatpush1.msra.mxu0 0.0
        %601 = vmatprep.subr.mxu0 0.0
        %602 = vmatpush1.msra.mxu0 0.0
        %603 = vmatprep.subr.mxu0 0.0
        %604 = vmatpush1.msra.mxu0 0.0
        %605 = vmatprep.subr.mxu0 0.0
        %606 = vmatpush1.msra.mxu0 0.0
        %607 = vmatprep.subr.mxu0 0.0
        %608 = vmatpush1.msra.mxu0 0.0
        %609 = vmatprep.subr.mxu0 0.0
        %610 = vmatpush1.msra.mxu0 0.0
        %611 = vmatprep.subr.mxu0 0.0
        %612 = vmatpush1.msra.mxu0 0.0
        %613 = vmatprep.subr.mxu0 0.0
        %614 = vmatpush1.msra.mxu0 0.0
        %615 = vmatprep.subr.mxu0 0.0
        %616 = vmatpush1.msra.mxu0 0.0
        %617 = vmatprep.subr.mxu0 0.0
        %618 = vmatpush1.msra.mxu0 0.0
        %619 = vmatprep.subr.mxu0 0.0
        %620 = vmatpush1.msra.mxu0 0.0
        %621 = vmatprep.subr.mxu0 0.0
        %622 = vmatpush1.msra.mxu0 0.0
        %623 = vmatprep.subr.mxu0 0.0
        %624 = vmatpush1.msra.mxu0 0.0
        %625 = vmatprep.subr.mxu0 0.0
        %626 = vmatpush1.msra.mxu0 0.0
        %627 = vmatprep.subr.mxu0 0.0
        %628 = vmatpush1.msra.mxu0 0.0
        %629 = vmatprep.subr.mxu0 0.0
        %630 = vmatpush1.msra.mxu0 %v274
        %631 = vmatprep.subr.mxu0 0.0
        %632 = vmatpush2.msra.mxu0 0.0
        %633 = vmatprep.subr.mxu0 0.0
        %634 = vmatpush2.msra.mxu0 0.0
        %635 = vmatprep.subr.mxu0 0.0
        %636 = vmatpush2.msra.mxu0 0.0
        %637 = vmatprep.subr.mxu0 0.0
        %638 = vmatpush2.msra.mxu0 0.0
        %639 = vmatprep.subr.mxu0 0.0
        %640 = vmatpush2.msra.mxu0 0.0
        %641 = vmatprep.subr.mxu0 0.0
        %642 = vmatpush2.msra.mxu0 0.0
        %643 = vmatprep.subr.mxu0 0.0
        %644 = vmatpush2.msra.mxu0 0.0
        %645 = vmatprep.subr.mxu0 0.0
        %646 = vmatpush2.msra.mxu0 0.0
        %647 = vmatprep.subr.mxu0 0.0
        %648 = vmatpush2.msra.mxu0 0.0
        %649 = vmatprep.subr.mxu0 0.0
        %650 = vmatpush2.msra.mxu0 0.0
        %651 = vmatprep.subr.mxu0 0.0
        %652 = vmatpush2.msra.mxu0 0.0
        %653 = vmatprep.subr.mxu0 0.0
        %654 = vmatpush2.msra.mxu0 0.0
        %655 = vmatprep.subr.mxu0 0.0
        %656 = vmatpush2.msra.mxu0 0.0
        %657 = vmatprep.subr.mxu0 0.0
        %658 = vmatpush2.msra.mxu0 0.0
        %659 = vmatprep.subr.mxu0 0.0
        %660 = vmatpush2.msra.mxu0 0.0
        %661 = vmatprep.subr.mxu0 0.0
        %662 = vmatpush2.msra.mxu0 0.0
        %663 = vmatprep.mubr.f32.mxu0 0.0
        %664 = vmatmul.mubr.f32.gmra.mxu0 %v597
        %v665 = vpop.f32.mrf.mxu0
        %v666 = vadd.f32 0.0, %v665
        %v667 = vpop.f32.mrf.mxu0
        %668 = vdwg.mxu0
        %v669 = vsel %vm286, %v666, 0.0
        %670 = vadd.xlane.f32.xlu0 %v669
        %v671 = vpop.xlane.xlu0 %670
        %v672 = vmul.f32 %v671, %v465
        %v673 = vsub.f32 %v666, %v672
        %v674 = vmul.f32 %v673, %v673
        %v675 = vsel %vm286, %v674, 0.0
        %676 = vadd.xlane.f32.xlu0 %v675
        %v677 = vpop.xlane.xlu0 %676
        %v678 = vmul.f32 %v677, %v465
        %v679 = vadd.f32 %v678, 1e-05
        %v680 = vrsqrt.pop %v679
        %v681 = vmul.f32 %v673, %v680
        %v682 = vlaneseq
        %v683 = vshrl.u32 %v682, 7
        %v684 = vsub.s32 0, %v683
        %v685 = vrot.slane %v361, %v684
        %v686 = vmul.f32 %v681, %v685
        %v687 = vlaneseq
        %v688 = vshrl.u32 %v687, 7
        %v689 = vsub.s32 1, %v688
        %v690 = vrot.slane %v361, %v689
        %v691 = vadd.f32 %v686, %v690
        %v693 = vlaneseq
        %v694 = vshrl.u32 %v693, 7
        %v695 = vsub.s32 0, %v694
        %v696 = vrot.slane %v381, %v695
        %v699 = vsel %vm286, %v691, 0
        %701 = vmatprep.subr.mxu0 0.0
        %702 = vmatpush1.msra.mxu0 0.0
        %703 = vmatprep.subr.mxu0 0.0
        %704 = vmatpush1.msra.mxu0 0.0
        %705 = vmatprep.subr.mxu0 0.0
        %706 = vmatpush1.msra.mxu0 0.0
        %707 = vmatprep.subr.mxu0 0.0
        %708 = vmatpush1.msra.mxu0 0.0
        %709 = vmatprep.subr.mxu0 0.0
        %710 = vmatpush1.msra.mxu0 0.0
        %711 = vmatprep.subr.mxu0 0.0
        %712 = vmatpush1.msra.mxu0 0.0
        %713 = vmatprep.subr.mxu0 0.0
        %714 = vmatpush1.msra.mxu0 0.0
        %715 = vmatprep.subr.mxu0 0.0
        %716 = vmatpush1.msra.mxu0 0.0
        %717 = vmatprep.subr.mxu0 0.0
        %718 = vmatpush1.msra.mxu0 0.0
        %719 = vmatprep.subr.mxu0 0.0
        %720 = vmatpush1.msra.mxu0 0.0
        %721 = vmatprep.subr.mxu0 0.0
        %722 = vmatpush1.msra.mxu0 0.0
        %723 = vmatprep.subr.mxu0 0.0
        %724 = vmatpush1.msra.mxu0 0.0
        %725 = vmatprep.subr.mxu0 0.0
        %726 = vmatpush1.msra.mxu0 %v371
        %727 = vmatprep.subr.mxu0 0.0
        %728 = vmatpush1.msra.mxu0 %v370
        %729 = vmatprep.subr.mxu0 0.0
        %730 = vmatpush1.msra.mxu0 %v369
        %731 = vmatprep.subr.mxu0 0.0
        %732 = vmatpush1.msra.mxu0 %v368
        %733 = vmatprep.subr.mxu0 0.0
        %734 = vmatpush2.msra.mxu0 0.0
        %735 = vmatprep.subr.mxu0 0.0
        %736 = vmatpush2.msra.mxu0 0.0
        %737 = vmatprep.subr.mxu0 0.0
        %738 = vmatpush2.msra.mxu0 0.0
        %739 = vmatprep.subr.mxu0 0.0
        %740 = vmatpush2.msra.mxu0 0.0
        %741 = vmatprep.subr.mxu0 0.0
        %742 = vmatpush2.msra.mxu0 0.0
        %743 = vmatprep.subr.mxu0 0.0
        %744 = vmatpush2.msra.mxu0 0.0
        %745 = vmatprep.subr.mxu0 0.0
        %746 = vmatpush2.msra.mxu0 0.0
        %747 = vmatprep.subr.mxu0 0.0
        %748 = vmatpush2.msra.mxu0 0.0
        %749 = vmatprep.subr.mxu0 0.0
        %750 = vmatpush2.msra.mxu0 0.0
        %751 = vmatprep.subr.mxu0 0.0
        %752 = vmatpush2.msra.mxu0 0.0
        %753 = vmatprep.subr.mxu0 0.0
        %754 = vmatpush2.msra.mxu0 0.0
        %755 = vmatprep.subr.mxu0 0.0
        %756 = vmatpush2.msra.mxu0 0.0
        %757 = vmatprep.subr.mxu0 0.0
        %758 = vmatpush2.msra.mxu0 0.0
        %759 = vmatprep.subr.mxu0 0.0
        %760 = vmatpush2.msra.mxu0 0.0
        %761 = vmatprep.subr.mxu0 0.0
        %762 = vmatpush2.msra.mxu0 0.0
        %763 = vmatprep.subr.mxu0 0.0
        %764 = vmatpush2.msra.mxu0 0.0
        %765 = vmatprep.mubr.f32.mxu0 0.0
        %766 = vmatmul.mubr.f32.gmra.mxu0 %v699
        %v767 = vpop.f32.mrf.mxu0
        %v768 = vadd.f32 %v696, %v767
        %v769 = vpop.f32.mrf.mxu0
        %770 = vdwg.mxu0
        %v771 = vmax.f32 %v768, 0.0
        %773 = vrot.lane.b32.xlu0 %v771, 120
        %v774 = vpop.permute.xlu0 %773
        %v776 = vmul.f32 %v771, %v774
        %v777 = vsel %vm388, %v776, 0.0
        %778 = vadd.xlane.f32.xlu0 %v777
        %v779 = vpop.xlane.xlu0 %778
        %v780 = vmul.f32 %v779, %v574
        %v781 = vsub.f32 %v776, %v780
        %v782 = vmul.f32 %v781, %v781
        %v783 = vsel %vm388, %v782, 0.0
        %784 = vadd.xlane.f32.xlu0 %v783
        %v785 = vpop.xlane.xlu0 %784
        %v786 = vmul.f32 %v785, %v574
        %v787 = vadd.f32 %v786, 1e-05
        %v788 = vrsqrt.pop %v787
        %v789 = vmul.f32 %v781, %v788
        %v790 = vlaneseq
        %v791 = vshrl.u32 %v790, 7
        %v792 = vsub.s32 0, %v791
        %v793 = vrot.slane %v385, %v792
        %v794 = vmul.f32 %v789, %v793
        %v795 = vlaneseq
        %v796 = vshrl.u32 %v795, 7
        %v797 = vsub.s32 1, %v796
        %v798 = vrot.slane %v385, %v797
        %v799 = vadd.f32 %v794, %v798
        %800 = vrot.lane.b32.xlu0 %v357, 112
        %v801 = vpop.permute.xlu0 %800
        %v802 = vsel %vm388, %v801, 0
        %804 = vmatprep.subr.mxu0 0.0
        %805 = vmatpush1.msra.mxu0 0.0
        %806 = vmatprep.subr.mxu0 0.0
        %807 = vmatpush1.msra.mxu0 0.0
        %808 = vmatprep.subr.mxu0 0.0
        %809 = vmatpush1.msra.mxu0 0.0
        %810 = vmatprep.subr.mxu0 0.0
        %811 = vmatpush1.msra.mxu0 0.0
        %812 = vmatprep.subr.mxu0 0.0
        %813 = vmatpush1.msra.mxu0 0.0
        %814 = vmatprep.subr.mxu0 0.0
        %815 = vmatpush1.msra.mxu0 0.0
        %816 = vmatprep.subr.mxu0 0.0
        %817 = vmatpush1.msra.mxu0 0.0
        %818 = vmatprep.subr.mxu0 0.0
        %819 = vmatpush1.msra.mxu0 0.0
        %820 = vmatprep.subr.mxu0 0.0
        %821 = vmatpush1.msra.mxu0 0.0
        %822 = vmatprep.subr.mxu0 0.0
        %823 = vmatpush1.msra.mxu0 0.0
        %824 = vmatprep.subr.mxu0 0.0
        %825 = vmatpush1.msra.mxu0 0.0
        %826 = vmatprep.subr.mxu0 0.0
        %827 = vmatpush1.msra.mxu0 0.0
        %828 = vmatprep.subr.mxu0 0.0
        %829 = vmatpush1.msra.mxu0 0.0
        %830 = vmatprep.subr.mxu0 0.0
        %831 = vmatpush1.msra.mxu0 0.0
        %832 = vmatprep.subr.mxu0 0.0
        %833 = vmatpush1.msra.mxu0 0.0
        %834 = vmatprep.subr.mxu0 0.0
        %835 = vmatpush1.msra.mxu0 %v274
        %836 = vmatprep.subr.mxu0 0.0
        %837 = vmatpush2.msra.mxu0 0.0
        %838 = vmatprep.subr.mxu0 0.0
        %839 = vmatpush2.msra.mxu0 0.0
        %840 = vmatprep.subr.mxu0 0.0
        %841 = vmatpush2.msra.mxu0 0.0
        %842 = vmatprep.subr.mxu0 0.0
        %843 = vmatpush2.msra.mxu0 0.0
        %844 = vmatprep.subr.mxu0 0.0
        %845 = vmatpush2.msra.mxu0 0.0
        %846 = vmatprep.subr.mxu0 0.0
        %847 = vmatpush2.msra.mxu0 0.0
        %848 = vmatprep.subr.mxu0 0.0
        %849 = vmatpush2.msra.mxu0 0.0
        %850 = vmatprep.subr.mxu0 0.0
        %851 = vmatpush2.msra.mxu0 0.0
        %852 = vmatprep.subr.mxu0 0.0
        %853 = vmatpush2.msra.mxu0 0.0
        %854 = vmatprep.subr.mxu0 0.0
        %855 = vmatpush2.msra.mxu0 0.0
        %856 = vmatprep.subr.mxu0 0.0
        %857 = vmatpush2.msra.mxu0 0.0
        %858 = vmatprep.subr.mxu0 0.0
        %859 = vmatpush2.msra.mxu0 0.0
        %860 = vmatprep.subr.mxu0 0.0
        %861 = vmatpush2.msra.mxu0 0.0
        %862 = vmatprep.subr.mxu0 0.0
        %863 = vmatpush2.msra.mxu0 0.0
        %864 = vmatprep.subr.mxu0 0.0
        %865 = vmatpush2.msra.mxu0 0.0
        %866 = vmatprep.subr.mxu0 0.0
        %867 = vmatpush2.msra.mxu0 0.0
        %868 = vmatprep.mubr.f32.mxu0 0.0
        %869 = vmatmul.mubr.f32.gmra.mxu0 %v802
        %v870 = vpop.f32.mrf.mxu0
        %v871 = vadd.f32 0.0, %v870
        %v872 = vpop.f32.mrf.mxu0
        %873 = vdwg.mxu0
        %v874 = vsel %vm286, %v871, 0.0
        %875 = vadd.xlane.f32.xlu0 %v874
        %v876 = vpop.xlane.xlu0 %875
        %v877 = vmul.f32 %v876, %v465
        %v878 = vsub.f32 %v871, %v877
        %v879 = vmul.f32 %v878, %v878
        %v880 = vsel %vm286, %v879, 0.0
        %881 = vadd.xlane.f32.xlu0 %v880
        %v882 = vpop.xlane.xlu0 %881
        %v883 = vmul.f32 %v882, %v465
        %v884 = vadd.f32 %v883, 1e-05
        %v885 = vrsqrt.pop %v884
        %v886 = vmul.f32 %v878, %v885
        %v887 = vlaneseq
        %v888 = vshrl.u32 %v887, 7
        %v889 = vsub.s32 0, %v888
        %v890 = vrot.slane %v362, %v889
        %v891 = vmul.f32 %v886, %v890
        %v892 = vlaneseq
        %v893 = vshrl.u32 %v892, 7
        %v894 = vsub.s32 1, %v893
        %v895 = vrot.slane %v362, %v894
        %v896 = vadd.f32 %v891, %v895
        %v898 = vlaneseq
        %v899 = vshrl.u32 %v898, 7
        %v900 = vsub.s32 0, %v899
        %v901 = vrot.slane %v382, %v900
        %v904 = vsel %vm286, %v896, 0
        %906 = vmatprep.subr.mxu0 0.0
        %907 = vmatpush1.msra.mxu0 0.0
        %908 = vmatprep.subr.mxu0 0.0
        %909 = vmatpush1.msra.mxu0 0.0
        %910 = vmatprep.subr.mxu0 0.0
        %911 = vmatpush1.msra.mxu0 0.0
        %912 = vmatprep.subr.mxu0 0.0
        %913 = vmatpush1.msra.mxu0 0.0
        %914 = vmatprep.subr.mxu0 0.0
        %915 = vmatpush1.msra.mxu0 0.0
        %916 = vmatprep.subr.mxu0 0.0
        %917 = vmatpush1.msra.mxu0 0.0
        %918 = vmatprep.subr.mxu0 0.0
        %919 = vmatpush1.msra.mxu0 0.0
        %920 = vmatprep.subr.mxu0 0.0
        %921 = vmatpush1.msra.mxu0 0.0
        %922 = vmatprep.subr.mxu0 0.0
        %923 = vmatpush1.msra.mxu0 0.0
        %924 = vmatprep.subr.mxu0 0.0
        %925 = vmatpush1.msra.mxu0 0.0
        %926 = vmatprep.subr.mxu0 0.0
        %927 = vmatpush1.msra.mxu0 0.0
        %928 = vmatprep.subr.mxu0 0.0
        %929 = vmatpush1.msra.mxu0 0.0
        %930 = vmatprep.subr.mxu0 0.0
        %931 = vmatpush1.msra.mxu0 %v375
        %932 = vmatprep.subr.mxu0 0.0
        %933 = vmatpush1.msra.mxu0 %v374
        %934 = vmatprep.subr.mxu0 0.0
        %935 = vmatpush1.msra.mxu0 %v373
        %936 = vmatprep.subr.mxu0 0.0
        %937 = vmatpush1.msra.mxu0 %v372
        %938 = vmatprep.subr.mxu0 0.0
        %939 = vmatpush2.msra.mxu0 0.0
        %940 = vmatprep.subr.mxu0 0.0
        %941 = vmatpush2.msra.mxu0 0.0
        %942 = vmatprep.subr.mxu0 0.0
        %943 = vmatpush2.msra.mxu0 0.0
        %944 = vmatprep.subr.mxu0 0.0
        %945 = vmatpush2.msra.mxu0 0.0
        %946 = vmatprep.subr.mxu0 0.0
        %947 = vmatpush2.msra.mxu0 0.0
        %948 = vmatprep.subr.mxu0 0.0
        %949 = vmatpush2.msra.mxu0 0.0
        %950 = vmatprep.subr.mxu0 0.0
        %951 = vmatpush2.msra.mxu0 0.0
        %952 = vmatprep.subr.mxu0 0.0
        %953 = vmatpush2.msra.mxu0 0.0
        %954 = vmatprep.subr.mxu0 0.0
        %955 = vmatpush2.msra.mxu0 0.0
        %956 = vmatprep.subr.mxu0 0.0
        %957 = vmatpush2.msra.mxu0 0.0
        %958 = vmatprep.subr.mxu0 0.0
        %959 = vmatpush2.msra.mxu0 0.0
        %960 = vmatprep.subr.mxu0 0.0
        %961 = vmatpush2.msra.mxu0 0.0
        %962 = vmatprep.subr.mxu0 0.0
        %963 = vmatpush2.msra.mxu0 0.0
        %964 = vmatprep.subr.mxu0 0.0
        %965 = vmatpush2.msra.mxu0 0.0
        %966 = vmatprep.subr.mxu0 0.0
        %967 = vmatpush2.msra.mxu0 0.0
        %968 = vmatprep.subr.mxu0 0.0
        %969 = vmatpush2.msra.mxu0 0.0
        %970 = vmatprep.mubr.f32.mxu0 0.0
        %971 = vmatmul.mubr.f32.gmra.mxu0 %v904
        %v972 = vpop.f32.mrf.mxu0
        %v973 = vadd.f32 %v901, %v972
        %v974 = vpop.f32.mrf.mxu0
        %975 = vdwg.mxu0
        %v976 = vmax.f32 %v973, 0.0
        %978 = vrot.lane.b32.xlu0 %v976, 120
        %v979 = vpop.permute.xlu0 %978
        %v981 = vmul.f32 %v976, %v979
        %v982 = vsel %vm388, %v981, 0.0
        %983 = vadd.xlane.f32.xlu0 %v982
        %v984 = vpop.xlane.xlu0 %983
        %v985 = vmul.f32 %v984, %v574
        %v986 = vsub.f32 %v981, %v985
        %v987 = vmul.f32 %v986, %v986
        %v988 = vsel %vm388, %v987, 0.0
        %989 = vadd.xlane.f32.xlu0 %v988
        %v990 = vpop.xlane.xlu0 %989
        %v991 = vmul.f32 %v990, %v574
        %v992 = vadd.f32 %v991, 1e-05
        %v993 = vrsqrt.pop %v992
        %v994 = vmul.f32 %v986, %v993
        %v995 = vlaneseq
        %v996 = vshrl.u32 %v995, 7
        %v997 = vsub.s32 0, %v996
        %v998 = vrot.slane %v386, %v997
        %v999 = vmul.f32 %v994, %v998
        %v1000 = vlaneseq
        %v1001 = vshrl.u32 %v1000, 7
        %v1002 = vsub.s32 1, %v1001
        %v1003 = vrot.slane %v386, %v1002
        %v1004 = vadd.f32 %v999, %v1003
        %1005 = vrot.lane.b32.xlu0 %v357, 104
        %v1006 = vpop.permute.xlu0 %1005
        %v1007 = vsel %vm388, %v1006, 0
        %1009 = vmatprep.subr.mxu0 0.0
        %1010 = vmatpush1.msra.mxu0 0.0
        %1011 = vmatprep.subr.mxu0 0.0
        %1012 = vmatpush1.msra.mxu0 0.0
        %1013 = vmatprep.subr.mxu0 0.0
        %1014 = vmatpush1.msra.mxu0 0.0
        %1015 = vmatprep.subr.mxu0 0.0
        %1016 = vmatpush1.msra.mxu0 0.0
        %1017 = vmatprep.subr.mxu0 0.0
        %1018 = vmatpush1.msra.mxu0 0.0
        %1019 = vmatprep.subr.mxu0 0.0
        %1020 = vmatpush1.msra.mxu0 0.0
        %1021 = vmatprep.subr.mxu0 0.0
        %1022 = vmatpush1.msra.mxu0 0.0
        %1023 = vmatprep.subr.mxu0 0.0
        %1024 = vmatpush1.msra.mxu0 0.0
        %1025 = vmatprep.subr.mxu0 0.0
        %1026 = vmatpush1.msra.mxu0 0.0
        %1027 = vmatprep.subr.mxu0 0.0
        %1028 = vmatpush1.msra.mxu0 0.0
        %1029 = vmatprep.subr.mxu0 0.0
        %1030 = vmatpush1.msra.mxu0 0.0
        %1031 = vmatprep.subr.mxu0 0.0
        %1032 = vmatpush1.msra.mxu0 0.0
        %1033 = vmatprep.subr.mxu0 0.0
        %1034 = vmatpush1.msra.mxu0 0.0
        %1035 = vmatprep.subr.mxu0 0.0
        %1036 = vmatpush1.msra.mxu0 0.0
        %1037 = vmatprep.subr.mxu0 0.0
        %1038 = vmatpush1.msra.mxu0 0.0
        %1039 = vmatprep.subr.mxu0 0.0
        %1040 = vmatpush1.msra.mxu0 %v274
        %1041 = vmatprep.subr.mxu0 0.0
        %1042 = vmatpush2.msra.mxu0 0.0
        %1043 = vmatprep.subr.mxu0 0.0
        %1044 = vmatpush2.msra.mxu0 0.0
        %1045 = vmatprep.subr.mxu0 0.0
        %1046 = vmatpush2.msra.mxu0 0.0
        %1047 = vmatprep.subr.mxu0 0.0
        %1048 = vmatpush2.msra.mxu0 0.0
        %1049 = vmatprep.subr.mxu0 0.0
        %1050 = vmatpush2.msra.mxu0 0.0
        %1051 = vmatprep.subr.mxu0 0.0
        %1052 = vmatpush2.msra.mxu0 0.0
        %1053 = vmatprep.subr.mxu0 0.0
        %1054 = vmatpush2.msra.mxu0 0.0
        %1055 = vmatprep.subr.mxu0 0.0
        %1056 = vmatpush2.msra.mxu0 0.0
        %1057 = vmatprep.subr.mxu0 0.0
        %1058 = vmatpush2.msra.mxu0 0.0
        %1059 = vmatprep.subr.mxu0 0.0
        %1060 = vmatpush2.msra.mxu0 0.0
        %1061 = vmatprep.subr.mxu0 0.0
        %1062 = vmatpush2.msra.mxu0 0.0
        %1063 = vmatprep.subr.mxu0 0.0
        %1064 = vmatpush2.msra.mxu0 0.0
        %1065 = vmatprep.subr.mxu0 0.0
        %1066 = vmatpush2.msra.mxu0 0.0
        %1067 = vmatprep.subr.mxu0 0.0
        %1068 = vmatpush2.msra.mxu0 0.0
        %1069 = vmatprep.subr.mxu0 0.0
        %1070 = vmatpush2.msra.mxu0 0.0
        %1071 = vmatprep.subr.mxu0 0.0
        %1072 = vmatpush2.msra.mxu0 0.0
        %1073 = vmatprep.mubr.f32.mxu0 0.0
        %1074 = vmatmul.mubr.f32.gmra.mxu0 %v1007
        %v1075 = vpop.f32.mrf.mxu0
        %v1076 = vadd.f32 0.0, %v1075
        %v1077 = vpop.f32.mrf.mxu0
        %1078 = vdwg.mxu0
        %v1079 = vsel %vm286, %v1076, 0.0
        %1080 = vadd.xlane.f32.xlu0 %v1079
        %v1081 = vpop.xlane.xlu0 %1080
        %v1082 = vmul.f32 %v1081, %v465
        %v1083 = vsub.f32 %v1076, %v1082
        %v1084 = vmul.f32 %v1083, %v1083
        %v1085 = vsel %vm286, %v1084, 0.0
        %1086 = vadd.xlane.f32.xlu0 %v1085
        %v1087 = vpop.xlane.xlu0 %1086
        %v1088 = vmul.f32 %v1087, %v465
        %v1089 = vadd.f32 %v1088, 1e-05
        %v1090 = vrsqrt.pop %v1089
        %v1091 = vmul.f32 %v1083, %v1090
        %v1092 = vlaneseq
        %v1093 = vshrl.u32 %v1092, 7
        %v1094 = vsub.s32 0, %v1093
        %v1095 = vrot.slane %v363, %v1094
        %v1096 = vmul.f32 %v1091, %v1095
        %v1097 = vlaneseq
        %v1098 = vshrl.u32 %v1097, 7
        %v1099 = vsub.s32 1, %v1098
        %v1100 = vrot.slane %v363, %v1099
        %v1101 = vadd.f32 %v1096, %v1100
        %v1103 = vlaneseq
        %v1104 = vshrl.u32 %v1103, 7
        %v1105 = vsub.s32 0, %v1104
        %v1106 = vrot.slane %v383, %v1105
        %v1109 = vsel %vm286, %v1101, 0
        %1111 = vmatprep.subr.mxu0 0.0
        %1112 = vmatpush1.msra.mxu0 0.0
        %1113 = vmatprep.subr.mxu0 0.0
        %1114 = vmatpush1.msra.mxu0 0.0
        %1115 = vmatprep.subr.mxu0 0.0
        %1116 = vmatpush1.msra.mxu0 0.0
        %1117 = vmatprep.subr.mxu0 0.0
        %1118 = vmatpush1.msra.mxu0 0.0
        %1119 = vmatprep.subr.mxu0 0.0
        %1120 = vmatpush1.msra.mxu0 0.0
        %1121 = vmatprep.subr.mxu0 0.0
        %1122 = vmatpush1.msra.mxu0 0.0
        %1123 = vmatprep.subr.mxu0 0.0
        %1124 = vmatpush1.msra.mxu0 0.0
        %1125 = vmatprep.subr.mxu0 0.0
        %1126 = vmatpush1.msra.mxu0 0.0
        %1127 = vmatprep.subr.mxu0 0.0
        %1128 = vmatpush1.msra.mxu0 0.0
        %1129 = vmatprep.subr.mxu0 0.0
        %1130 = vmatpush1.msra.mxu0 0.0
        %1131 = vmatprep.subr.mxu0 0.0
        %1132 = vmatpush1.msra.mxu0 0.0
        %1133 = vmatprep.subr.mxu0 0.0
        %1134 = vmatpush1.msra.mxu0 0.0
        %1135 = vmatprep.subr.mxu0 0.0
        %1136 = vmatpush1.msra.mxu0 %v379
        %1137 = vmatprep.subr.mxu0 0.0
        %1138 = vmatpush1.msra.mxu0 %v378
        %1139 = vmatprep.subr.mxu0 0.0
        %1140 = vmatpush1.msra.mxu0 %v377
        %1141 = vmatprep.subr.mxu0 0.0
        %1142 = vmatpush1.msra.mxu0 %v376
        %1143 = vmatprep.subr.mxu0 0.0
        %1144 = vmatpush2.msra.mxu0 0.0
        %1145 = vmatprep.subr.mxu0 0.0
        %1146 = vmatpush2.msra.mxu0 0.0
        %1147 = vmatprep.subr.mxu0 0.0
        %1148 = vmatpush2.msra.mxu0 0.0
        %1149 = vmatprep.subr.mxu0 0.0
        %1150 = vmatpush2.msra.mxu0 0.0
        %1151 = vmatprep.subr.mxu0 0.0
        %1152 = vmatpush2.msra.mxu0 0.0
        %1153 = vmatprep.subr.mxu0 0.0
        %1154 = vmatpush2.msra.mxu0 0.0
        %1155 = vmatprep.subr.mxu0 0.0
        %1156 = vmatpush2.msra.mxu0 0.0
        %1157 = vmatprep.subr.mxu0 0.0
        %1158 = vmatpush2.msra.mxu0 0.0
        %1159 = vmatprep.subr.mxu0 0.0
        %1160 = vmatpush2.msra.mxu0 0.0
        %1161 = vmatprep.subr.mxu0 0.0
        %1162 = vmatpush2.msra.mxu0 0.0
        %1163 = vmatprep.subr.mxu0 0.0
        %1164 = vmatpush2.msra.mxu0 0.0
        %1165 = vmatprep.subr.mxu0 0.0
        %1166 = vmatpush2.msra.mxu0 0.0
        %1167 = vmatprep.subr.mxu0 0.0
        %1168 = vmatpush2.msra.mxu0 0.0
        %1169 = vmatprep.subr.mxu0 0.0
        %1170 = vmatpush2.msra.mxu0 0.0
        %1171 = vmatprep.subr.mxu0 0.0
        %1172 = vmatpush2.msra.mxu0 0.0
        %1173 = vmatprep.subr.mxu0 0.0
        %1174 = vmatpush2.msra.mxu0 0.0
        %1175 = vmatprep.mubr.f32.mxu0 0.0
        %1176 = vmatmul.mubr.f32.gmra.mxu0 %v1109
        %v1177 = vpop.f32.mrf.mxu0
        %v1178 = vadd.f32 %v1106, %v1177
        %v1179 = vpop.f32.mrf.mxu0
        %1180 = vdwg.mxu0
        %v1181 = vmax.f32 %v1178, 0.0
        %1183 = vrot.lane.b32.xlu0 %v1181, 120
        %v1184 = vpop.permute.xlu0 %1183
        %v1186 = vmul.f32 %v1181, %v1184
        %v1187 = vsel %vm388, %v1186, 0.0
        %1188 = vadd.xlane.f32.xlu0 %v1187
        %v1189 = vpop.xlane.xlu0 %1188
        %v1190 = vmul.f32 %v1189, %v574
        %v1191 = vsub.f32 %v1186, %v1190
        %v1192 = vmul.f32 %v1191, %v1191
        %v1193 = vsel %vm388, %v1192, 0.0
        %1194 = vadd.xlane.f32.xlu0 %v1193
        %v1195 = vpop.xlane.xlu0 %1194
        %v1196 = vmul.f32 %v1195, %v574
        %v1197 = vadd.f32 %v1196, 1e-05
        %v1198 = vrsqrt.pop %v1197
        %v1199 = vmul.f32 %v1191, %v1198
        %v1200 = vlaneseq
        %v1201 = vshrl.u32 %v1200, 7
        %v1202 = vsub.s32 0, %v1201
        %v1203 = vrot.slane %v387, %v1202
        %v1204 = vmul.f32 %v1199, %v1203
        %v1205 = vlaneseq
        %v1206 = vshrl.u32 %v1205, 7
        %v1207 = vsub.s32 1, %v1206
        %v1208 = vrot.slane %v387, %v1207
        %v1209 = vadd.f32 %v1204, %v1208
        %1211 = vrot.lane.b32.xlu0 %v799, 8
        %v1212 = vpop.permute.xlu0 %1211
        %1215 = vrot.lane.b32.xlu0 %v1004, 16
        %v1216 = vpop.permute.xlu0 %1215
        %1219 = vrot.lane.b32.xlu0 %v1209, 24
        %v1220 = vpop.permute.xlu0 %1219
        %v1222 = vsel %vm388, %v594, %v1212
        %vm1223 = vcmask 130048
        %v1224 = vsel %vm1223, %v1222, %v1216
        %vm1225 = vcmask 195584
        %v1226 = vsel %vm1225, %v1224, %v1220
        %s1227 = scalar_lea.vmem %s1, 32
        %v1228 = vld [vmem:[%s1227] sm:$0xff]
        %v1229 = vld [vmem:[%s1227 + $0x8] sm:$0xff]
        %v1230 = vld [vmem:[%s1227 + $0x10] sm:$0xff]
        %v1231 = vld [vmem:[%s1227 + $0x18] sm:$0xff]
        %s1232 = scalar_lea.vmem %s2, 1
        %v1233 = vld [vmem:[%s1232] sm:$0x1]
        %v1235 = vlaneseq
        %v1236 = vshrl.u32 %v1235, 7
        %v1237 = vsub.s32 0, %v1236
        %v1238 = vrot.slane %v1233, %v1237
        %v1241 = vsel %vm286, %v1226, 0
        %1243 = vmatprep.subr.mxu0 0.0
        %1244 = vmatpush1.msra.mxu0 0.0
        %1245 = vmatprep.subr.mxu0 0.0
        %1246 = vmatpush1.msra.mxu0 0.0
        %1247 = vmatprep.subr.mxu0 0.0
        %1248 = vmatpush1.msra.mxu0 0.0
        %1249 = vmatprep.subr.mxu0 0.0
        %1250 = vmatpush1.msra.mxu0 0.0
        %1251 = vmatprep.subr.mxu0 0.0
        %1252 = vmatpush1.msra.mxu0 0.0
        %1253 = vmatprep.subr.mxu0 0.0
        %1254 = vmatpush1.msra.mxu0 0.0
        %1255 = vmatprep.subr.mxu0 0.0
        %1256 = vmatpush1.msra.mxu0 0.0
        %1257 = vmatprep.subr.mxu0 0.0
        %1258 = vmatpush1.msra.mxu0 0.0
        %1259 = vmatprep.subr.mxu0 0.0
        %1260 = vmatpush1.msra.mxu0 0.0
        %1261 = vmatprep.subr.mxu0 0.0
        %1262 = vmatpush1.msra.mxu0 0.0
        %1263 = vmatprep.subr.mxu0 0.0
        %1264 = vmatpush1.msra.mxu0 0.0
        %1265 = vmatprep.subr.mxu0 0.0
        %1266 = vmatpush1.msra.mxu0 0.0
        %1267 = vmatprep.subr.mxu0 0.0
        %1268 = vmatpush1.msra.mxu0 %v1231
        %1269 = vmatprep.subr.mxu0 0.0
        %1270 = vmatpush1.msra.mxu0 %v1230
        %1271 = vmatprep.subr.mxu0 0.0
        %1272 = vmatpush1.msra.mxu0 %v1229
        %1273 = vmatprep.subr.mxu0 0.0
        %1274 = vmatpush1.msra.mxu0 %v1228
        %1275 = vmatprep.subr.mxu0 0.0
        %1276 = vmatpush2.msra.mxu0 0.0
        %1277 = vmatprep.subr.mxu0 0.0
        %1278 = vmatpush2.msra.mxu0 0.0
        %1279 = vmatprep.subr.mxu0 0.0
        %1280 = vmatpush2.msra.mxu0 0.0
        %1281 = vmatprep.subr.mxu0 0.0
        %1282 = vmatpush2.msra.mxu0 0.0
        %1283 = vmatprep.subr.mxu0 0.0
        %1284 = vmatpush2.msra.mxu0 0.0
        %1285 = vmatprep.subr.mxu0 0.0
        %1286 = vmatpush2.msra.mxu0 0.0
        %1287 = vmatprep.subr.mxu0 0.0
        %1288 = vmatpush2.msra.mxu0 0.0
        %1289 = vmatprep.subr.mxu0 0.0
        %1290 = vmatpush2.msra.mxu0 0.0
        %1291 = vmatprep.subr.mxu0 0.0
        %1292 = vmatpush2.msra.mxu0 0.0
        %1293 = vmatprep.subr.mxu0 0.0
        %1294 = vmatpush2.msra.mxu0 0.0
        %1295 = vmatprep.subr.mxu0 0.0
        %1296 = vmatpush2.msra.mxu0 0.0
        %1297 = vmatprep.subr.mxu0 0.0
        %1298 = vmatpush2.msra.mxu0 0.0
        %1299 = vmatprep.subr.mxu0 0.0
        %1300 = vmatpush2.msra.mxu0 0.0
        %1301 = vmatprep.subr.mxu0 0.0
        %1302 = vmatpush2.msra.mxu0 0.0
        %1303 = vmatprep.subr.mxu0 0.0
        %1304 = vmatpush2.msra.mxu0 0.0
        %1305 = vmatprep.subr.mxu0 0.0
        %1306 = vmatpush2.msra.mxu0 0.0
        %1307 = vmatprep.mubr.f32.mxu0 0.0
        %1308 = vmatmul.mubr.f32.gmra.mxu0 %v1241
        %v1309 = vpop.f32.mrf.mxu0
        %v1310 = vadd.f32 %v1238, %v1309
        %v1311 = vpop.f32.mrf.mxu0
        %1312 = vdwg.mxu0
        %s1313 = scalar_lea.vmem %s3, 8
        %v1314 = vld [vmem:[%s1313] sm:$0x3]
        %v1315 = vld [vmem:[%s1313 + $0x2] sm:$0x3]
        %v1316 = vld [vmem:[%s1313 + $0x4] sm:$0x3]
        %v1317 = vld [vmem:[%s1313 + $0x6] sm:$0x3]
        %s1318 = scalar_lea.vmem %s4, 128
        %v1319 = vld [vmem:[%s1318] sm:$0xff]
        %v1320 = vld [vmem:[%s1318 + $0x8] sm:$0xff]
        %v1321 = vld [vmem:[%s1318 + $0x10] sm:$0xff]
        %v1322 = vld [vmem:[%s1318 + $0x18] sm:$0xff]
        %v1323 = vld [vmem:[%s1318 + $0x20] sm:$0xff]
        %v1324 = vld [vmem:[%s1318 + $0x28] sm:$0xff]
        %v1325 = vld [vmem:[%s1318 + $0x30] sm:$0xff]
        %v1326 = vld [vmem:[%s1318 + $0x38] sm:$0xff]
        %v1327 = vld [vmem:[%s1318 + $0x40] sm:$0xff]
        %v1328 = vld [vmem:[%s1318 + $0x48] sm:$0xff]
        %v1329 = vld [vmem:[%s1318 + $0x50] sm:$0xff]
        %v1330 = vld [vmem:[%s1318 + $0x58] sm:$0xff]
        %v1331 = vld [vmem:[%s1318 + $0x60] sm:$0xff]
        %v1332 = vld [vmem:[%s1318 + $0x68] sm:$0xff]
        %v1333 = vld [vmem:[%s1318 + $0x70] sm:$0xff]
        %v1334 = vld [vmem:[%s1318 + $0x78] sm:$0xff]
        %s1335 = scalar_lea.vmem %s5, 4
        %v1336 = vld [vmem:[%s1335] sm:$0x1]
        %v1337 = vld [vmem:[%s1335 + $0x1] sm:$0x1]
        %v1338 = vld [vmem:[%s1335 + $0x2] sm:$0x1]
        %v1339 = vld [vmem:[%s1335 + $0x3] sm:$0x1]
        %s1340 = scalar_lea.vmem %s6, 8
        %v1341 = vld [vmem:[%s1340] sm:$0x3]
        %v1342 = vld [vmem:[%s1340 + $0x2] sm:$0x3]
        %v1343 = vld [vmem:[%s1340 + $0x4] sm:$0x3]
        %v1344 = vld [vmem:[%s1340 + $0x6] sm:$0x3]
        %v1346 = vsel %vm388, %v1310, 0
        %1348 = vmatprep.subr.mxu0 0.0
        %1349 = vmatpush1.msra.mxu0 0.0
        %1350 = vmatprep.subr.mxu0 0.0
        %1351 = vmatpush1.msra.mxu0 0.0
        %1352 = vmatprep.subr.mxu0 0.0
        %1353 = vmatpush1.msra.mxu0 0.0
        %1354 = vmatprep.subr.mxu0 0.0
        %1355 = vmatpush1.msra.mxu0 0.0
        %1356 = vmatprep.subr.mxu0 0.0
        %1357 = vmatpush1.msra.mxu0 0.0
        %1358 = vmatprep.subr.mxu0 0.0
        %1359 = vmatpush1.msra.mxu0 0.0
        %1360 = vmatprep.subr.mxu0 0.0
        %1361 = vmatpush1.msra.mxu0 0.0
        %1362 = vmatprep.subr.mxu0 0.0
        %1363 = vmatpush1.msra.mxu0 0.0
        %1364 = vmatprep.subr.mxu0 0.0
        %1365 = vmatpush1.msra.mxu0 0.0
        %1366 = vmatprep.subr.mxu0 0.0
        %1367 = vmatpush1.msra.mxu0 0.0
        %1368 = vmatprep.subr.mxu0 0.0
        %1369 = vmatpush1.msra.mxu0 0.0
        %1370 = vmatprep.subr.mxu0 0.0
        %1371 = vmatpush1.msra.mxu0 0.0
        %1372 = vmatprep.subr.mxu0 0.0
        %1373 = vmatpush1.msra.mxu0 0.0
        %1374 = vmatprep.subr.mxu0 0.0
        %1375 = vmatpush1.msra.mxu0 0.0
        %1376 = vmatprep.subr.mxu0 0.0
        %1377 = vmatpush1.msra.mxu0 0.0
        %1378 = vmatprep.subr.mxu0 0.0
        %1379 = vmatpush1.msra.mxu0 %v1226
        %1380 = vmatprep.subr.mxu0 0.0
        %1381 = vmatpush2.msra.mxu0 0.0
        %1382 = vmatprep.subr.mxu0 0.0
        %1383 = vmatpush2.msra.mxu0 0.0
        %1384 = vmatprep.subr.mxu0 0.0
        %1385 = vmatpush2.msra.mxu0 0.0
        %1386 = vmatprep.subr.mxu0 0.0
        %1387 = vmatpush2.msra.mxu0 0.0
        %1388 = vmatprep.subr.mxu0 0.0
        %1389 = vmatpush2.msra.mxu0 0.0
        %1390 = vmatprep.subr.mxu0 0.0
        %1391 = vmatpush2.msra.mxu0 0.0
        %1392 = vmatprep.subr.mxu0 0.0
        %1393 = vmatpush2.msra.mxu0 0.0
        %1394 = vmatprep.subr.mxu0 0.0
        %1395 = vmatpush2.msra.mxu0 0.0
        %1396 = vmatprep.subr.mxu0 0.0
        %1397 = vmatpush2.msra.mxu0 0.0
        %1398 = vmatprep.subr.mxu0 0.0
        %1399 = vmatpush2.msra.mxu0 0.0
        %1400 = vmatprep.subr.mxu0 0.0
        %1401 = vmatpush2.msra.mxu0 0.0
        %1402 = vmatprep.subr.mxu0 0.0
        %1403 = vmatpush2.msra.mxu0 0.0
        %1404 = vmatprep.subr.mxu0 0.0
        %1405 = vmatpush2.msra.mxu0 0.0
        %1406 = vmatprep.subr.mxu0 0.0
        %1407 = vmatpush2.msra.mxu0 0.0
        %1408 = vmatprep.subr.mxu0 0.0
        %1409 = vmatpush2.msra.mxu0 0.0
        %1410 = vmatprep.subr.mxu0 0.0
        %1411 = vmatpush2.msra.mxu0 0.0
        %1412 = vmatprep.mubr.f32.mxu0 0.0
        %1413 = vmatmul.mubr.f32.gmra.mxu0 %v1346
        %v1414 = vpop.f32.mrf.mxu0
        %v1415 = vadd.f32 0.0, %v1414
        %v1416 = vpop.f32.mrf.mxu0
        %1417 = vdwg.mxu0
        %v1418 = vsel %vm286, %v1415, 0.0
        %1419 = vadd.xlane.f32.xlu0 %v1418
        %v1420 = vpop.xlane.xlu0 %1419
        %v1421 = vmul.f32 %v1420, %v465
        %v1422 = vsub.f32 %v1415, %v1421
        %v1423 = vmul.f32 %v1422, %v1422
        %v1424 = vsel %vm286, %v1423, 0.0
        %1425 = vadd.xlane.f32.xlu0 %v1424
        %v1426 = vpop.xlane.xlu0 %1425
        %v1427 = vmul.f32 %v1426, %v465
        %v1428 = vadd.f32 %v1427, 1e-05
        %v1429 = vrsqrt.pop %v1428
        %v1430 = vmul.f32 %v1422, %v1429
        %v1431 = vlaneseq
        %v1432 = vshrl.u32 %v1431, 7
        %v1433 = vsub.s32 0, %v1432
        %v1434 = vrot.slane %v1314, %v1433
        %v1435 = vmul.f32 %v1430, %v1434
        %v1436 = vlaneseq
        %v1437 = vshrl.u32 %v1436, 7
        %v1438 = vsub.s32 1, %v1437
        %v1439 = vrot.slane %v1314, %v1438
        %v1440 = vadd.f32 %v1435, %v1439
        %v1442 = vlaneseq
        %v1443 = vshrl.u32 %v1442, 7
        %v1444 = vsub.s32 0, %v1443
        %v1445 = vrot.slane %v1336, %v1444
        %v1448 = vsel %vm286, %v1440, 0
        %1450 = vmatprep.subr.mxu0 0.0
        %1451 = vmatpush1.msra.mxu0 0.0
        %1452 = vmatprep.subr.mxu0 0.0
        %1453 = vmatpush1.msra.mxu0 0.0
        %1454 = vmatprep.subr.mxu0 0.0
        %1455 = vmatpush1.msra.mxu0 0.0
        %1456 = vmatprep.subr.mxu0 0.0
        %1457 = vmatpush1.msra.mxu0 0.0
        %1458 = vmatprep.subr.mxu0 0.0
        %1459 = vmatpush1.msra.mxu0 0.0
        %1460 = vmatprep.subr.mxu0 0.0
        %1461 = vmatpush1.msra.mxu0 0.0
        %1462 = vmatprep.subr.mxu0 0.0
        %1463 = vmatpush1.msra.mxu0 0.0
        %1464 = vmatprep.subr.mxu0 0.0
        %1465 = vmatpush1.msra.mxu0 0.0
        %1466 = vmatprep.subr.mxu0 0.0
        %1467 = vmatpush1.msra.mxu0 0.0
        %1468 = vmatprep.subr.mxu0 0.0
        %1469 = vmatpush1.msra.mxu0 0.0
        %1470 = vmatprep.subr.mxu0 0.0
        %1471 = vmatpush1.msra.mxu0 0.0
        %1472 = vmatprep.subr.mxu0 0.0
        %1473 = vmatpush1.msra.mxu0 0.0
        %1474 = vmatprep.subr.mxu0 0.0
        %1475 = vmatpush1.msra.mxu0 %v1322
        %1476 = vmatprep.subr.mxu0 0.0
        %1477 = vmatpush1.msra.mxu0 %v1321
        %1478 = vmatprep.subr.mxu0 0.0
        %1479 = vmatpush1.msra.mxu0 %v1320
        %1480 = vmatprep.subr.mxu0 0.0
        %1481 = vmatpush1.msra.mxu0 %v1319
        %1482 = vmatprep.subr.mxu0 0.0
        %1483 = vmatpush2.msra.mxu0 0.0
        %1484 = vmatprep.subr.mxu0 0.0
        %1485 = vmatpush2.msra.mxu0 0.0
        %1486 = vmatprep.subr.mxu0 0.0
        %1487 = vmatpush2.msra.mxu0 0.0
        %1488 = vmatprep.subr.mxu0 0.0
        %1489 = vmatpush2.msra.mxu0 0.0
        %1490 = vmatprep.subr.mxu0 0.0
        %1491 = vmatpush2.msra.mxu0 0.0
        %1492 = vmatprep.subr.mxu0 0.0
        %1493 = vmatpush2.msra.mxu0 0.0
        %1494 = vmatprep.subr.mxu0 0.0
        %1495 = vmatpush2.msra.mxu0 0.0
        %1496 = vmatprep.subr.mxu0 0.0
        %1497 = vmatpush2.msra.mxu0 0.0
        %1498 = vmatprep.subr.mxu0 0.0
        %1499 = vmatpush2.msra.mxu0 0.0
        %1500 = vmatprep.subr.mxu0 0.0
        %1501 = vmatpush2.msra.mxu0 0.0
        %1502 = vmatprep.subr.mxu0 0.0
        %1503 = vmatpush2.msra.mxu0 0.0
        %1504 = vmatprep.subr.mxu0 0.0
        %1505 = vmatpush2.msra.mxu0 0.0
        %1506 = vmatprep.subr.mxu0 0.0
        %1507 = vmatpush2.msra.mxu0 0.0
        %1508 = vmatprep.subr.mxu0 0.0
        %1509 = vmatpush2.msra.mxu0 0.0
        %1510 = vmatprep.subr.mxu0 0.0
        %1511 = vmatpush2.msra.mxu0 0.0
        %1512 = vmatprep.subr.mxu0 0.0
        %1513 = vmatpush2.msra.mxu0 0.0
        %1514 = vmatprep.mubr.f32.mxu0 0.0
        %1515 = vmatmul.mubr.f32.gmra.mxu0 %v1448
        %v1516 = vpop.f32.mrf.mxu0
        %v1517 = vadd.f32 %v1445, %v1516
        %v1518 = vpop.f32.mrf.mxu0
        %1519 = vdwg.mxu0
        %v1520 = vmax.f32 %v1517, 0.0
        %1522 = vrot.lane.b32.xlu0 %v1520, 120
        %v1523 = vpop.permute.xlu0 %1522
        %v1525 = vmul.f32 %v1520, %v1523
        %v1526 = vsel %vm388, %v1525, 0.0
        %1527 = vadd.xlane.f32.xlu0 %v1526
        %v1528 = vpop.xlane.xlu0 %1527
        %v1529 = vmul.f32 %v1528, %v574
        %v1530 = vsub.f32 %v1525, %v1529
        %v1531 = vmul.f32 %v1530, %v1530
        %v1532 = vsel %vm388, %v1531, 0.0
        %1533 = vadd.xlane.f32.xlu0 %v1532
        %v1534 = vpop.xlane.xlu0 %1533
        %v1535 = vmul.f32 %v1534, %v574
        %v1536 = vadd.f32 %v1535, 1e-05
        %v1537 = vrsqrt.pop %v1536
        %v1538 = vmul.f32 %v1530, %v1537
        %v1539 = vlaneseq
        %v1540 = vshrl.u32 %v1539, 7
        %v1541 = vsub.s32 0, %v1540
        %v1542 = vrot.slane %v1341, %v1541
        %v1543 = vmul.f32 %v1538, %v1542
        %v1544 = vlaneseq
        %v1545 = vshrl.u32 %v1544, 7
        %v1546 = vsub.s32 1, %v1545
        %v1547 = vrot.slane %v1341, %v1546
        %v1548 = vadd.f32 %v1543, %v1547
        %1549 = vrot.lane.b32.xlu0 %v1310, 120
        %v1550 = vpop.permute.xlu0 %1549
        %v1551 = vsel %vm388, %v1550, 0
        %1553 = vmatprep.subr.mxu0 0.0
        %1554 = vmatpush1.msra.mxu0 0.0
        %1555 = vmatprep.subr.mxu0 0.0
        %1556 = vmatpush1.msra.mxu0 0.0
        %1557 = vmatprep.subr.mxu0 0.0
        %1558 = vmatpush1.msra.mxu0 0.0
        %1559 = vmatprep.subr.mxu0 0.0
        %1560 = vmatpush1.msra.mxu0 0.0
        %1561 = vmatprep.subr.mxu0 0.0
        %1562 = vmatpush1.msra.mxu0 0.0
        %1563 = vmatprep.subr.mxu0 0.0
        %1564 = vmatpush1.msra.mxu0 0.0
        %1565 = vmatprep.subr.mxu0 0.0
        %1566 = vmatpush1.msra.mxu0 0.0
        %1567 = vmatprep.subr.mxu0 0.0
        %1568 = vmatpush1.msra.mxu0 0.0
        %1569 = vmatprep.subr.mxu0 0.0
        %1570 = vmatpush1.msra.mxu0 0.0
        %1571 = vmatprep.subr.mxu0 0.0
        %1572 = vmatpush1.msra.mxu0 0.0
        %1573 = vmatprep.subr.mxu0 0.0
        %1574 = vmatpush1.msra.mxu0 0.0
        %1575 = vmatprep.subr.mxu0 0.0
        %1576 = vmatpush1.msra.mxu0 0.0
        %1577 = vmatprep.subr.mxu0 0.0
        %1578 = vmatpush1.msra.mxu0 0.0
        %1579 = vmatprep.subr.mxu0 0.0
        %1580 = vmatpush1.msra.mxu0 0.0
        %1581 = vmatprep.subr.mxu0 0.0
        %1582 = vmatpush1.msra.mxu0 0.0
        %1583 = vmatprep.subr.mxu0 0.0
        %1584 = vmatpush1.msra.mxu0 %v1226
        %1585 = vmatprep.subr.mxu0 0.0
        %1586 = vmatpush2.msra.mxu0 0.0
        %1587 = vmatprep.subr.mxu0 0.0
        %1588 = vmatpush2.msra.mxu0 0.0
        %1589 = vmatprep.subr.mxu0 0.0
        %1590 = vmatpush2.msra.mxu0 0.0
        %1591 = vmatprep.subr.mxu0 0.0
        %1592 = vmatpush2.msra.mxu0 0.0
        %1593 = vmatprep.subr.mxu0 0.0
        %1594 = vmatpush2.msra.mxu0 0.0
        %1595 = vmatprep.subr.mxu0 0.0
        %1596 = vmatpush2.msra.mxu0 0.0
        %1597 = vmatprep.subr.mxu0 0.0
        %1598 = vmatpush2.msra.mxu0 0.0
        %1599 = vmatprep.subr.mxu0 0.0
        %1600 = vmatpush2.msra.mxu0 0.0
        %1601 = vmatprep.subr.mxu0 0.0
        %1602 = vmatpush2.msra.mxu0 0.0
        %1603 = vmatprep.subr.mxu0 0.0
        %1604 = vmatpush2.msra.mxu0 0.0
        %1605 = vmatprep.subr.mxu0 0.0
        %1606 = vmatpush2.msra.mxu0 0.0
        %1607 = vmatprep.subr.mxu0 0.0
        %1608 = vmatpush2.msra.mxu0 0.0
        %1609 = vmatprep.subr.mxu0 0.0
        %1610 = vmatpush2.msra.mxu0 0.0
        %1611 = vmatprep.subr.mxu0 0.0
        %1612 = vmatpush2.msra.mxu0 0.0
        %1613 = vmatprep.subr.mxu0 0.0
        %1614 = vmatpush2.msra.mxu0 0.0
        %1615 = vmatprep.subr.mxu0 0.0
        %1616 = vmatpush2.msra.mxu0 0.0
        %1617 = vmatprep.mubr.f32.mxu0 0.0
        %1618 = vmatmul.mubr.f32.gmra.mxu0 %v1551
        %v1619 = vpop.f32.mrf.mxu0
        %v1620 = vadd.f32 0.0, %v1619
        %v1621 = vpop.f32.mrf.mxu0
        %1622 = vdwg.mxu0
        %v1623 = vsel %vm286, %v1620, 0.0
        %1624 = vadd.xlane.f32.xlu0 %v1623
        %v1625 = vpop.xlane.xlu0 %1624
        %v1626 = vmul.f32 %v1625, %v465
        %v1627 = vsub.f32 %v1620, %v1626
        %v1628 = vmul.f32 %v1627, %v1627
        %v1629 = vsel %vm286, %v1628, 0.0
        %1630 = vadd.xlane.f32.xlu0 %v1629
        %v1631 = vpop.xlane.xlu0 %1630
        %v1632 = vmul.f32 %v1631, %v465
        %v1633 = vadd.f32 %v1632, 1e-05
        %v1634 = vrsqrt.pop %v1633
        %v1635 = vmul.f32 %v1627, %v1634
        %v1636 = vlaneseq
        %v1637 = vshrl.u32 %v1636, 7
        %v1638 = vsub.s32 0, %v1637
        %v1639 = vrot.slane %v1315, %v1638
        %v1640 = vmul.f32 %v1635, %v1639
        %v1641 = vlaneseq
        %v1642 = vshrl.u32 %v1641, 7
        %v1643 = vsub.s32 1, %v1642
        %v1644 = vrot.slane %v1315, %v1643
        %v1645 = vadd.f32 %v1640, %v1644
        %v1647 = vlaneseq
        %v1648 = vshrl.u32 %v1647, 7
        %v1649 = vsub.s32 0, %v1648
        %v1650 = vrot.slane %v1337, %v1649
        %v1653 = vsel %vm286, %v1645, 0
        %1655 = vmatprep.subr.mxu0 0.0
        %1656 = vmatpush1.msra.mxu0 0.0
        %1657 = vmatprep.subr.mxu0 0.0
        %1658 = vmatpush1.msra.mxu0 0.0
        %1659 = vmatprep.subr.mxu0 0.0
        %1660 = vmatpush1.msra.mxu0 0.0
        %1661 = vmatprep.subr.mxu0 0.0
        %1662 = vmatpush1.msra.mxu0 0.0
        %1663 = vmatprep.subr.mxu0 0.0
        %1664 = vmatpush1.msra.mxu0 0.0
        %1665 = vmatprep.subr.mxu0 0.0
        %1666 = vmatpush1.msra.mxu0 0.0
        %1667 = vmatprep.subr.mxu0 0.0
        %1668 = vmatpush1.msra.mxu0 0.0
        %1669 = vmatprep.subr.mxu0 0.0
        %1670 = vmatpush1.msra.mxu0 0.0
        %1671 = vmatprep.subr.mxu0 0.0
        %1672 = vmatpush1.msra.mxu0 0.0
        %1673 = vmatprep.subr.mxu0 0.0
        %1674 = vmatpush1.msra.mxu0 0.0
        %1675 = vmatprep.subr.mxu0 0.0
        %1676 = vmatpush1.msra.mxu0 0.0
        %1677 = vmatprep.subr.mxu0 0.0
        %1678 = vmatpush1.msra.mxu0 0.0
        %1679 = vmatprep.subr.mxu0 0.0
        %1680 = vmatpush1.msra.mxu0 %v1326
        %1681 = vmatprep.subr.mxu0 0.0
        %1682 = vmatpush1.msra.mxu0 %v1325
        %1683 = vmatprep.subr.mxu0 0.0
        %1684 = vmatpush1.msra.mxu0 %v1324
        %1685 = vmatprep.subr.mxu0 0.0
        %1686 = vmatpush1.msra.mxu0 %v1323
        %1687 = vmatprep.subr.mxu0 0.0
        %1688 = vmatpush2.msra.mxu0 0.0
        %1689 = vmatprep.subr.mxu0 0.0
        %1690 = vmatpush2.msra.mxu0 0.0
        %1691 = vmatprep.subr.mxu0 0.0
        %1692 = vmatpush2.msra.mxu0 0.0
        %1693 = vmatprep.subr.mxu0 0.0
        %1694 = vmatpush2.msra.mxu0 0.0
        %1695 = vmatprep.subr.mxu0 0.0
        %1696 = vmatpush2.msra.mxu0 0.0
        %1697 = vmatprep.subr.mxu0 0.0
        %1698 = vmatpush2.msra.mxu0 0.0
        %1699 = vmatprep.subr.mxu0 0.0
        %1700 = vmatpush2.msra.mxu0 0.0
        %1701 = vmatprep.subr.mxu0 0.0
        %1702 = vmatpush2.msra.mxu0 0.0
        %1703 = vmatprep.subr.mxu0 0.0
        %1704 = vmatpush2.msra.mxu0 0.0
        %1705 = vmatprep.subr.mxu0 0.0
        %1706 = vmatpush2.msra.mxu0 0.0
        %1707 = vmatprep.subr.mxu0 0.0
        %1708 = vmatpush2.msra.mxu0 0.0
        %1709 = vmatprep.subr.mxu0 0.0
        %1710 = vmatpush2.msra.mxu0 0.0
        %1711 = vmatprep.subr.mxu0 0.0
        %1712 = vmatpush2.msra.mxu0 0.0
        %1713 = vmatprep.subr.mxu0 0.0
        %1714 = vmatpush2.msra.mxu0 0.0
        %1715 = vmatprep.subr.mxu0 0.0
        %1716 = vmatpush2.msra.mxu0 0.0
        %1717 = vmatprep.subr.mxu0 0.0
        %1718 = vmatpush2.msra.mxu0 0.0
        %1719 = vmatprep.mubr.f32.mxu0 0.0
        %1720 = vmatmul.mubr.f32.gmra.mxu0 %v1653
        %v1721 = vpop.f32.mrf.mxu0
        %v1722 = vadd.f32 %v1650, %v1721
        %v1723 = vpop.f32.mrf.mxu0
        %1724 = vdwg.mxu0
        %v1725 = vmax.f32 %v1722, 0.0
        %1727 = vrot.lane.b32.xlu0 %v1725, 120
        %v1728 = vpop.permute.xlu0 %1727
        %v1730 = vmul.f32 %v1725, %v1728
        %v1731 = vsel %vm388, %v1730, 0.0
        %1732 = vadd.xlane.f32.xlu0 %v1731
        %v1733 = vpop.xlane.xlu0 %1732
        %v1734 = vmul.f32 %v1733, %v574
        %v1735 = vsub.f32 %v1730, %v1734
        %v1736 = vmul.f32 %v1735, %v1735
        %v1737 = vsel %vm388, %v1736, 0.0
        %1738 = vadd.xlane.f32.xlu0 %v1737
        %v1739 = vpop.xlane.xlu0 %1738
        %v1740 = vmul.f32 %v1739, %v574
        %v1741 = vadd.f32 %v1740, 1e-05
        %v1742 = vrsqrt.pop %v1741
        %v1743 = vmul.f32 %v1735, %v1742
        %v1744 = vlaneseq
        %v1745 = vshrl.u32 %v1744, 7
        %v1746 = vsub.s32 0, %v1745
        %v1747 = vrot.slane %v1342, %v1746
        %v1748 = vmul.f32 %v1743, %v1747
        %v1749 = vlaneseq
        %v1750 = vshrl.u32 %v1749, 7
        %v1751 = vsub.s32 1, %v1750
        %v1752 = vrot.slane %v1342, %v1751
        %v1753 = vadd.f32 %v1748, %v1752
        %1754 = vrot.lane.b32.xlu0 %v1310, 112
        %v1755 = vpop.permute.xlu0 %1754
        %v1756 = vsel %vm388, %v1755, 0
        %1758 = vmatprep.subr.mxu0 0.0
        %1759 = vmatpush1.msra.mxu0 0.0
        %1760 = vmatprep.subr.mxu0 0.0
        %1761 = vmatpush1.msra.mxu0 0.0
        %1762 = vmatprep.subr.mxu0 0.0
        %1763 = vmatpush1.msra.mxu0 0.0
        %1764 = vmatprep.subr.mxu0 0.0
        %1765 = vmatpush1.msra.mxu0 0.0
        %1766 = vmatprep.subr.mxu0 0.0
        %1767 = vmatpush1.msra.mxu0 0.0
        %1768 = vmatprep.subr.mxu0 0.0
        %1769 = vmatpush1.msra.mxu0 0.0
        %1770 = vmatprep.subr.mxu0 0.0
        %1771 = vmatpush1.msra.mxu0 0.0
        %1772 = vmatprep.subr.mxu0 0.0
        %1773 = vmatpush1.msra.mxu0 0.0
        %1774 = vmatprep.subr.mxu0 0.0
        %1775 = vmatpush1.msra.mxu0 0.0
        %1776 = vmatprep.subr.mxu0 0.0
        %1777 = vmatpush1.msra.mxu0 0.0
        %1778 = vmatprep.subr.mxu0 0.0
        %1779 = vmatpush1.msra.mxu0 0.0
        %1780 = vmatprep.subr.mxu0 0.0
        %1781 = vmatpush1.msra.mxu0 0.0
        %1782 = vmatprep.subr.mxu0 0.0
        %1783 = vmatpush1.msra.mxu0 0.0
        %1784 = vmatprep.subr.mxu0 0.0
        %1785 = vmatpush1.msra.mxu0 0.0
        %1786 = vmatprep.subr.mxu0 0.0
        %1787 = vmatpush1.msra.mxu0 0.0
        %1788 = vmatprep.subr.mxu0 0.0
        %1789 = vmatpush1.msra.mxu0 %v1226
        %1790 = vmatprep.subr.mxu0 0.0
        %1791 = vmatpush2.msra.mxu0 0.0
        %1792 = vmatprep.subr.mxu0 0.0
        %1793 = vmatpush2.msra.mxu0 0.0
        %1794 = vmatprep.subr.mxu0 0.0
        %1795 = vmatpush2.msra.mxu0 0.0
        %1796 = vmatprep.subr.mxu0 0.0
        %1797 = vmatpush2.msra.mxu0 0.0
        %1798 = vmatprep.subr.mxu0 0.0
        %1799 = vmatpush2.msra.mxu0 0.0
        %1800 = vmatprep.subr.mxu0 0.0
        %1801 = vmatpush2.msra.mxu0 0.0
        %1802 = vmatprep.subr.mxu0 0.0
        %1803 = vmatpush2.msra.mxu0 0.0
        %1804 = vmatprep.subr.mxu0 0.0
        %1805 = vmatpush2.msra.mxu0 0.0
        %1806 = vmatprep.subr.mxu0 0.0
        %1807 = vmatpush2.msra.mxu0 0.0
        %1808 = vmatprep.subr.mxu0 0.0
        %1809 = vmatpush2.msra.mxu0 0.0
        %1810 = vmatprep.subr.mxu0 0.0
        %1811 = vmatpush2.msra.mxu0 0.0
        %1812 = vmatprep.subr.mxu0 0.0
        %1813 = vmatpush2.msra.mxu0 0.0
        %1814 = vmatprep.subr.mxu0 0.0
        %1815 = vmatpush2.msra.mxu0 0.0
        %1816 = vmatprep.subr.mxu0 0.0
        %1817 = vmatpush2.msra.mxu0 0.0
        %1818 = vmatprep.subr.mxu0 0.0
        %1819 = vmatpush2.msra.mxu0 0.0
        %1820 = vmatprep.subr.mxu0 0.0
        %1821 = vmatpush2.msra.mxu0 0.0
        %1822 = vmatprep.mubr.f32.mxu0 0.0
        %1823 = vmatmul.mubr.f32.gmra.mxu0 %v1756
        %v1824 = vpop.f32.mrf.mxu0
        %v1825 = vadd.f32 0.0, %v1824
        %v1826 = vpop.f32.mrf.mxu0
        %1827 = vdwg.mxu0
        %v1828 = vsel %vm286, %v1825, 0.0
        %1829 = vadd.xlane.f32.xlu0 %v1828
        %v1830 = vpop.xlane.xlu0 %1829
        %v1831 = vmul.f32 %v1830, %v465
        %v1832 = vsub.f32 %v1825, %v1831
        %v1833 = vmul.f32 %v1832, %v1832
        %v1834 = vsel %vm286, %v1833, 0.0
        %1835 = vadd.xlane.f32.xlu0 %v1834
        %v1836 = vpop.xlane.xlu0 %1835
        %v1837 = vmul.f32 %v1836, %v465
        %v1838 = vadd.f32 %v1837, 1e-05
        %v1839 = vrsqrt.pop %v1838
        %v1840 = vmul.f32 %v1832, %v1839
        %v1841 = vlaneseq
        %v1842 = vshrl.u32 %v1841, 7
        %v1843 = vsub.s32 0, %v1842
        %v1844 = vrot.slane %v1316, %v1843
        %v1845 = vmul.f32 %v1840, %v1844
        %v1846 = vlaneseq
        %v1847 = vshrl.u32 %v1846, 7
        %v1848 = vsub.s32 1, %v1847
        %v1849 = vrot.slane %v1316, %v1848
        %v1850 = vadd.f32 %v1845, %v1849
        %v1852 = vlaneseq
        %v1853 = vshrl.u32 %v1852, 7
        %v1854 = vsub.s32 0, %v1853
        %v1855 = vrot.slane %v1338, %v1854
        %v1858 = vsel %vm286, %v1850, 0
        %1860 = vmatprep.subr.mxu0 0.0
        %1861 = vmatpush1.msra.mxu0 0.0
        %1862 = vmatprep.subr.mxu0 0.0
        %1863 = vmatpush1.msra.mxu0 0.0
        %1864 = vmatprep.subr.mxu0 0.0
        %1865 = vmatpush1.msra.mxu0 0.0
        %1866 = vmatprep.subr.mxu0 0.0
        %1867 = vmatpush1.msra.mxu0 0.0
        %1868 = vmatprep.subr.mxu0 0.0
        %1869 = vmatpush1.msra.mxu0 0.0
        %1870 = vmatprep.subr.mxu0 0.0
        %1871 = vmatpush1.msra.mxu0 0.0
        %1872 = vmatprep.subr.mxu0 0.0
        %1873 = vmatpush1.msra.mxu0 0.0
        %1874 = vmatprep.subr.mxu0 0.0
        %1875 = vmatpush1.msra.mxu0 0.0
        %1876 = vmatprep.subr.mxu0 0.0
        %1877 = vmatpush1.msra.mxu0 0.0
        %1878 = vmatprep.subr.mxu0 0.0
        %1879 = vmatpush1.msra.mxu0 0.0
        %1880 = vmatprep.subr.mxu0 0.0
        %1881 = vmatpush1.msra.mxu0 0.0
        %1882 = vmatprep.subr.mxu0 0.0
        %1883 = vmatpush1.msra.mxu0 0.0
        %1884 = vmatprep.subr.mxu0 0.0
        %1885 = vmatpush1.msra.mxu0 %v1330
        %1886 = vmatprep.subr.mxu0 0.0
        %1887 = vmatpush1.msra.mxu0 %v1329
        %1888 = vmatprep.subr.mxu0 0.0
        %1889 = vmatpush1.msra.mxu0 %v1328
        %1890 = vmatprep.subr.mxu0 0.0
        %1891 = vmatpush1.msra.mxu0 %v1327
        %1892 = vmatprep.subr.mxu0 0.0
        %1893 = vmatpush2.msra.mxu0 0.0
        %1894 = vmatprep.subr.mxu0 0.0
        %1895 = vmatpush2.msra.mxu0 0.0
        %1896 = vmatprep.subr.mxu0 0.0
        %1897 = vmatpush2.msra.mxu0 0.0
        %1898 = vmatprep.subr.mxu0 0.0
        %1899 = vmatpush2.msra.mxu0 0.0
        %1900 = vmatprep.subr.mxu0 0.0
        %1901 = vmatpush2.msra.mxu0 0.0
        %1902 = vmatprep.subr.mxu0 0.0
        %1903 = vmatpush2.msra.mxu0 0.0
        %1904 = vmatprep.subr.mxu0 0.0
        %1905 = vmatpush2.msra.mxu0 0.0
        %1906 = vmatprep.subr.mxu0 0.0
        %1907 = vmatpush2.msra.mxu0 0.0
        %1908 = vmatprep.subr.mxu0 0.0
        %1909 = vmatpush2.msra.mxu0 0.0
        %1910 = vmatprep.subr.mxu0 0.0
        %1911 = vmatpush2.msra.mxu0 0.0
        %1912 = vmatprep.subr.mxu0 0.0
        %1913 = vmatpush2.msra.mxu0 0.0
        %1914 = vmatprep.subr.mxu0 0.0
        %1915 = vmatpush2.msra.mxu0 0.0
        %1916 = vmatprep.subr.mxu0 0.0
        %1917 = vmatpush2.msra.mxu0 0.0
        %1918 = vmatprep.subr.mxu0 0.0
        %1919 = vmatpush2.msra.mxu0 0.0
        %1920 = vmatprep.subr.mxu0 0.0
        %1921 = vmatpush2.msra.mxu0 0.0
        %1922 = vmatprep.subr.mxu0 0.0
        %1923 = vmatpush2.msra.mxu0 0.0
        %1924 = vmatprep.mubr.f32.mxu0 0.0
        %1925 = vmatmul.mubr.f32.gmra.mxu0 %v1858
        %v1926 = vpop.f32.mrf.mxu0
        %v1927 = vadd.f32 %v1855, %v1926
        %v1928 = vpop.f32.mrf.mxu0
        %1929 = vdwg.mxu0
        %v1930 = vmax.f32 %v1927, 0.0
        %1932 = vrot.lane.b32.xlu0 %v1930, 120
        %v1933 = vpop.permute.xlu0 %1932
        %v1935 = vmul.f32 %v1930, %v1933
        %v1936 = vsel %vm388, %v1935, 0.0
        %1937 = vadd.xlane.f32.xlu0 %v1936
        %v1938 = vpop.xlane.xlu0 %1937
        %v1939 = vmul.f32 %v1938, %v574
        %v1940 = vsub.f32 %v1935, %v1939
        %v1941 = vmul.f32 %v1940, %v1940
        %v1942 = vsel %vm388, %v1941, 0.0
        %1943 = vadd.xlane.f32.xlu0 %v1942
        %v1944 = vpop.xlane.xlu0 %1943
        %v1945 = vmul.f32 %v1944, %v574
        %v1946 = vadd.f32 %v1945, 1e-05
        %v1947 = vrsqrt.pop %v1946
        %v1948 = vmul.f32 %v1940, %v1947
        %v1949 = vlaneseq
        %v1950 = vshrl.u32 %v1949, 7
        %v1951 = vsub.s32 0, %v1950
        %v1952 = vrot.slane %v1343, %v1951
        %v1953 = vmul.f32 %v1948, %v1952
        %v1954 = vlaneseq
        %v1955 = vshrl.u32 %v1954, 7
        %v1956 = vsub.s32 1, %v1955
        %v1957 = vrot.slane %v1343, %v1956
        %v1958 = vadd.f32 %v1953, %v1957
        %1959 = vrot.lane.b32.xlu0 %v1310, 104
        %v1960 = vpop.permute.xlu0 %1959
        %v1961 = vsel %vm388, %v1960, 0
        %1963 = vmatprep.subr.mxu0 0.0
        %1964 = vmatpush1.msra.mxu0 0.0
        %1965 = vmatprep.subr.mxu0 0.0
        %1966 = vmatpush1.msra.mxu0 0.0
        %1967 = vmatprep.subr.mxu0 0.0
        %1968 = vmatpush1.msra.mxu0 0.0
        %1969 = vmatprep.subr.mxu0 0.0
        %1970 = vmatpush1.msra.mxu0 0.0
        %1971 = vmatprep.subr.mxu0 0.0
        %1972 = vmatpush1.msra.mxu0 0.0
        %1973 = vmatprep.subr.mxu0 0.0
        %1974 = vmatpush1.msra.mxu0 0.0
        %1975 = vmatprep.subr.mxu0 0.0
        %1976 = vmatpush1.msra.mxu0 0.0
        %1977 = vmatprep.subr.mxu0 0.0
        %1978 = vmatpush1.msra.mxu0 0.0
        %1979 = vmatprep.subr.mxu0 0.0
        %1980 = vmatpush1.msra.mxu0 0.0
        %1981 = vmatprep.subr.mxu0 0.0
        %1982 = vmatpush1.msra.mxu0 0.0
        %1983 = vmatprep.subr.mxu0 0.0
        %1984 = vmatpush1.msra.mxu0 0.0
        %1985 = vmatprep.subr.mxu0 0.0
        %1986 = vmatpush1.msra.mxu0 0.0
        %1987 = vmatprep.subr.mxu0 0.0
        %1988 = vmatpush1.msra.mxu0 0.0
        %1989 = vmatprep.subr.mxu0 0.0
        %1990 = vmatpush1.msra.mxu0 0.0
        %1991 = vmatprep.subr.mxu0 0.0
        %1992 = vmatpush1.msra.mxu0 0.0
        %1993 = vmatprep.subr.mxu0 0.0
        %1994 = vmatpush1.msra.mxu0 %v1226
        %1995 = vmatprep.subr.mxu0 0.0
        %1996 = vmatpush2.msra.mxu0 0.0
        %1997 = vmatprep.subr.mxu0 0.0
        %1998 = vmatpush2.msra.mxu0 0.0
        %1999 = vmatprep.subr.mxu0 0.0
        %2000 = vmatpush2.msra.mxu0 0.0
        %2001 = vmatprep.subr.mxu0 0.0
        %2002 = vmatpush2.msra.mxu0 0.0
        %2003 = vmatprep.subr.mxu0 0.0
        %2004 = vmatpush2.msra.mxu0 0.0
        %2005 = vmatprep.subr.mxu0 0.0
        %2006 = vmatpush2.msra.mxu0 0.0
        %2007 = vmatprep.subr.mxu0 0.0
        %2008 = vmatpush2.msra.mxu0 0.0
        %2009 = vmatprep.subr.mxu0 0.0
        %2010 = vmatpush2.msra.mxu0 0.0
        %2011 = vmatprep.subr.mxu0 0.0
        %2012 = vmatpush2.msra.mxu0 0.0
        %2013 = vmatprep.subr.mxu0 0.0
        %2014 = vmatpush2.msra.mxu0 0.0
        %2015 = vmatprep.subr.mxu0 0.0
        %2016 = vmatpush2.msra.mxu0 0.0
        %2017 = vmatprep.subr.mxu0 0.0
        %2018 = vmatpush2.msra.mxu0 0.0
        %2019 = vmatprep.subr.mxu0 0.0
        %2020 = vmatpush2.msra.mxu0 0.0
        %2021 = vmatprep.subr.mxu0 0.0
        %2022 = vmatpush2.msra.mxu0 0.0
        %2023 = vmatprep.subr.mxu0 0.0
        %2024 = vmatpush2.msra.mxu0 0.0
        %2025 = vmatprep.subr.mxu0 0.0
        %2026 = vmatpush2.msra.mxu0 0.0
        %2027 = vmatprep.mubr.f32.mxu0 0.0
        %2028 = vmatmul.mubr.f32.gmra.mxu0 %v1961
        %v2029 = vpop.f32.mrf.mxu0
        %v2030 = vadd.f32 0.0, %v2029
        %v2031 = vpop.f32.mrf.mxu0
        %2032 = vdwg.mxu0
        %v2033 = vsel %vm286, %v2030, 0.0
        %2034 = vadd.xlane.f32.xlu0 %v2033
        %v2035 = vpop.xlane.xlu0 %2034
        %v2036 = vmul.f32 %v2035, %v465
        %v2037 = vsub.f32 %v2030, %v2036
        %v2038 = vmul.f32 %v2037, %v2037
        %v2039 = vsel %vm286, %v2038, 0.0
        %2040 = vadd.xlane.f32.xlu0 %v2039
        %v2041 = vpop.xlane.xlu0 %2040
        %v2042 = vmul.f32 %v2041, %v465
        %v2043 = vadd.f32 %v2042, 1e-05
        %v2044 = vrsqrt.pop %v2043
        %v2045 = vmul.f32 %v2037, %v2044
        %v2046 = vlaneseq
        %v2047 = vshrl.u32 %v2046, 7
        %v2048 = vsub.s32 0, %v2047
        %v2049 = vrot.slane %v1317, %v2048
        %v2050 = vmul.f32 %v2045, %v2049
        %v2051 = vlaneseq
        %v2052 = vshrl.u32 %v2051, 7
        %v2053 = vsub.s32 1, %v2052
        %v2054 = vrot.slane %v1317, %v2053
        %v2055 = vadd.f32 %v2050, %v2054
        %v2057 = vlaneseq
        %v2058 = vshrl.u32 %v2057, 7
        %v2059 = vsub.s32 0, %v2058
        %v2060 = vrot.slane %v1339, %v2059
        %v2063 = vsel %vm286, %v2055, 0
        %2065 = vmatprep.subr.mxu0 0.0
        %2066 = vmatpush1.msra.mxu0 0.0
        %2067 = vmatprep.subr.mxu0 0.0
        %2068 = vmatpush1.msra.mxu0 0.0
        %2069 = vmatprep.subr.mxu0 0.0
        %2070 = vmatpush1.msra.mxu0 0.0
        %2071 = vmatprep.subr.mxu0 0.0
        %2072 = vmatpush1.msra.mxu0 0.0
        %2073 = vmatprep.subr.mxu0 0.0
        %2074 = vmatpush1.msra.mxu0 0.0
        %2075 = vmatprep.subr.mxu0 0.0
        %2076 = vmatpush1.msra.mxu0 0.0
        %2077 = vmatprep.subr.mxu0 0.0
        %2078 = vmatpush1.msra.mxu0 0.0
        %2079 = vmatprep.subr.mxu0 0.0
        %2080 = vmatpush1.msra.mxu0 0.0
        %2081 = vmatprep.subr.mxu0 0.0
        %2082 = vmatpush1.msra.mxu0 0.0
        %2083 = vmatprep.subr.mxu0 0.0
        %2084 = vmatpush1.msra.mxu0 0.0
        %2085 = vmatprep.subr.mxu0 0.0
        %2086 = vmatpush1.msra.mxu0 0.0
        %2087 = vmatprep.subr.mxu0 0.0
        %2088 = vmatpush1.msra.mxu0 0.0
        %2089 = vmatprep.subr.mxu0 0.0
        %2090 = vmatpush1.msra.mxu0 %v1334
        %2091 = vmatprep.subr.mxu0 0.0
        %2092 = vmatpush1.msra.mxu0 %v1333
        %2093 = vmatprep.subr.mxu0 0.0
        %2094 = vmatpush1.msra.mxu0 %v1332
        %2095 = vmatprep.subr.mxu0 0.0
        %2096 = vmatpush1.msra.mxu0 %v1331
        %2097 = vmatprep.subr.mxu0 0.0
        %2098 = vmatpush2.msra.mxu0 0.0
        %2099 = vmatprep.subr.mxu0 0.0
        %2100 = vmatpush2.msra.mxu0 0.0
        %2101 = vmatprep.subr.mxu0 0.0
        %2102 = vmatpush2.msra.mxu0 0.0
        %2103 = vmatprep.subr.mxu0 0.0
        %2104 = vmatpush2.msra.mxu0 0.0
        %2105 = vmatprep.subr.mxu0 0.0
        %2106 = vmatpush2.msra.mxu0 0.0
        %2107 = vmatprep.subr.mxu0 0.0
        %2108 = vmatpush2.msra.mxu0 0.0
        %2109 = vmatprep.subr.mxu0 0.0
        %2110 = vmatpush2.msra.mxu0 0.0
        %2111 = vmatprep.subr.mxu0 0.0
        %2112 = vmatpush2.msra.mxu0 0.0
        %2113 = vmatprep.subr.mxu0 0.0
        %2114 = vmatpush2.msra.mxu0 0.0
        %2115 = vmatprep.subr.mxu0 0.0
        %2116 = vmatpush2.msra.mxu0 0.0
        %2117 = vmatprep.subr.mxu0 0.0
        %2118 = vmatpush2.msra.mxu0 0.0
        %2119 = vmatprep.subr.mxu0 0.0
        %2120 = vmatpush2.msra.mxu0 0.0
        %2121 = vmatprep.subr.mxu0 0.0
        %2122 = vmatpush2.msra.mxu0 0.0
        %2123 = vmatprep.subr.mxu0 0.0
        %2124 = vmatpush2.msra.mxu0 0.0
        %2125 = vmatprep.subr.mxu0 0.0
        %2126 = vmatpush2.msra.mxu0 0.0
        %2127 = vmatprep.subr.mxu0 0.0
        %2128 = vmatpush2.msra.mxu0 0.0
        %2129 = vmatprep.mubr.f32.mxu0 0.0
        %2130 = vmatmul.mubr.f32.gmra.mxu0 %v2063
        %v2131 = vpop.f32.mrf.mxu0
        %v2132 = vadd.f32 %v2060, %v2131
        %v2133 = vpop.f32.mrf.mxu0
        %2134 = vdwg.mxu0
        %v2135 = vmax.f32 %v2132, 0.0
        %2137 = vrot.lane.b32.xlu0 %v2135, 120
        %v2138 = vpop.permute.xlu0 %2137
        %v2140 = vmul.f32 %v2135, %v2138
        %v2141 = vsel %vm388, %v2140, 0.0
        %2142 = vadd.xlane.f32.xlu0 %v2141
        %v2143 = vpop.xlane.xlu0 %2142
        %v2144 = vmul.f32 %v2143, %v574
        %v2145 = vsub.f32 %v2140, %v2144
        %v2146 = vmul.f32 %v2145, %v2145
        %v2147 = vsel %vm388, %v2146, 0.0
        %2148 = vadd.xlane.f32.xlu0 %v2147
        %v2149 = vpop.xlane.xlu0 %2148
        %v2150 = vmul.f32 %v2149, %v574
        %v2151 = vadd.f32 %v2150, 1e-05
        %v2152 = vrsqrt.pop %v2151
        %v2153 = vmul.f32 %v2145, %v2152
        %v2154 = vlaneseq
        %v2155 = vshrl.u32 %v2154, 7
        %v2156 = vsub.s32 0, %v2155
        %v2157 = vrot.slane %v1344, %v2156
        %v2158 = vmul.f32 %v2153, %v2157
        %v2159 = vlaneseq
        %v2160 = vshrl.u32 %v2159, 7
        %v2161 = vsub.s32 1, %v2160
        %v2162 = vrot.slane %v1344, %v2161
        %v2163 = vadd.f32 %v2158, %v2162
        %2165 = vrot.lane.b32.xlu0 %v1753, 8
        %v2166 = vpop.permute.xlu0 %2165
        %2169 = vrot.lane.b32.xlu0 %v1958, 16
        %v2170 = vpop.permute.xlu0 %2169
        %2173 = vrot.lane.b32.xlu0 %v2163, 24
        %v2174 = vpop.permute.xlu0 %2173
        %v2176 = vsel %vm388, %v1548, %v2166
        %v2177 = vsel %vm1223, %v2176, %v2170
        %v2178 = vsel %vm1225, %v2177, %v2174
        %2179 = vst.msk [vmem:[%s269] sm:$0xff] %vm286, %v2178
        %s2180 = sand.u32 %s181, 1
        %s2181 = scalar_lea.sflag [#allocation3], %s2180
        %s2182 = sand.u32 %s181, 1
        %s2183 = smul.addr %s2182, 8
        %s2184 = scalar_lea.vmem [#allocation2], %s2183
        // Predicated region
        $region49: #{encoder_forward.1} parent=47 // pred_check
          %p2185 = pneg %p191
        $region50: #{encoder_forward.1} parent=47 // pred_check_branch
          %2187 = sbr.rel (%p2185) target = $region52
        $region51: #{encoder_forward.1} parent=47 // pred_region
          %s2189 = ssub.s32 128, 128
          %2190 = vsyncadd %s2181, %s2189
          %s2191 = smul.addr %s21, 128
          %s2192 = scalar_lea.hbm %s7, %s2191
          %s2194 = sshll.u32 %s2184, 4
          %s2195 = int_to_ptr.vmem [resolvable:$true] %s2194
          %2197 = dma.vmem_to_hbm [thread:$0]  %s2195, 128, %s2192, %s2181
        $region52: #{encoder_forward.1} parent=47 // pred_fallthru
          _
      $region48: #{encoder_forward.1} parent=5 // pred_fallthru
        _
      %p2198 = scmp.le.s32.totalorder 2, %s16
      // Predicated region
      $region53: #{encoder_forward.1} parent=5 // pred_check
        %p2199 = pneg %p2198
      $region54: #{encoder_forward.1} parent=5 // pred_check_branch
        %2201 = sbr.rel (%p2199) target = $region56
      $region55: #{encoder_forward.1} parent=5 // pred_region
        %s2202 = ssub.s32 %s16, 2
        // Predicated region
        $region57: #{encoder_forward.1} parent=55 // pred_check
          %p2203 = pneg %p197
        $region58: #{encoder_forward.1} parent=55 // pred_check_branch
          %2205 = sbr.rel (%p2203) target = $region60
        $region59: #{encoder_forward.1} parent=55 // pred_region
          %s2206 = sand.u32 %s182, 1
          %s2207 = scalar_lea.sflag [#allocation3], %s2206
          %s2208 = sand.u32 %s182, 1
          %s2209 = smul.addr %s2208, 8
          %s2210 = scalar_lea.vmem [#allocation2], %s2209
          %2211 = dma.done %s2207, 128
        $region60: #{encoder_forward.1} parent=55 // pred_fallthru
          _
      $region56: #{encoder_forward.1} parent=5 // pred_fallthru
        _
    $region6: #{encoder_forward.1} parent=1 // loop_footer
      %s20 = sadd.s32 1, %s16
    $region7: #{encoder_forward.1} parent=1 // loop_footer_branch
      %15 = sbr.rel target = $region3
    $region8: #{encoder_forward.1} parent=1 // loop_exit
      _
    %2212 = vsyncpa [#allocation3], 1
    %s2213 = scalar_lea.sflag [#allocation3], 1
    %2214 = vsyncpa %s2213, 1

</llo_original>
